<compile_context>
chip_gen: v5e
topology: v5e:2x2
jax: 0.10.0
libtpu: 0.0.40
codegen_flags: <defaults>
</compile_context>

<pallas_src>
import math
import functools

import jax
import jax.numpy as jnp
from jax.experimental import pallas as pl
from jax.experimental.pallas import tpu as pltpu

EPS = 1e-5  # nn.LayerNorm default eps


# --------------------------------------------------------------------------------------
# Layout plumbing (pure reshapes/transposes; reproduced exactly as in PSABlock.forward).
# TODO(synk): F.unfold / F.fold and the transpose(0,2).view permutation are pure layout ops;
#             they are kept as XLA reshapes in the wrapper rather than Pallas kernels.
# --------------------------------------------------------------------------------------
def unfold_tokens(x, H, W, patch_dim):
    """x: (bs, p, N=H*W, C) -> (bs, p, L, ED) exactly like
    permute(0,1,3,2).reshape(bs*p,C,H,W) -> F.unfold(pd, stride=pd).transpose(1,2)."""
    bs, p, N, C = x.shape
    pd = patch_dim
    Hp, Wp = H // pd, W // pd
    img = jnp.transpose(x, (0, 1, 3, 2)).reshape(bs * p, C, H, W)
    t = img.reshape(bs * p, C, Hp, pd, Wp, pd)
    t = jnp.transpose(t, (0, 2, 4, 1, 3, 5))                    # (BP, Hp, Wp, C, pd, pd)
    return t.reshape(bs, p, Hp * Wp, C * pd * pd)


def fold_tokens(t, bs, p, H, W, patch_dim, C):
    """t: (bs, p, L, ED) -> (bs, p, N, C) exactly like
    t.transpose(0,2).contiguous().view(bs*p,-1,ED).transpose(1,2) -> F.fold(H, pd, stride=pd)
    -> reshape(bs,p,C,N).permute(0,1,3,2)  (including the batch/patch reordering of the view)."""
    pd = patch_dim
    Hp, Wp = H // pd, W // pd
    L, ED = t.shape[2], t.shape[3]
    y = jnp.transpose(t, (2, 1, 0, 3)).reshape(bs * p, L, ED)   # torch transpose(0,2).view(...)
    y = jnp.transpose(y, (0, 2, 1))                             # (BP, ED, L)
    y = y.reshape(bs * p, C, pd, pd, Hp, Wp)
    y = jnp.transpose(y, (0, 1, 4, 2, 5, 3)).reshape(bs * p, C, H, W)
    y = y.reshape(bs, p, C, H * W)
    return jnp.transpose(y, (0, 1, 3, 2))


# --------------------------------------------------------------------------------------
# Fully fused kernel:
#   norm_pre + linear_encoding residual + norm1 + multi-head attention + residual
#   + norm2 + mlp_head (fc1/ReLU/fc2) + residual
# --------------------------------------------------------------------------------------
def _ln(x, g, b):
    mu = jnp.mean(x, axis=-1, keepdims=True)
    var = jnp.mean((x - mu) ** 2, axis=-1, keepdims=True)
    return (x - mu) * jax.lax.rsqrt(var + EPS) * g + b


def _psa_fused_kernel(tok_ref, mask_ref, npg_ref, npb_ref, lew_ref, leb_ref,
                      n1g_ref, n1b_ref, wqkv_ref, wo_ref, n2g_ref, n2b_ref,
                      w1_ref, b1_ref, w2_ref, b2_ref, o_ref,
                      qkv_s, o_s, *, num_heads, L, slab_blk):
    f32, bf16 = jnp.float32, jnp.bfloat16
    ED = tok_ref.shape[-1]
    hd = ED // num_heads
    HL = num_heads * L
    R = slab_blk * L

    # ---- norm_pre + linear_encoding residual + norm1, batched over slab_blk*L rows ----
    x = tok_ref[...].reshape(R, ED).astype(f32)
    x = _ln(x, npg_ref[...], npb_ref[...])
    x = x + (jnp.dot(x.astype(bf16), lew_ref[...],
                     preferred_element_type=f32) + leb_ref[...])
    u = _ln(x, n1g_ref[...], n1b_ref[...])
    ub = u.astype(bf16)

    # ---- fused QKV projection: one (R, ED) x (ED, 3*hd) matmul per head (q-scale folded
    #      into Wq), results staged heads-on-sublanes in VMEM scratch ----
    for h in range(num_heads):
        qkv_s[h] = jnp.dot(ub, wqkv_ref[h], preferred_element_type=f32)     # (R, 3*hd)

    mask = mask_ref[...]                                                     # (HL, HL) additive

    # ---- attention: per slab, ONE dense (HL, HL) masked score matmul, ONE softmax,
    #      ONE PV matmul (heads stacked on sublanes, block-diagonal mask) ----
    for b in range(slab_blk):
        blk = qkv_s[:, b * L:(b + 1) * L, :].reshape(HL, 3 * hd).astype(bf16)
        q, k, v = blk[:, :hd], blk[:, hd:2 * hd], blk[:, 2 * hd:]
        s = jax.lax.dot_general(q, k, (((1,), (1,)), ((), ())),
                                preferred_element_type=f32) + mask           # (HL, HL)
        s = s - jnp.max(s, axis=-1, keepdims=True)
        prob = jnp.exp(s)
        prob = prob * pl.reciprocal(jnp.sum(prob, axis=-1, keepdims=True), approx=True)
        o_s[b] = jnp.dot(prob.astype(bf16), v, preferred_element_type=f32)   # (HL, hd)

    # ---- out_proj: per-head (R, hd) x (hd, ED) matmuls batched over all slabs ----
    attn = jnp.zeros((R, ED), f32)
    for h in range(num_heads):
        oh = o_s[:, h * L:(h + 1) * L, :].reshape(R, hd).astype(bf16)
        attn = attn + jnp.dot(oh, wo_ref[h], preferred_element_type=f32)

    x = x + attn                                                             # residual
    y = _ln(x, n2g_ref[...], n2b_ref[...])                                   # norm2

    # ---- mlp_head (fc1 + ReLU + fc2) + residual, fused tail ----
    hmid = jnp.dot(y.astype(bf16), w1_ref[...], preferred_element_type=f32) + b1_ref[...]
    hmid = jnp.maximum(hmid, 0.0)
    out = jnp.dot(hmid.astype(bf16), w2_ref[...], preferred_element_type=f32) + b2_ref[...]
    o_ref[...] = (y + out).reshape(slab_blk, L, ED).astype(o_ref.dtype)


def _pick_slab_batch(BP, L, max_rows=256):
    """Largest divisor of BP such that slab_blk*L <= max_rows (>=128/256 rows fills the MXU
    row dim on v5e / v6e-v7x while keeping VMEM & unrolling bounded)."""
    best = 1
    for d in range(1, BP + 1):
        if BP % d == 0 and d * L <= max_rows:
            best = d
    return best


def fused_psa_block(tok, kp, num_heads, slab_blk):
    BP, L, ED = tok.shape
    hd = ED // num_heads
    HL = num_heads * L
    hid = kp["fc1_w"].shape[1]

    # Block-diagonal additive mask: head h's queries only attend to head h's keys.
    head_idx = jnp.repeat(jnp.arange(num_heads), L)
    attn_mask = jnp.where(head_idx[:, None] == head_idx[None, :], 0.0, -1e30
                          ).astype(jnp.float32)

    kernel = functools.partial(_psa_fused_kernel, num_heads=num_heads, L=L,
                               slab_blk=slab_blk)
    vec = lambda n: pl.BlockSpec((1, n), lambda i: (0, 0))
    return pl.pallas_call(
        kernel,
        out_shape=jax.ShapeDtypeStruct((BP, L, ED), tok.dtype),
        grid=(BP // slab_blk,),
        in_specs=[
            pl.BlockSpec((slab_blk, L, ED), lambda i: (i, 0, 0)),            # token slab batch
            pl.BlockSpec((HL, HL), lambda i: (0, 0)),                        # attention mask
            vec(ED), vec(ED),                                                # norm_pre g / b
            pl.BlockSpec((ED, ED), lambda i: (0, 0)),                        # linear_encoding W^T
            vec(ED),                                                         # linear_encoding b
            vec(ED), vec(ED),                                                # norm1 g / b
            pl.BlockSpec((num_heads, ED, 3 * hd), lambda i: (0, 0, 0)),      # fused QKV per head
            pl.BlockSpec((num_heads, hd, ED), lambda i: (0, 0, 0)),          # out_proj per head
            vec(ED), vec(ED),                                                # norm2 g / b
            pl.BlockSpec((ED, hid), lambda i: (0, 0)),                       # fc1 W^T
            vec(hid),                                                        # fc1 b
            pl.BlockSpec((hid, ED), lambda i: (0, 0)),                       # fc2 W^T
            vec(ED),                                                         # fc2 b
        ],
        out_specs=pl.BlockSpec((slab_blk, L, ED), lambda i: (i, 0, 0)),
        scratch_shapes=[
            pltpu.VMEM((num_heads, slab_blk * L, 3 * hd), jnp.float32),      # staged QKV
            pltpu.VMEM((slab_blk, HL, hd), jnp.float32),                     # attention output
        ],
        compiler_params=pltpu.CompilerParams(
            dimension_semantics=("parallel",),
            vmem_limit_bytes=32 * 1024 * 1024),
    )(tok, attn_mask, kp["npre_g"], kp["npre_b"], kp["le_w"], kp["le_b"],
      kp["n1_g"], kp["n1_b"], kp["wqkv_h"], kp["wo_h"],
      kp["n2_g"], kp["n2_b"], kp["fc1_w"], kp["fc1_b"], kp["fc2_w"], kp["fc2_b"])


# --------------------------------------------------------------------------------------
# Parameter prep (torch layouts -> kernel-ready layouts; bf16 matmul operands)
# --------------------------------------------------------------------------------------
def prepare_kernel_params(params, num_heads):
    ED = params["norm_pre_g"].shape[0]
    nh = num_heads
    hd = ED // nh
    scale = hd ** -0.5
    bf16, f32 = jnp.bfloat16, jnp.float32

    win = params["in_proj_w"]                             # (3*ED, ED), rows = [q; k; v]
    wqT = win[:ED].T * scale                              # fold q-scale into the weight
    wkT = win[ED:2 * ED].T
    wvT = win[2 * ED:].T
    heads = lambda w: jnp.transpose(w.reshape(ED, nh, hd), (1, 0, 2))   # (nh, ED, hd)
    wqkv_h = jnp.concatenate([heads(wqT), heads(wkT), heads(wvT)], axis=-1)  # (nh, ED, 3*hd)
    wo_h = params["out_proj_w"].T.reshape(nh, hd, ED)                        # (nh, hd, ED)

    row = lambda v: v.reshape(1, -1).astype(f32)
    return {
        "npre_g": row(params["norm_pre_g"]), "npre_b": row(params["norm_pre_b"]),
        "n1_g": row(params["norm1_g"]),      "n1_b": row(params["norm1_b"]),
        "n2_g": row(params["norm2_g"]),      "n2_b": row(params["norm2_b"]),
        "le_w": params["lin_enc_w"].T.astype(bf16),       # (ED, ED)
        "le_b": row(params["lin_enc_b"]),
        "wqkv_h": wqkv_h.astype(bf16),
        "wo_h": wo_h.astype(bf16),
        "fc1_w": params["mlp_fc1_w"].T.astype(bf16),      # (ED, hidden)
        "fc1_b": row(params["mlp_fc1_b"]),
        "fc2_w": params["mlp_fc2_w"].T.astype(bf16),      # (hidden, ED)
        "fc2_b": row(params["mlp_fc2_b"]),
    }


# --------------------------------------------------------------------------------------
# PSABlock forward (Pallas path)
# --------------------------------------------------------------------------------------
def psablock_forward(x, params, H, W, patch_dim, num_heads):
    bs, p, N, C = x.shape
    assert N == H * W and N != 1, "implements the N != 1 branch of PSABlock.forward"
    assert H % patch_dim == 0 and W % patch_dim == 0
    kp = prepare_kernel_params(params, num_heads)

    tokens = unfold_tokens(x, H, W, patch_dim)            # (bs, p, L, ED)
    _, _, L, ED = tokens.shape
    BP = bs * p
    tok = tokens.reshape(BP, L, ED)

    slab_blk = _pick_slab_batch(BP, L)
    y = fused_psa_block(tok, kp, num_heads, slab_blk)     # (BP, L, ED) final tokens
    return fold_tokens(y.reshape(bs, p, L, ED), bs, p, H, W, patch_dim, C)


# --------------------------------------------------------------------------------------
# Pure-JAX reference (mirrors the PyTorch forward, f32 HIGHEST precision)
# --------------------------------------------------------------------------------------
def psablock_reference(x, params, H, W, patch_dim, num_heads):
    hi = jax.lax.Precision.HIGHEST
    bs, p, N, C = x.shape
    ED = C * patch_dim * patch_dim
    hd = ED // num_heads
    scale = hd ** -0.5

    def ln(t, g, b):
        mu = jnp.mean(t, -1, keepdims=True)
        var = jnp.mean((t - mu) ** 2, -1, keepdims=True)
        return (t - mu) / jnp.sqrt(var + EPS) * g + b

    t = unfold_tokens(x, H, W, patch_dim)                 # (bs, p, L, ED)
    t = ln(t, params["norm_pre_g"], params["norm_pre_b"])
    t = t + (jnp.dot(t, params["lin_enc_w"].T, precision=hi) + params["lin_enc_b"])
    u = ln(t, params["norm1_g"], params["norm1_b"])

    win = params["in_proj_w"]
    q = jnp.dot(u, win[:ED].T, precision=hi) * scale
    k = jnp.dot(u, win[ED:2 * ED].T, precision=hi)
    v = jnp.dot(u, win[2 * ED:].T, precision=hi)
    L = q.shape[2]
    sh = (bs, p, L, num_heads, hd)
    qh, kh, vh = q.reshape(sh), k.reshape(sh), v.reshape(sh)
    s = jnp.einsum("bplhd,bpmhd->bphlm", qh, kh, precision=hi)
    a = jax.nn.softmax(s, axis=-1)
    o = jnp.einsum("bphlm,bpmhd->bplhd", a, vh, precision=hi).reshape(bs, p, L, ED)
    t = t + jnp.dot(o, params["out_proj_w"].T, precision=hi)

    t = ln(t, params["norm2_g"], params["norm2_b"])
    h1 = jnp.maximum(jnp.dot(t, params["mlp_fc1_w"].T, precision=hi) + params["mlp_fc1_b"], 0.0)
    m = jnp.dot(h1, params["mlp_fc2_w"].T, precision=hi) + params["mlp_fc2_b"]
    t = m + t
    return fold_tokens(t, bs, p, H, W, patch_dim, C)


# --------------------------------------------------------------------------------------
# Setup & run
# --------------------------------------------------------------------------------------
def make_params(key, ED, hidden):
    ks = jax.random.split(key, 14)

    def lin_w(k, out_f, in_f):
        bound = 1.0 / math.sqrt(in_f)
        return jax.random.uniform(k, (out_f, in_f), jnp.float32, -bound, bound)

    def lin_b(k, out_f, in_f):
        bound = 1.0 / math.sqrt(in_f)
        return jax.random.uniform(k, (out_f,), jnp.float32, -bound, bound)

    return {
        # LayerNorm affine params (torch default is ones/zeros; perturbed to exercise the path)
        "norm_pre_g": 1.0 + 0.05 * jax.random.normal(ks[0], (ED,), jnp.float32),
        "norm_pre_b": 0.05 * jax.random.normal(ks[1], (ED,), jnp.float32),
        "norm1_g": 1.0 + 0.05 * jax.random.normal(ks[2], (ED,), jnp.float32),
        "norm1_b": 0.05 * jax.random.normal(ks[3], (ED,), jnp.float32),
        "norm2_g": 1.0 + 0.05 * jax.random.normal(ks[4], (ED,), jnp.float32),
        "norm2_b": 0.05 * jax.random.normal(ks[5], (ED,), jnp.float32),
        # linear_encoding: Linear(ED, ED) with bias (torch weight layout (out, in))
        "lin_enc_w": lin_w(ks[6], ED, ED),
        "lin_enc_b": lin_b(ks[7], ED, ED),
        # PSAttention: in_proj_weight (3*ED, ED); qkv_bias=False; out_proj bias=False
        "in_proj_w": lin_w(ks[8], 3 * ED, ED),
        "out_proj_w": lin_w(ks[9], ED, ED),
        # mlp_head: Linear(ED, hidden)+bias, ReLU, Linear(hidden, ED)+bias
        "mlp_fc1_w": lin_w(ks[10], hidden, ED),
        "mlp_fc1_b": lin_b(ks[11], hidden, ED),
        "mlp_fc2_w": lin_w(ks[12], ED, hidden),
        "mlp_fc2_b": lin_b(ks[13], ED, hidden),
    }


if __name__ == "__main__":
    dim, patch_dim, num_heads, mlp_ratio = 32, 3, 8, 1   # module defaults: patch_dim=3, heads=8, mlp_ratio=1
    bs, p = 2, 1
    H = W = 12
    N = H * W                                            # 144 pixels -> L = 16 patch tokens
    ED = dim * patch_dim * patch_dim                     # 288
    hidden = mlp_ratio * dim                             # 32

    key = jax.random.PRNGKey(0)
    kx, kparam = jax.random.split(key)
    x = jax.random.normal(kx, (bs, p, N, dim), jnp.float32)
    params = make_params(kparam, ED, hidden)

    fwd = jax.jit(functools.partial(psablock_forward, H=H, W=W,
                                    patch_dim=patch_dim, num_heads=num_heads))
    out = jax.block_until_ready(fwd(x, params))

    ref = jax.block_until_ready(psablock_reference(x, params, H, W, patch_dim, num_heads))
    assert out.shape == (bs, p, N, dim)
    max_diff = float(jnp.max(jnp.abs(out - ref)))
    assert max_diff < 5e-2, f"mismatch vs reference: {max_diff}"
    print("KERNEL_OK")
</pallas_src>

<mosaic_0001>
module attributes {stable_mosaic.version = 11 : i64} {
  func.func @_psa_fused_kernel(%arg0: i32, %arg1: memref<2x16x288xf32, #tpu.memory_space<vmem>>, %arg2: memref<128x128xf32, #tpu.memory_space<vmem>>, %arg3: memref<1x288xf32, #tpu.memory_space<vmem>>, %arg4: memref<1x288xf32, #tpu.memory_space<vmem>>, %arg5: memref<288x288xbf16, #tpu.memory_space<vmem>>, %arg6: memref<1x288xf32, #tpu.memory_space<vmem>>, %arg7: memref<1x288xf32, #tpu.memory_space<vmem>>, %arg8: memref<1x288xf32, #tpu.memory_space<vmem>>, %arg9: memref<8x288x108xbf16, #tpu.memory_space<vmem>>, %arg10: memref<8x36x288xbf16, #tpu.memory_space<vmem>>, %arg11: memref<1x288xf32, #tpu.memory_space<vmem>>, %arg12: memref<1x288xf32, #tpu.memory_space<vmem>>, %arg13: memref<288x32xbf16, #tpu.memory_space<vmem>>, %arg14: memref<1x32xf32, #tpu.memory_space<vmem>>, %arg15: memref<32x288xbf16, #tpu.memory_space<vmem>>, %arg16: memref<1x288xf32, #tpu.memory_space<vmem>>, %arg17: memref<2x16x288xf32, #tpu.memory_space<vmem>>, %arg18: memref<8x32x108xf32, #tpu.memory_space<vmem>>, %arg19: memref<2x128x36xf32, #tpu.memory_space<vmem>>) attributes {dimension_semantics = [#tpu.dimension_semantics<parallel>], iteration_bounds = array<i64: 1>, scalar_prefetch = 0 : i64, scratch_operands = 2 : i64, tpu.core_type = #tpu.core_type<tc>, window_params = [{transform_indices = @transform_0, window_bounds = array<i64: 2, 16, 288>}, {pipeline_mode = #tpu.pipeline_mode<synchronous>, transform_indices = @transform_1, window_bounds = array<i64: 128, 128>}, {pipeline_mode = #tpu.pipeline_mode<synchronous>, transform_indices = @transform_2, window_bounds = array<i64: 1, 288>}, {pipeline_mode = #tpu.pipeline_mode<synchronous>, transform_indices = @transform_3, window_bounds = array<i64: 1, 288>}, {pipeline_mode = #tpu.pipeline_mode<synchronous>, transform_indices = @transform_4, window_bounds = array<i64: 288, 288>}, {pipeline_mode = #tpu.pipeline_mode<synchronous>, transform_indices = @transform_5, window_bounds = array<i64: 1, 288>}, {pipeline_mode = #tpu.pipeline_mode<synchronous>, transform_indices = @transform_6, window_bounds = array<i64: 1, 288>}, {pipeline_mode = #tpu.pipeline_mode<synchronous>, transform_indices = @transform_7, window_bounds = array<i64: 1, 288>}, {pipeline_mode = #tpu.pipeline_mode<synchronous>, transform_indices = @transform_8, window_bounds = array<i64: 8, 288, 108>}, {pipeline_mode = #tpu.pipeline_mode<synchronous>, transform_indices = @transform_9, window_bounds = array<i64: 8, 36, 288>}, {pipeline_mode = #tpu.pipeline_mode<synchronous>, transform_indices = @transform_10, window_bounds = array<i64: 1, 288>}, {pipeline_mode = #tpu.pipeline_mode<synchronous>, transform_indices = @transform_11, window_bounds = array<i64: 1, 288>}, {pipeline_mode = #tpu.pipeline_mode<synchronous>, transform_indices = @transform_12, window_bounds = array<i64: 288, 32>}, {pipeline_mode = #tpu.pipeline_mode<synchronous>, transform_indices = @transform_13, window_bounds = array<i64: 1, 32>}, {pipeline_mode = #tpu.pipeline_mode<synchronous>, transform_indices = @transform_14, window_bounds = array<i64: 32, 288>}, {pipeline_mode = #tpu.pipeline_mode<synchronous>, transform_indices = @transform_15, window_bounds = array<i64: 1, 288>}, {transform_indices = @transform_16, window_bounds = array<i64: 2, 16, 288>}]} {
    %c0 = arith.constant 0 : index
    %c0_0 = arith.constant 0 : index
    %c0_1 = arith.constant 0 : index
    %0 = vector.load %arg1[%c0, %c0_0, %c0_1] : memref<2x16x288xf32, #tpu.memory_space<vmem>>, vector<2x16x288xf32>
    %1 = vector.shape_cast %0 : vector<2x16x288xf32> to vector<32x288xf32>
    %c0_2 = arith.constant 0 : index
    %c0_3 = arith.constant 0 : index
    %2 = vector.load %arg3[%c0_2, %c0_3] : memref<1x288xf32, #tpu.memory_space<vmem>>, vector<1x288xf32>
    %c0_4 = arith.constant 0 : index
    %c0_5 = arith.constant 0 : index
    %3 = vector.load %arg4[%c0_4, %c0_5] : memref<1x288xf32, #tpu.memory_space<vmem>>, vector<1x288xf32>
    %cst = arith.constant dense<0.000000e+00> : vector<32xf32>
    %4 = vector.multi_reduction <add>, %1, %cst [1] : vector<32x288xf32> to vector<32xf32>
    %5 = vector.shape_cast %4 : vector<32xf32> to vector<32x1xf32>
    %cst_6 = arith.constant 2.880000e+02 : f32
    %6 = vector.broadcast %cst_6 : f32 to vector<32x1xf32>
    %7 = arith.divf %5, %6 : vector<32x1xf32>
    %8 = vector.broadcast %7 : vector<32x1xf32> to vector<32x288xf32>
    %9 = arith.subf %1, %8 : vector<32x288xf32>
    %10 = arith.mulf %9, %9 : vector<32x288xf32>
    %cst_7 = arith.constant dense<0.000000e+00> : vector<32xf32>
    %11 = vector.multi_reduction <add>, %10, %cst_7 [1] : vector<32x288xf32> to vector<32xf32>
    %12 = vector.shape_cast %11 : vector<32xf32> to vector<32x1xf32>
    %cst_8 = arith.constant 2.880000e+02 : f32
    %13 = vector.broadcast %cst_8 : f32 to vector<32x1xf32>
    %14 = arith.divf %12, %13 : vector<32x1xf32>
    %15 = vector.broadcast %7 : vector<32x1xf32> to vector<32x288xf32>
    %16 = arith.subf %1, %15 : vector<32x288xf32>
    %cst_9 = arith.constant 9.99999974E-6 : f32
    %17 = vector.broadcast %cst_9 : f32 to vector<32x1xf32>
    %18 = arith.addf %14, %17 : vector<32x1xf32>
    %19 = math.rsqrt %18 : vector<32x1xf32>
    %20 = vector.broadcast %19 : vector<32x1xf32> to vector<32x288xf32>
    %21 = arith.mulf %16, %20 : vector<32x288xf32>
    %22 = vector.broadcast %2 : vector<1x288xf32> to vector<32x288xf32>
    %23 = arith.mulf %21, %22 : vector<32x288xf32>
    %24 = vector.broadcast %3 : vector<1x288xf32> to vector<32x288xf32>
    %25 = arith.addf %23, %24 : vector<32x288xf32>
    %26 = arith.truncf %25 : vector<32x288xf32> to vector<32x288xbf16>
    %c0_10 = arith.constant 0 : index
    %c0_11 = arith.constant 0 : index
    %27 = vector.load %arg5[%c0_10, %c0_11] : memref<288x288xbf16, #tpu.memory_space<vmem>>, vector<288x288xbf16>
    %cst_12 = arith.constant dense<0.000000e+00> : vector<32x288xf32>
    %28 = tpu.matmul %26, %27, %cst_12 {dimension_numbers = #tpu.dot_dimension_numbers<[1], [0], [0], [1], [0, 0, 1, 1], [], []>} : vector<32x288xbf16>, vector<288x288xbf16>, vector<32x288xf32> -> vector<32x288xf32>
    %c0_13 = arith.constant 0 : index
    %c0_14 = arith.constant 0 : index
    %29 = vector.load %arg6[%c0_13, %c0_14] : memref<1x288xf32, #tpu.memory_space<vmem>>, vector<1x288xf32>
    %30 = vector.broadcast %29 : vector<1x288xf32> to vector<32x288xf32>
    %31 = arith.addf %28, %30 : vector<32x288xf32>
    %32 = arith.addf %25, %31 : vector<32x288xf32>
    %c0_15 = arith.constant 0 : index
    %c0_16 = arith.constant 0 : index
    %33 = vector.load %arg7[%c0_15, %c0_16] : memref<1x288xf32, #tpu.memory_space<vmem>>, vector<1x288xf32>
    %c0_17 = arith.constant 0 : index
    %c0_18 = arith.constant 0 : index
    %34 = vector.load %arg8[%c0_17, %c0_18] : memref<1x288xf32, #tpu.memory_space<vmem>>, vector<1x288xf32>
    %cst_19 = arith.constant dense<0.000000e+00> : vector<32xf32>
    %35 = vector.multi_reduction <add>, %32, %cst_19 [1] : vector<32x288xf32> to vector<32xf32>
    %36 = vector.shape_cast %35 : vector<32xf32> to vector<32x1xf32>
    %cst_20 = arith.constant 2.880000e+02 : f32
    %37 = vector.broadcast %cst_20 : f32 to vector<32x1xf32>
    %38 = arith.divf %36, %37 : vector<32x1xf32>
    %39 = vector.broadcast %38 : vector<32x1xf32> to vector<32x288xf32>
    %40 = arith.subf %32, %39 : vector<32x288xf32>
    %41 = arith.mulf %40, %40 : vector<32x288xf32>
    %cst_21 = arith.constant dense<0.000000e+00> : vector<32xf32>
    %42 = vector.multi_reduction <add>, %41, %cst_21 [1] : vector<32x288xf32> to vector<32xf32>
    %43 = vector.shape_cast %42 : vector<32xf32> to vector<32x1xf32>
    %cst_22 = arith.constant 2.880000e+02 : f32
    %44 = vector.broadcast %cst_22 : f32 to vector<32x1xf32>
    %45 = arith.divf %43, %44 : vector<32x1xf32>
    %46 = vector.broadcast %38 : vector<32x1xf32> to vector<32x288xf32>
    %47 = arith.subf %32, %46 : vector<32x288xf32>
    %cst_23 = arith.constant 9.99999974E-6 : f32
    %48 = vector.broadcast %cst_23 : f32 to vector<32x1xf32>
    %49 = arith.addf %45, %48 : vector<32x1xf32>
    %50 = math.rsqrt %49 : vector<32x1xf32>
    %51 = vector.broadcast %50 : vector<32x1xf32> to vector<32x288xf32>
    %52 = arith.mulf %47, %51 : vector<32x288xf32>
    %53 = vector.broadcast %33 : vector<1x288xf32> to vector<32x288xf32>
    %54 = arith.mulf %52, %53 : vector<32x288xf32>
    %55 = vector.broadcast %34 : vector<1x288xf32> to vector<32x288xf32>
    %56 = arith.addf %54, %55 : vector<32x288xf32>
    %57 = arith.truncf %56 : vector<32x288xf32> to vector<32x288xbf16>
    %c0_24 = arith.constant 0 : index
    %c0_25 = arith.constant 0 : index
    %c0_26 = arith.constant 0 : index
    %58 = vector.load %arg9[%c0_24, %c0_25, %c0_26] : memref<8x288x108xbf16, #tpu.memory_space<vmem>>, vector<1x288x108xbf16>
    %59 = vector.shape_cast %58 : vector<1x288x108xbf16> to vector<288x108xbf16>
    %cst_27 = arith.constant dense<0.000000e+00> : vector<32x108xf32>
    %60 = tpu.matmul %57, %59, %cst_27 {dimension_numbers = #tpu.dot_dimension_numbers<[1], [0], [0], [1], [0, 0, 1, 1], [], []>} : vector<32x288xbf16>, vector<288x108xbf16>, vector<32x108xf32> -> vector<32x108xf32>
    %c0_28 = arith.constant 0 : index
    %c0_29 = arith.constant 0 : index
    %c0_30 = arith.constant 0 : index
    %61 = vector.load %arg18[%c0_28, %c0_29, %c0_30] : memref<8x32x108xf32, #tpu.memory_space<vmem>>, vector<1x32x108xf32>
    %62 = vector.shape_cast %61 : vector<1x32x108xf32> to vector<32x108xf32>
    %63 = vector.shape_cast %60 : vector<32x108xf32> to vector<1x32x108xf32>
    tpu.vector_store %arg18[%c0_28, %c0_29, %c0_30], %63 {strides = array<i32>} : memref<8x32x108xf32, #tpu.memory_space<vmem>>, vector<1x32x108xf32>,
    %c1 = arith.constant 1 : index
    %c0_31 = arith.constant 0 : index
    %c0_32 = arith.constant 0 : index
    %64 = vector.load %arg9[%c1, %c0_31, %c0_32] : memref<8x288x108xbf16, #tpu.memory_space<vmem>>, vector<1x288x108xbf16>
    %65 = vector.shape_cast %64 : vector<1x288x108xbf16> to vector<288x108xbf16>
    %cst_33 = arith.constant dense<0.000000e+00> : vector<32x108xf32>
    %66 = tpu.matmul %57, %65, %cst_33 {dimension_numbers = #tpu.dot_dimension_numbers<[1], [0], [0], [1], [0, 0, 1, 1], [], []>} : vector<32x288xbf16>, vector<288x108xbf16>, vector<32x108xf32> -> vector<32x108xf32>
    %c1_34 = arith.constant 1 : index
    %c0_35 = arith.constant 0 : index
    %c0_36 = arith.constant 0 : index
    %67 = vector.load %arg18[%c1_34, %c0_35, %c0_36] : memref<8x32x108xf32, #tpu.memory_space<vmem>>, vector<1x32x108xf32>
    %68 = vector.shape_cast %67 : vector<1x32x108xf32> to vector<32x108xf32>
    %69 = vector.shape_cast %66 : vector<32x108xf32> to vector<1x32x108xf32>
    tpu.vector_store %arg18[%c1_34, %c0_35, %c0_36], %69 {strides = array<i32>} : memref<8x32x108xf32, #tpu.memory_space<vmem>>, vector<1x32x108xf32>,
    %c2 = arith.constant 2 : index
    %c0_37 = arith.constant 0 : index
    %c0_38 = arith.constant 0 : index
    %70 = vector.load %arg9[%c2, %c0_37, %c0_38] : memref<8x288x108xbf16, #tpu.memory_space<vmem>>, vector<1x288x108xbf16>
    %71 = vector.shape_cast %70 : vector<1x288x108xbf16> to vector<288x108xbf16>
    %cst_39 = arith.constant dense<0.000000e+00> : vector<32x108xf32>
    %72 = tpu.matmul %57, %71, %cst_39 {dimension_numbers = #tpu.dot_dimension_numbers<[1], [0], [0], [1], [0, 0, 1, 1], [], []>} : vector<32x288xbf16>, vector<288x108xbf16>, vector<32x108xf32> -> vector<32x108xf32>
    %c2_40 = arith.constant 2 : index
    %c0_41 = arith.constant 0 : index
    %c0_42 = arith.constant 0 : index
    %73 = vector.load %arg18[%c2_40, %c0_41, %c0_42] : memref<8x32x108xf32, #tpu.memory_space<vmem>>, vector<1x32x108xf32>
    %74 = vector.shape_cast %73 : vector<1x32x108xf32> to vector<32x108xf32>
    %75 = vector.shape_cast %72 : vector<32x108xf32> to vector<1x32x108xf32>
    tpu.vector_store %arg18[%c2_40, %c0_41, %c0_42], %75 {strides = array<i32>} : memref<8x32x108xf32, #tpu.memory_space<vmem>>, vector<1x32x108xf32>,
    %c3 = arith.constant 3 : index
    %c0_43 = arith.constant 0 : index
    %c0_44 = arith.constant 0 : index
    %76 = vector.load %arg9[%c3, %c0_43, %c0_44] : memref<8x288x108xbf16, #tpu.memory_space<vmem>>, vector<1x288x108xbf16>
    %77 = vector.shape_cast %76 : vector<1x288x108xbf16> to vector<288x108xbf16>
    %cst_45 = arith.constant dense<0.000000e+00> : vector<32x108xf32>
    %78 = tpu.matmul %57, %77, %cst_45 {dimension_numbers = #tpu.dot_dimension_numbers<[1], [0], [0], [1], [0, 0, 1, 1], [], []>} : vector<32x288xbf16>, vector<288x108xbf16>, vector<32x108xf32> -> vector<32x108xf32>
    %c3_46 = arith.constant 3 : index
    %c0_47 = arith.constant 0 : index
    %c0_48 = arith.constant 0 : index
    %79 = vector.load %arg18[%c3_46, %c0_47, %c0_48] : memref<8x32x108xf32, #tpu.memory_space<vmem>>, vector<1x32x108xf32>
    %80 = vector.shape_cast %79 : vector<1x32x108xf32> to vector<32x108xf32>
    %81 = vector.shape_cast %78 : vector<32x108xf32> to vector<1x32x108xf32>
    tpu.vector_store %arg18[%c3_46, %c0_47, %c0_48], %81 {strides = array<i32>} : memref<8x32x108xf32, #tpu.memory_space<vmem>>, vector<1x32x108xf32>,
    %c4 = arith.constant 4 : index
    %c0_49 = arith.constant 0 : index
    %c0_50 = arith.constant 0 : index
    %82 = vector.load %arg9[%c4, %c0_49, %c0_50] : memref<8x288x108xbf16, #tpu.memory_space<vmem>>, vector<1x288x108xbf16>
    %83 = vector.shape_cast %82 : vector<1x288x108xbf16> to vector<288x108xbf16>
    %cst_51 = arith.constant dense<0.000000e+00> : vector<32x108xf32>
    %84 = tpu.matmul %57, %83, %cst_51 {dimension_numbers = #tpu.dot_dimension_numbers<[1], [0], [0], [1], [0, 0, 1, 1], [], []>} : vector<32x288xbf16>, vector<288x108xbf16>, vector<32x108xf32> -> vector<32x108xf32>
    %c4_52 = arith.constant 4 : index
    %c0_53 = arith.constant 0 : index
    %c0_54 = arith.constant 0 : index
    %85 = vector.load %arg18[%c4_52, %c0_53, %c0_54] : memref<8x32x108xf32, #tpu.memory_space<vmem>>, vector<1x32x108xf32>
    %86 = vector.shape_cast %85 : vector<1x32x108xf32> to vector<32x108xf32>
    %87 = vector.shape_cast %84 : vector<32x108xf32> to vector<1x32x108xf32>
    tpu.vector_store %arg18[%c4_52, %c0_53, %c0_54], %87 {strides = array<i32>} : memref<8x32x108xf32, #tpu.memory_space<vmem>>, vector<1x32x108xf32>,
    %c5 = arith.constant 5 : index
    %c0_55 = arith.constant 0 : index
    %c0_56 = arith.constant 0 : index
    %88 = vector.load %arg9[%c5, %c0_55, %c0_56] : memref<8x288x108xbf16, #tpu.memory_space<vmem>>, vector<1x288x108xbf16>
    %89 = vector.shape_cast %88 : vector<1x288x108xbf16> to vector<288x108xbf16>
    %cst_57 = arith.constant dense<0.000000e+00> : vector<32x108xf32>
    %90 = tpu.matmul %57, %89, %cst_57 {dimension_numbers = #tpu.dot_dimension_numbers<[1], [0], [0], [1], [0, 0, 1, 1], [], []>} : vector<32x288xbf16>, vector<288x108xbf16>, vector<32x108xf32> -> vector<32x108xf32>
    %c5_58 = arith.constant 5 : index
    %c0_59 = arith.constant 0 : index
    %c0_60 = arith.constant 0 : index
    %91 = vector.load %arg18[%c5_58, %c0_59, %c0_60] : memref<8x32x108xf32, #tpu.memory_space<vmem>>, vector<1x32x108xf32>
    %92 = vector.shape_cast %91 : vector<1x32x108xf32> to vector<32x108xf32>
    %93 = vector.shape_cast %90 : vector<32x108xf32> to vector<1x32x108xf32>
    tpu.vector_store %arg18[%c5_58, %c0_59, %c0_60], %93 {strides = array<i32>} : memref<8x32x108xf32, #tpu.memory_space<vmem>>, vector<1x32x108xf32>,
    %c6 = arith.constant 6 : index
    %c0_61 = arith.constant 0 : index
    %c0_62 = arith.constant 0 : index
    %94 = vector.load %arg9[%c6, %c0_61, %c0_62] : memref<8x288x108xbf16, #tpu.memory_space<vmem>>, vector<1x288x108xbf16>
    %95 = vector.shape_cast %94 : vector<1x288x108xbf16> to vector<288x108xbf16>
    %cst_63 = arith.constant dense<0.000000e+00> : vector<32x108xf32>
    %96 = tpu.matmul %57, %95, %cst_63 {dimension_numbers = #tpu.dot_dimension_numbers<[1], [0], [0], [1], [0, 0, 1, 1], [], []>} : vector<32x288xbf16>, vector<288x108xbf16>, vector<32x108xf32> -> vector<32x108xf32>
    %c6_64 = arith.constant 6 : index
    %c0_65 = arith.constant 0 : index
    %c0_66 = arith.constant 0 : index
    %97 = vector.load %arg18[%c6_64, %c0_65, %c0_66] : memref<8x32x108xf32, #tpu.memory_space<vmem>>, vector<1x32x108xf32>
    %98 = vector.shape_cast %97 : vector<1x32x108xf32> to vector<32x108xf32>
    %99 = vector.shape_cast %96 : vector<32x108xf32> to vector<1x32x108xf32>
    tpu.vector_store %arg18[%c6_64, %c0_65, %c0_66], %99 {strides = array<i32>} : memref<8x32x108xf32, #tpu.memory_space<vmem>>, vector<1x32x108xf32>,
    %c7 = arith.constant 7 : index
    %c0_67 = arith.constant 0 : index
    %c0_68 = arith.constant 0 : index
    %100 = vector.load %arg9[%c7, %c0_67, %c0_68] : memref<8x288x108xbf16, #tpu.memory_space<vmem>>, vector<1x288x108xbf16>
    %101 = vector.shape_cast %100 : vector<1x288x108xbf16> to vector<288x108xbf16>
    %cst_69 = arith.constant dense<0.000000e+00> : vector<32x108xf32>
    %102 = tpu.matmul %57, %101, %cst_69 {dimension_numbers = #tpu.dot_dimension_numbers<[1], [0], [0], [1], [0, 0, 1, 1], [], []>} : vector<32x288xbf16>, vector<288x108xbf16>, vector<32x108xf32> -> vector<32x108xf32>
    %c7_70 = arith.constant 7 : index
    %c0_71 = arith.constant 0 : index
    %c0_72 = arith.constant 0 : index
    %103 = vector.load %arg18[%c7_70, %c0_71, %c0_72] : memref<8x32x108xf32, #tpu.memory_space<vmem>>, vector<1x32x108xf32>
    %104 = vector.shape_cast %103 : vector<1x32x108xf32> to vector<32x108xf32>
    %105 = vector.shape_cast %102 : vector<32x108xf32> to vector<1x32x108xf32>
    tpu.vector_store %arg18[%c7_70, %c0_71, %c0_72], %105 {strides = array<i32>} : memref<8x32x108xf32, #tpu.memory_space<vmem>>, vector<1x32x108xf32>,
    %c0_73 = arith.constant 0 : index
    %c0_74 = arith.constant 0 : index
    %106 = vector.load %arg2[%c0_73, %c0_74] : memref<128x128xf32, #tpu.memory_space<vmem>>, vector<128x128xf32>
    %c0_75 = arith.constant 0 : index
    %c0_76 = arith.constant 0 : index
    %c0_77 = arith.constant 0 : index
    %107 = vector.load %arg18[%c0_75, %c0_76, %c0_77] : memref<8x32x108xf32, #tpu.memory_space<vmem>>, vector<8x16x108xf32>
    %108 = vector.shape_cast %107 : vector<8x16x108xf32> to vector<128x108xf32>
    %109 = arith.truncf %108 : vector<128x108xf32> to vector<128x108xbf16>
    %110 = vector.extract_strided_slice %109 {offsets = [0, 0], sizes = [128, 36], strides = [1, 1]} : vector<128x108xbf16> to vector<128x36xbf16>
    %111 = vector.extract_strided_slice %109 {offsets = [0, 36], sizes = [128, 36], strides = [1, 1]} : vector<128x108xbf16> to vector<128x36xbf16>
    %112 = vector.extract_strided_slice %109 {offsets = [0, 72], sizes = [128, 36], strides = [1, 1]} : vector<128x108xbf16> to vector<128x36xbf16>
    %cst_78 = arith.constant dense<0.000000e+00> : vector<128x128xf32>
    %113 = tpu.matmul %110, %111, %cst_78 {dimension_numbers = #tpu.dot_dimension_numbers<[1], [1], [0], [0], [0, 0, 1, 0], [], []>} : vector<128x36xbf16>, vector<128x36xbf16>, vector<128x128xf32> -> vector<128x128xf32>
    %114 = arith.addf %113, %106 : vector<128x128xf32>
    %cst_79 = arith.constant dense<0xFF800000> : vector<128xf32>
    %115 = vector.multi_reduction <maximumf>, %114, %cst_79 [1] : vector<128x128xf32> to vector<128xf32>
    %116 = vector.shape_cast %115 : vector<128xf32> to vector<128x1xf32>
    %117 = vector.broadcast %116 : vector<128x1xf32> to vector<128x128xf32>
    %118 = arith.subf %114, %117 : vector<128x128xf32>
    %119 = math.exp %118 : vector<128x128xf32>
    %cst_80 = arith.constant dense<0.000000e+00> : vector<128xf32>
    %120 = vector.multi_reduction <add>, %119, %cst_80 [1] : vector<128x128xf32> to vector<128xf32>
    %121 = vector.shape_cast %120 : vector<128xf32> to vector<128x1xf32>
    %122 = tpu.reciprocal %121 {approx = true} : vector<128x1xf32> -> vector<128x1xf32>
    %123 = vector.broadcast %122 : vector<128x1xf32> to vector<128x128xf32>
    %124 = arith.mulf %119, %123 : vector<128x128xf32>
    %125 = arith.truncf %124 : vector<128x128xf32> to vector<128x128xbf16>
    %cst_81 = arith.constant dense<0.000000e+00> : vector<128x36xf32>
    %126 = tpu.matmul %125, %112, %cst_81 {dimension_numbers = #tpu.dot_dimension_numbers<[1], [0], [0], [1], [0, 0, 1, 1], [], []>} : vector<128x128xbf16>, vector<128x36xbf16>, vector<128x36xf32> -> vector<128x36xf32>
    %c0_82 = arith.constant 0 : index
    %c0_83 = arith.constant 0 : index
    %c0_84 = arith.constant 0 : index
    %127 = vector.load %arg19[%c0_82, %c0_83, %c0_84] : memref<2x128x36xf32, #tpu.memory_space<vmem>>, vector<1x128x36xf32>
    %128 = vector.shape_cast %127 : vector<1x128x36xf32> to vector<128x36xf32>
    %129 = vector.shape_cast %126 : vector<128x36xf32> to vector<1x128x36xf32>
    tpu.vector_store %arg19[%c0_82, %c0_83, %c0_84], %129 {strides = array<i32>} : memref<2x128x36xf32, #tpu.memory_space<vmem>>, vector<1x128x36xf32>,
    %c0_85 = arith.constant 0 : index
    %c16 = arith.constant 16 : index
    %c0_86 = arith.constant 0 : index
    %130 = vector.load %arg18[%c0_85, %c16, %c0_86] : memref<8x32x108xf32, #tpu.memory_space<vmem>>, vector<8x16x108xf32>
    %131 = vector.shape_cast %130 : vector<8x16x108xf32> to vector<128x108xf32>
    %132 = arith.truncf %131 : vector<128x108xf32> to vector<128x108xbf16>
    %133 = vector.extract_strided_slice %132 {offsets = [0, 0], sizes = [128, 36], strides = [1, 1]} : vector<128x108xbf16> to vector<128x36xbf16>
    %134 = vector.extract_strided_slice %132 {offsets = [0, 36], sizes = [128, 36], strides = [1, 1]} : vector<128x108xbf16> to vector<128x36xbf16>
    %135 = vector.extract_strided_slice %132 {offsets = [0, 72], sizes = [128, 36], strides = [1, 1]} : vector<128x108xbf16> to vector<128x36xbf16>
    %cst_87 = arith.constant dense<0.000000e+00> : vector<128x128xf32>
    %136 = tpu.matmul %133, %134, %cst_87 {dimension_numbers = #tpu.dot_dimension_numbers<[1], [1], [0], [0], [0, 0, 1, 0], [], []>} : vector<128x36xbf16>, vector<128x36xbf16>, vector<128x128xf32> -> vector<128x128xf32>
    %137 = arith.addf %136, %106 : vector<128x128xf32>
    %cst_88 = arith.constant dense<0xFF800000> : vector<128xf32>
    %138 = vector.multi_reduction <maximumf>, %137, %cst_88 [1] : vector<128x128xf32> to vector<128xf32>
    %139 = vector.shape_cast %138 : vector<128xf32> to vector<128x1xf32>
    %140 = vector.broadcast %139 : vector<128x1xf32> to vector<128x128xf32>
    %141 = arith.subf %137, %140 : vector<128x128xf32>
    %142 = math.exp %141 : vector<128x128xf32>
    %cst_89 = arith.constant dense<0.000000e+00> : vector<128xf32>
    %143 = vector.multi_reduction <add>, %142, %cst_89 [1] : vector<128x128xf32> to vector<128xf32>
    %144 = vector.shape_cast %143 : vector<128xf32> to vector<128x1xf32>
    %145 = tpu.reciprocal %144 {approx = true} : vector<128x1xf32> -> vector<128x1xf32>
    %146 = vector.broadcast %145 : vector<128x1xf32> to vector<128x128xf32>
    %147 = arith.mulf %142, %146 : vector<128x128xf32>
    %148 = arith.truncf %147 : vector<128x128xf32> to vector<128x128xbf16>
    %cst_90 = arith.constant dense<0.000000e+00> : vector<128x36xf32>
    %149 = tpu.matmul %148, %135, %cst_90 {dimension_numbers = #tpu.dot_dimension_numbers<[1], [0], [0], [1], [0, 0, 1, 1], [], []>} : vector<128x128xbf16>, vector<128x36xbf16>, vector<128x36xf32> -> vector<128x36xf32>
    %c1_91 = arith.constant 1 : index
    %c0_92 = arith.constant 0 : index
    %c0_93 = arith.constant 0 : index
    %150 = vector.load %arg19[%c1_91, %c0_92, %c0_93] : memref<2x128x36xf32, #tpu.memory_space<vmem>>, vector<1x128x36xf32>
    %151 = vector.shape_cast %150 : vector<1x128x36xf32> to vector<128x36xf32>
    %152 = vector.shape_cast %149 : vector<128x36xf32> to vector<1x128x36xf32>
    tpu.vector_store %arg19[%c1_91, %c0_92, %c0_93], %152 {strides = array<i32>} : memref<2x128x36xf32, #tpu.memory_space<vmem>>, vector<1x128x36xf32>,
    %cst_94 = arith.constant 0.000000e+00 : f32
    %153 = vector.broadcast %cst_94 : f32 to vector<32x288xf32>
    %c0_95 = arith.constant 0 : index
    %c0_96 = arith.constant 0 : index
    %c0_97 = arith.constant 0 : index
    %154 = vector.load %arg19[%c0_95, %c0_96, %c0_97] : memref<2x128x36xf32, #tpu.memory_space<vmem>>, vector<2x16x36xf32>
    %155 = vector.shape_cast %154 : vector<2x16x36xf32> to vector<32x36xf32>
    %156 = arith.truncf %155 : vector<32x36xf32> to vector<32x36xbf16>
    %c0_98 = arith.constant 0 : index
    %c0_99 = arith.constant 0 : index
    %c0_100 = arith.constant 0 : index
    %157 = vector.load %arg10[%c0_98, %c0_99, %c0_100] : memref<8x36x288xbf16, #tpu.memory_space<vmem>>, vector<1x36x288xbf16>
    %158 = vector.shape_cast %157 : vector<1x36x288xbf16> to vector<36x288xbf16>
    %cst_101 = arith.constant dense<0.000000e+00> : vector<32x288xf32>
    %159 = tpu.matmul %156, %158, %cst_101 {dimension_numbers = #tpu.dot_dimension_numbers<[1], [0], [0], [1], [0, 0, 1, 1], [], []>} : vector<32x36xbf16>, vector<36x288xbf16>, vector<32x288xf32> -> vector<32x288xf32>
    %160 = arith.addf %153, %159 : vector<32x288xf32>
    %c0_102 = arith.constant 0 : index
    %c16_103 = arith.constant 16 : index
    %c0_104 = arith.constant 0 : index
    %161 = vector.load %arg19[%c0_102, %c16_103, %c0_104] : memref<2x128x36xf32, #tpu.memory_space<vmem>>, vector<2x16x36xf32>
    %162 = vector.shape_cast %161 : vector<2x16x36xf32> to vector<32x36xf32>
    %163 = arith.truncf %162 : vector<32x36xf32> to vector<32x36xbf16>
    %c1_105 = arith.constant 1 : index
    %c0_106 = arith.constant 0 : index
    %c0_107 = arith.constant 0 : index
    %164 = vector.load %arg10[%c1_105, %c0_106, %c0_107] : memref<8x36x288xbf16, #tpu.memory_space<vmem>>, vector<1x36x288xbf16>
    %165 = vector.shape_cast %164 : vector<1x36x288xbf16> to vector<36x288xbf16>
    %cst_108 = arith.constant dense<0.000000e+00> : vector<32x288xf32>
    %166 = tpu.matmul %163, %165, %cst_108 {dimension_numbers = #tpu.dot_dimension_numbers<[1], [0], [0], [1], [0, 0, 1, 1], [], []>} : vector<32x36xbf16>, vector<36x288xbf16>, vector<32x288xf32> -> vector<32x288xf32>
    %167 = arith.addf %160, %166 : vector<32x288xf32>
    %c0_109 = arith.constant 0 : index
    %c32 = arith.constant 32 : index
    %c0_110 = arith.constant 0 : index
    %168 = vector.load %arg19[%c0_109, %c32, %c0_110] : memref<2x128x36xf32, #tpu.memory_space<vmem>>, vector<2x16x36xf32>
    %169 = vector.shape_cast %168 : vector<2x16x36xf32> to vector<32x36xf32>
    %170 = arith.truncf %169 : vector<32x36xf32> to vector<32x36xbf16>
    %c2_111 = arith.constant 2 : index
    %c0_112 = arith.constant 0 : index
    %c0_113 = arith.constant 0 : index
    %171 = vector.load %arg10[%c2_111, %c0_112, %c0_113] : memref<8x36x288xbf16, #tpu.memory_space<vmem>>, vector<1x36x288xbf16>
    %172 = vector.shape_cast %171 : vector<1x36x288xbf16> to vector<36x288xbf16>
    %cst_114 = arith.constant dense<0.000000e+00> : vector<32x288xf32>
    %173 = tpu.matmul %170, %172, %cst_114 {dimension_numbers = #tpu.dot_dimension_numbers<[1], [0], [0], [1], [0, 0, 1, 1], [], []>} : vector<32x36xbf16>, vector<36x288xbf16>, vector<32x288xf32> -> vector<32x288xf32>
    %174 = arith.addf %167, %173 : vector<32x288xf32>
    %c0_115 = arith.constant 0 : index
    %c48 = arith.constant 48 : index
    %c0_116 = arith.constant 0 : index
    %175 = vector.load %arg19[%c0_115, %c48, %c0_116] : memref<2x128x36xf32, #tpu.memory_space<vmem>>, vector<2x16x36xf32>
    %176 = vector.shape_cast %175 : vector<2x16x36xf32> to vector<32x36xf32>
    %177 = arith.truncf %176 : vector<32x36xf32> to vector<32x36xbf16>
    %c3_117 = arith.constant 3 : index
    %c0_118 = arith.constant 0 : index
    %c0_119 = arith.constant 0 : index
    %178 = vector.load %arg10[%c3_117, %c0_118, %c0_119] : memref<8x36x288xbf16, #tpu.memory_space<vmem>>, vector<1x36x288xbf16>
    %179 = vector.shape_cast %178 : vector<1x36x288xbf16> to vector<36x288xbf16>
    %cst_120 = arith.constant dense<0.000000e+00> : vector<32x288xf32>
    %180 = tpu.matmul %177, %179, %cst_120 {dimension_numbers = #tpu.dot_dimension_numbers<[1], [0], [0], [1], [0, 0, 1, 1], [], []>} : vector<32x36xbf16>, vector<36x288xbf16>, vector<32x288xf32> -> vector<32x288xf32>
    %181 = arith.addf %174, %180 : vector<32x288xf32>
    %c0_121 = arith.constant 0 : index
    %c64 = arith.constant 64 : index
    %c0_122 = arith.constant 0 : index
    %182 = vector.load %arg19[%c0_121, %c64, %c0_122] : memref<2x128x36xf32, #tpu.memory_space<vmem>>, vector<2x16x36xf32>
    %183 = vector.shape_cast %182 : vector<2x16x36xf32> to vector<32x36xf32>
    %184 = arith.truncf %183 : vector<32x36xf32> to vector<32x36xbf16>
    %c4_123 = arith.constant 4 : index
    %c0_124 = arith.constant 0 : index
    %c0_125 = arith.constant 0 : index
    %185 = vector.load %arg10[%c4_123, %c0_124, %c0_125] : memref<8x36x288xbf16, #tpu.memory_space<vmem>>, vector<1x36x288xbf16>
    %186 = vector.shape_cast %185 : vector<1x36x288xbf16> to vector<36x288xbf16>
    %cst_126 = arith.constant dense<0.000000e+00> : vector<32x288xf32>
    %187 = tpu.matmul %184, %186, %cst_126 {dimension_numbers = #tpu.dot_dimension_numbers<[1], [0], [0], [1], [0, 0, 1, 1], [], []>} : vector<32x36xbf16>, vector<36x288xbf16>, vector<32x288xf32> -> vector<32x288xf32>
    %188 = arith.addf %181, %187 : vector<32x288xf32>
    %c0_127 = arith.constant 0 : index
    %c80 = arith.constant 80 : index
    %c0_128 = arith.constant 0 : index
    %189 = vector.load %arg19[%c0_127, %c80, %c0_128] : memref<2x128x36xf32, #tpu.memory_space<vmem>>, vector<2x16x36xf32>
    %190 = vector.shape_cast %189 : vector<2x16x36xf32> to vector<32x36xf32>
    %191 = arith.truncf %190 : vector<32x36xf32> to vector<32x36xbf16>
    %c5_129 = arith.constant 5 : index
    %c0_130 = arith.constant 0 : index
    %c0_131 = arith.constant 0 : index
    %192 = vector.load %arg10[%c5_129, %c0_130, %c0_131] : memref<8x36x288xbf16, #tpu.memory_space<vmem>>, vector<1x36x288xbf16>
    %193 = vector.shape_cast %192 : vector<1x36x288xbf16> to vector<36x288xbf16>
    %cst_132 = arith.constant dense<0.000000e+00> : vector<32x288xf32>
    %194 = tpu.matmul %191, %193, %cst_132 {dimension_numbers = #tpu.dot_dimension_numbers<[1], [0], [0], [1], [0, 0, 1, 1], [], []>} : vector<32x36xbf16>, vector<36x288xbf16>, vector<32x288xf32> -> vector<32x288xf32>
    %195 = arith.addf %188, %194 : vector<32x288xf32>
    %c0_133 = arith.constant 0 : index
    %c96 = arith.constant 96 : index
    %c0_134 = arith.constant 0 : index
    %196 = vector.load %arg19[%c0_133, %c96, %c0_134] : memref<2x128x36xf32, #tpu.memory_space<vmem>>, vector<2x16x36xf32>
    %197 = vector.shape_cast %196 : vector<2x16x36xf32> to vector<32x36xf32>
    %198 = arith.truncf %197 : vector<32x36xf32> to vector<32x36xbf16>
    %c6_135 = arith.constant 6 : index
    %c0_136 = arith.constant 0 : index
    %c0_137 = arith.constant 0 : index
    %199 = vector.load %arg10[%c6_135, %c0_136, %c0_137] : memref<8x36x288xbf16, #tpu.memory_space<vmem>>, vector<1x36x288xbf16>
    %200 = vector.shape_cast %199 : vector<1x36x288xbf16> to vector<36x288xbf16>
    %cst_138 = arith.constant dense<0.000000e+00> : vector<32x288xf32>
    %201 = tpu.matmul %198, %200, %cst_138 {dimension_numbers = #tpu.dot_dimension_numbers<[1], [0], [0], [1], [0, 0, 1, 1], [], []>} : vector<32x36xbf16>, vector<36x288xbf16>, vector<32x288xf32> -> vector<32x288xf32>
    %202 = arith.addf %195, %201 : vector<32x288xf32>
    %c0_139 = arith.constant 0 : index
    %c112 = arith.constant 112 : index
    %c0_140 = arith.constant 0 : index
    %203 = vector.load %arg19[%c0_139, %c112, %c0_140] : memref<2x128x36xf32, #tpu.memory_space<vmem>>, vector<2x16x36xf32>
    %204 = vector.shape_cast %203 : vector<2x16x36xf32> to vector<32x36xf32>
    %205 = arith.truncf %204 : vector<32x36xf32> to vector<32x36xbf16>
    %c7_141 = arith.constant 7 : index
    %c0_142 = arith.constant 0 : index
    %c0_143 = arith.constant 0 : index
    %206 = vector.load %arg10[%c7_141, %c0_142, %c0_143] : memref<8x36x288xbf16, #tpu.memory_space<vmem>>, vector<1x36x288xbf16>
    %207 = vector.shape_cast %206 : vector<1x36x288xbf16> to vector<36x288xbf16>
    %cst_144 = arith.constant dense<0.000000e+00> : vector<32x288xf32>
    %208 = tpu.matmul %205, %207, %cst_144 {dimension_numbers = #tpu.dot_dimension_numbers<[1], [0], [0], [1], [0, 0, 1, 1], [], []>} : vector<32x36xbf16>, vector<36x288xbf16>, vector<32x288xf32> -> vector<32x288xf32>
    %209 = arith.addf %202, %208 : vector<32x288xf32>
    %210 = arith.addf %32, %209 : vector<32x288xf32>
    %c0_145 = arith.constant 0 : index
    %c0_146 = arith.constant 0 : index
    %211 = vector.load %arg11[%c0_145, %c0_146] : memref<1x288xf32, #tpu.memory_space<vmem>>, vector<1x288xf32>
    %c0_147 = arith.constant 0 : index
    %c0_148 = arith.constant 0 : index
    %212 = vector.load %arg12[%c0_147, %c0_148] : memref<1x288xf32, #tpu.memory_space<vmem>>, vector<1x288xf32>
    %cst_149 = arith.constant dense<0.000000e+00> : vector<32xf32>
    %213 = vector.multi_reduction <add>, %210, %cst_149 [1] : vector<32x288xf32> to vector<32xf32>
    %214 = vector.shape_cast %213 : vector<32xf32> to vector<32x1xf32>
    %cst_150 = arith.constant 2.880000e+02 : f32
    %215 = vector.broadcast %cst_150 : f32 to vector<32x1xf32>
    %216 = arith.divf %214, %215 : vector<32x1xf32>
    %217 = vector.broadcast %216 : vector<32x1xf32> to vector<32x288xf32>
    %218 = arith.subf %210, %217 : vector<32x288xf32>
    %219 = arith.mulf %218, %218 : vector<32x288xf32>
    %cst_151 = arith.constant dense<0.000000e+00> : vector<32xf32>
    %220 = vector.multi_reduction <add>, %219, %cst_151 [1] : vector<32x288xf32> to vector<32xf32>
    %221 = vector.shape_cast %220 : vector<32xf32> to vector<32x1xf32>
    %cst_152 = arith.constant 2.880000e+02 : f32
    %222 = vector.broadcast %cst_152 : f32 to vector<32x1xf32>
    %223 = arith.divf %221, %222 : vector<32x1xf32>
    %224 = vector.broadcast %216 : vector<32x1xf32> to vector<32x288xf32>
    %225 = arith.subf %210, %224 : vector<32x288xf32>
    %cst_153 = arith.constant 9.99999974E-6 : f32
    %226 = vector.broadcast %cst_153 : f32 to vector<32x1xf32>
    %227 = arith.addf %223, %226 : vector<32x1xf32>
    %228 = math.rsqrt %227 : vector<32x1xf32>
    %229 = vector.broadcast %228 : vector<32x1xf32> to vector<32x288xf32>
    %230 = arith.mulf %225, %229 : vector<32x288xf32>
    %231 = vector.broadcast %211 : vector<1x288xf32> to vector<32x288xf32>
    %232 = arith.mulf %230, %231 : vector<32x288xf32>
    %233 = vector.broadcast %212 : vector<1x288xf32> to vector<32x288xf32>
    %234 = arith.addf %232, %233 : vector<32x288xf32>
    %235 = arith.truncf %234 : vector<32x288xf32> to vector<32x288xbf16>
    %c0_154 = arith.constant 0 : index
    %c0_155 = arith.constant 0 : index
    %236 = vector.load %arg13[%c0_154, %c0_155] : memref<288x32xbf16, #tpu.memory_space<vmem>>, vector<288x32xbf16>
    %cst_156 = arith.constant dense<0.000000e+00> : vector<32x32xf32>
    %237 = tpu.matmul %235, %236, %cst_156 {dimension_numbers = #tpu.dot_dimension_numbers<[1], [0], [0], [1], [0, 0, 1, 1], [], []>} : vector<32x288xbf16>, vector<288x32xbf16>, vector<32x32xf32> -> vector<32x32xf32>
    %c0_157 = arith.constant 0 : index
    %c0_158 = arith.constant 0 : index
    %238 = vector.load %arg14[%c0_157, %c0_158] : memref<1x32xf32, #tpu.memory_space<vmem>>, vector<1x32xf32>
    %239 = vector.broadcast %238 : vector<1x32xf32> to vector<32x32xf32>
    %240 = arith.addf %237, %239 : vector<32x32xf32>
    %cst_159 = arith.constant 0.000000e+00 : f32
    %241 = vector.broadcast %cst_159 : f32 to vector<32x32xf32>
    %242 = arith.maximumf %240, %241 : vector<32x32xf32>
    %243 = arith.truncf %242 : vector<32x32xf32> to vector<32x32xbf16>
    %c0_160 = arith.constant 0 : index
    %c0_161 = arith.constant 0 : index
    %244 = vector.load %arg15[%c0_160, %c0_161] : memref<32x288xbf16, #tpu.memory_space<vmem>>, vector<32x288xbf16>
    %cst_162 = arith.constant dense<0.000000e+00> : vector<32x288xf32>
    %245 = tpu.matmul %243, %244, %cst_162 {dimension_numbers = #tpu.dot_dimension_numbers<[1], [0], [0], [1], [0, 0, 1, 1], [], []>} : vector<32x32xbf16>, vector<32x288xbf16>, vector<32x288xf32> -> vector<32x288xf32>
    %c0_163 = arith.constant 0 : index
    %c0_164 = arith.constant 0 : index
    %246 = vector.load %arg16[%c0_163, %c0_164] : memref<1x288xf32, #tpu.memory_space<vmem>>, vector<1x288xf32>
    %247 = vector.broadcast %246 : vector<1x288xf32> to vector<32x288xf32>
    %248 = arith.addf %245, %247 : vector<32x288xf32>
    %249 = arith.addf %234, %248 : vector<32x288xf32>
    %250 = vector.shape_cast %249 : vector<32x288xf32> to vector<2x16x288xf32>
    %c0_165 = arith.constant 0 : index
    %c0_166 = arith.constant 0 : index
    %c0_167 = arith.constant 0 : index
    %251 = vector.load %arg17[%c0_165, %c0_166, %c0_167] : memref<2x16x288xf32, #tpu.memory_space<vmem>>, vector<2x16x288xf32>
    tpu.vector_store %arg17[%c0_165, %c0_166, %c0_167], %250 {strides = array<i32>} : memref<2x16x288xf32, #tpu.memory_space<vmem>>, vector<2x16x288xf32>,
    return
  }
  func.func @transform_0(%arg0: i32) -> (i32, i32, i32) {
    %c0_i32 = arith.constant 0 : i32
    %c0_i32_0 = arith.constant 0 : i32
    %c0_i32_1 = arith.constant 0 : i32
    return %arg0, %c0_i32, %c0_i32_0 : i32, i32, i32
  }
  func.func @transform_1(%arg0: i32) -> (i32, i32) {
    %c0_i32 = arith.constant 0 : i32
    %c0_i32_0 = arith.constant 0 : i32
    %c0_i32_1 = arith.constant 0 : i32
    return %c0_i32, %c0_i32_0 : i32, i32
  }
  func.func @transform_2(%arg0: i32) -> (i32, i32) {
    %c0_i32 = arith.constant 0 : i32
    %c0_i32_0 = arith.constant 0 : i32
    %c0_i32_1 = arith.constant 0 : i32
    return %c0_i32, %c0_i32_0 : i32, i32
  }
  func.func @transform_3(%arg0: i32) -> (i32, i32) {
    %c0_i32 = arith.constant 0 : i32
    %c0_i32_0 = arith.constant 0 : i32
    %c0_i32_1 = arith.constant 0 : i32
    return %c0_i32, %c0_i32_0 : i32, i32
  }
  func.func @transform_4(%arg0: i32) -> (i32, i32) {
    %c0_i32 = arith.constant 0 : i32
    %c0_i32_0 = arith.constant 0 : i32
    %c0_i32_1 = arith.constant 0 : i32
    return %c0_i32, %c0_i32_0 : i32, i32
  }
  func.func @transform_5(%arg0: i32) -> (i32, i32) {
    %c0_i32 = arith.constant 0 : i32
    %c0_i32_0 = arith.constant 0 : i32
    %c0_i32_1 = arith.constant 0 : i32
    return %c0_i32, %c0_i32_0 : i32, i32
  }
  func.func @transform_6(%arg0: i32) -> (i32, i32) {
    %c0_i32 = arith.constant 0 : i32
    %c0_i32_0 = arith.constant 0 : i32
    %c0_i32_1 = arith.constant 0 : i32
    return %c0_i32, %c0_i32_0 : i32, i32
  }
  func.func @transform_7(%arg0: i32) -> (i32, i32) {
    %c0_i32 = arith.constant 0 : i32
    %c0_i32_0 = arith.constant 0 : i32
    %c0_i32_1 = arith.constant 0 : i32
    return %c0_i32, %c0_i32_0 : i32, i32
  }
  func.func @transform_8(%arg0: i32) -> (i32, i32, i32) {
    %c0_i32 = arith.constant 0 : i32
    %c0_i32_0 = arith.constant 0 : i32
    %c0_i32_1 = arith.constant 0 : i32
    %c0_i32_2 = arith.constant 0 : i32
    return %c0_i32, %c0_i32_0, %c0_i32_1 : i32, i32, i32
  }
  func.func @transform_9(%arg0: i32) -> (i32, i32, i32) {
    %c0_i32 = arith.constant 0 : i32
    %c0_i32_0 = arith.constant 0 : i32
    %c0_i32_1 = arith.constant 0 : i32
    %c0_i32_2 = arith.constant 0 : i32
    return %c0_i32, %c0_i32_0, %c0_i32_1 : i32, i32, i32
  }
  func.func @transform_10(%arg0: i32) -> (i32, i32) {
    %c0_i32 = arith.constant 0 : i32
    %c0_i32_0 = arith.constant 0 : i32
    %c0_i32_1 = arith.constant 0 : i32
    return %c0_i32, %c0_i32_0 : i32, i32
  }
  func.func @transform_11(%arg0: i32) -> (i32, i32) {
    %c0_i32 = arith.constant 0 : i32
    %c0_i32_0 = arith.constant 0 : i32
    %c0_i32_1 = arith.constant 0 : i32
    return %c0_i32, %c0_i32_0 : i32, i32
  }
  func.func @transform_12(%arg0: i32) -> (i32, i32) {
    %c0_i32 = arith.constant 0 : i32
    %c0_i32_0 = arith.constant 0 : i32
    %c0_i32_1 = arith.constant 0 : i32
    return %c0_i32, %c0_i32_0 : i32, i32
  }
  func.func @transform_13(%arg0: i32) -> (i32, i32) {
    %c0_i32 = arith.constant 0 : i32
    %c0_i32_0 = arith.constant 0 : i32
    %c0_i32_1 = arith.constant 0 : i32
    return %c0_i32, %c0_i32_0 : i32, i32
  }
  func.func @transform_14(%arg0: i32) -> (i32, i32) {
    %c0_i32 = arith.constant 0 : i32
    %c0_i32_0 = arith.constant 0 : i32
    %c0_i32_1 = arith.constant 0 : i32
    return %c0_i32, %c0_i32_0 : i32, i32
  }
  func.func @transform_15(%arg0: i32) -> (i32, i32) {
    %c0_i32 = arith.constant 0 : i32
    %c0_i32_0 = arith.constant 0 : i32
    %c0_i32_1 = arith.constant 0 : i32
    return %c0_i32, %c0_i32_0 : i32, i32
  }
  func.func @transform_16(%arg0: i32) -> (i32, i32, i32) {
    %c0_i32 = arith.constant 0 : i32
    %c0_i32_0 = arith.constant 0 : i32
    %c0_i32_1 = arith.constant 0 : i32
    return %arg0, %c0_i32, %c0_i32_0 : i32, i32, i32
  }
}

</mosaic_0001>

<llo_original>
// kernel: eq.8
$region0: #{eq.8}
  %s0 = inlined_call_operand.vmem [shape: s32[8,16], index: 0, kind: input, shape index: {}]
  %s1 = inlined_call_operand.vmem [shape: s32[128], index: 1, kind: output, shape index: {}]
  $region1: #{eq.8} parent=0
    #allocation0 [shape = 'u8[4096]{0}', space=vmem, size = 0x1000, scoped, tag = 'scoped mem for output reshape']
    %v2 = vld [vmem:[%s0] sm:$0x1]
    %vm3 = vcmask 130048
    %4 = vst.msk [vmem:[#allocation0] sm:$0x1] %vm3, %v2
    %s5 = scalar_lea.vmem %s0, 7
    %v6 = vld [vmem:[%s5] sm:$0x1]
    %7 = vrot.lane.b32.xlu0 %v6, 112
    %v8 = vpop.permute.xlu0 %7
    %vm9 = vcmask 1048448
    %10 = vst.msk [vmem:[#allocation0] sm:$0x1] %vm9, %v8
    %s11 = scalar_lea.vmem %s0, 6
    %v12 = vld [vmem:[%s11] sm:$0x1]
    %13 = vrot.lane.b32.xlu0 %v12, 96
    %v14 = vpop.permute.xlu0 %13
    %vm15 = vcmask 917248
    %16 = vst.msk [vmem:[#allocation0] sm:$0x1] %vm15, %v14
    %s17 = scalar_lea.vmem %s0, 5
    %v18 = vld [vmem:[%s17] sm:$0x1]
    %19 = vrot.lane.b32.xlu0 %v18, 80
    %v20 = vpop.permute.xlu0 %19
    %vm21 = vcmask 786048
    %22 = vst.msk [vmem:[#allocation0] sm:$0x1] %vm21, %v20
    %s23 = scalar_lea.vmem %s0, 4
    %v24 = vld [vmem:[%s23] sm:$0x1]
    %25 = vrot.lane.b32.xlu0 %v24, 64
    %v26 = vpop.permute.xlu0 %25
    %vm27 = vcmask 654848
    %28 = vst.msk [vmem:[#allocation0] sm:$0x1] %vm27, %v26
    %s29 = scalar_lea.vmem %s0, 3
    %v30 = vld [vmem:[%s29] sm:$0x1]
    %31 = vrot.lane.b32.xlu0 %v30, 48
    %v32 = vpop.permute.xlu0 %31
    %vm33 = vcmask 523648
    %34 = vst.msk [vmem:[#allocation0] sm:$0x1] %vm33, %v32
    %s35 = scalar_lea.vmem %s0, 2
    %v36 = vld [vmem:[%s35] sm:$0x1]
    %37 = vrot.lane.b32.xlu0 %v36, 32
    %v38 = vpop.permute.xlu0 %37
    %vm39 = vcmask 392448
    %40 = vst.msk [vmem:[#allocation0] sm:$0x1] %vm39, %v38
    %s41 = scalar_lea.vmem %s0, 1
    %v42 = vld [vmem:[%s41] sm:$0x1]
    %43 = vrot.lane.b32.xlu0 %v42, 16
    %v44 = vpop.permute.xlu0 %43
    %vm45 = vcmask 261248
    %46 = vst.msk [vmem:[#allocation0] sm:$0x1] %vm45, %v44
    %s48 = ssub.s32 2, 1
    %v49 = vld [vmem:[#allocation0] sm:%s48]
    %s51 = ssub.s32 2, 1
    %52 = vst [vmem:[%s1] sm:%s51] %v49

// kernel: psablock_forward.1
$region0: #{psablock_forward.1}
  #allocation0 [shape = 'u32[]', space=smem, size = 0x4, offset = 0x4, fixed_abs, tag = 'smem constant byte address 0x4 - core index']
  #allocation1 [shape = 'u32[72,128]{1,0:T(1,128)}', space=vmem, size = 0x9000, scoped, tag = 'internal scratch']
  #allocation2 [shape = 'f32[8,32,108]{2,1,0:T(8,128)}', space=vmem, size = 0x20000, scoped, tag = 'scratch operand']
  #allocation3 [shape = 'f32[2,128,36]{2,1,0:T(8,128)}', space=vmem, size = 0x20000, scoped, tag = 'scratch operand']
  %s0 = inlined_call_operand.vmem [shape: f32[2,16,288], index: 0, kind: input, shape index: {}]
  %s1 = inlined_call_operand.vmem [shape: f32[128,128], index: 1, kind: input, shape index: {}]
  %s2 = inlined_call_operand.vmem [shape: f32[1,288], index: 2, kind: input, shape index: {}]
  %s3 = inlined_call_operand.vmem [shape: f32[1,288], index: 3, kind: input, shape index: {}]
  %s4 = inlined_call_operand.vmem [shape: bf16[288,288], index: 4, kind: input, shape index: {}]
  %s5 = inlined_call_operand.vmem [shape: f32[1,288], index: 5, kind: input, shape index: {}]
  %s6 = inlined_call_operand.vmem [shape: f32[1,288], index: 6, kind: input, shape index: {}]
  %s7 = inlined_call_operand.vmem [shape: f32[1,288], index: 7, kind: input, shape index: {}]
  %s8 = inlined_call_operand.vmem [shape: bf16[8,288,108], index: 8, kind: input, shape index: {}]
  %s9 = inlined_call_operand.vmem [shape: bf16[8,36,288], index: 9, kind: input, shape index: {}]
  %s10 = inlined_call_operand.vmem [shape: f32[1,288], index: 10, kind: input, shape index: {}]
  %s11 = inlined_call_operand.vmem [shape: f32[1,288], index: 11, kind: input, shape index: {}]
  %s12 = inlined_call_operand.vmem [shape: bf16[288,32], index: 12, kind: input, shape index: {}]
  %s13 = inlined_call_operand.vmem [shape: f32[1,32], index: 13, kind: input, shape index: {}]
  %s14 = inlined_call_operand.vmem [shape: bf16[32,288], index: 14, kind: input, shape index: {}]
  %s15 = inlined_call_operand.vmem [shape: f32[1,288], index: 15, kind: input, shape index: {}]
  %s16 = inlined_call_operand.vmem [shape: f32[2,16,288], index: 16, kind: output, shape index: {}]
  %s17 = sld [smem:[#allocation0]]
  $region74: #{psablock_forward.1} parent=0
    _
  %s19 = ssub.s32 1, %s17
  %s20 = scalar_select 0, %s19, %s17
  // Predicated region
  $region2: #{psablock_forward.1} parent=0 // pred_check
    _
  $region3: #{psablock_forward.1} parent=0 // pred_check_branch
    %22 = sbr.rel (0) target = $region5
  $region4: #{psablock_forward.1} parent=0 // pred_region
    _
  $region5: #{psablock_forward.1} parent=0 // pred_fallthru
    _
  // Predicated region
  $region6: #{psablock_forward.1} parent=0 // pred_check
    _
  $region7: #{psablock_forward.1} parent=0 // pred_check_branch
    %24 = sbr.rel (0) target = $region9
  $region8: #{psablock_forward.1} parent=0 // pred_region
    _
  $region9: #{psablock_forward.1} parent=0 // pred_fallthru
    _
  // Predicated region
  $region10: #{psablock_forward.1} parent=0 // pred_check
    _
  $region11: #{psablock_forward.1} parent=0 // pred_check_branch
    %26 = sbr.rel (0) target = $region13
  $region12: #{psablock_forward.1} parent=0 // pred_region
    _
  $region13: #{psablock_forward.1} parent=0 // pred_fallthru
    _
  // Predicated region
  $region14: #{psablock_forward.1} parent=0 // pred_check
    _
  $region15: #{psablock_forward.1} parent=0 // pred_check_branch
    %28 = sbr.rel (0) target = $region17
  $region16: #{psablock_forward.1} parent=0 // pred_region
    _
  $region17: #{psablock_forward.1} parent=0 // pred_fallthru
    _
  // Predicated region
  $region18: #{psablock_forward.1} parent=0 // pred_check
    _
  $region19: #{psablock_forward.1} parent=0 // pred_check_branch
    %30 = sbr.rel (0) target = $region21
  $region20: #{psablock_forward.1} parent=0 // pred_region
    _
  $region21: #{psablock_forward.1} parent=0 // pred_fallthru
    _
  // Predicated region
  $region22: #{psablock_forward.1} parent=0 // pred_check
    _
  $region23: #{psablock_forward.1} parent=0 // pred_check_branch
    %32 = sbr.rel (0) target = $region25
  $region24: #{psablock_forward.1} parent=0 // pred_region
    _
  $region25: #{psablock_forward.1} parent=0 // pred_fallthru
    _
  // Predicated region
  $region26: #{psablock_forward.1} parent=0 // pred_check
    _
  $region27: #{psablock_forward.1} parent=0 // pred_check_branch
    %34 = sbr.rel (0) target = $region29
  $region28: #{psablock_forward.1} parent=0 // pred_region
    _
  $region29: #{psablock_forward.1} parent=0 // pred_fallthru
    _
  // Predicated region
  $region30: #{psablock_forward.1} parent=0 // pred_check
    _
  $region31: #{psablock_forward.1} parent=0 // pred_check_branch
    %36 = sbr.rel (0) target = $region33
  $region32: #{psablock_forward.1} parent=0 // pred_region
    _
  $region33: #{psablock_forward.1} parent=0 // pred_fallthru
    _
  // Predicated region
  $region34: #{psablock_forward.1} parent=0 // pred_check
    _
  $region35: #{psablock_forward.1} parent=0 // pred_check_branch
    %38 = sbr.rel (0) target = $region37
  $region36: #{psablock_forward.1} parent=0 // pred_region
    _
  $region37: #{psablock_forward.1} parent=0 // pred_fallthru
    _
  // Predicated region
  $region38: #{psablock_forward.1} parent=0 // pred_check
    _
  $region39: #{psablock_forward.1} parent=0 // pred_check_branch
    %40 = sbr.rel (0) target = $region41
  $region40: #{psablock_forward.1} parent=0 // pred_region
    _
  $region41: #{psablock_forward.1} parent=0 // pred_fallthru
    _
  // Predicated region
  $region42: #{psablock_forward.1} parent=0 // pred_check
    _
  $region43: #{psablock_forward.1} parent=0 // pred_check_branch
    %42 = sbr.rel (0) target = $region45
  $region44: #{psablock_forward.1} parent=0 // pred_region
    _
  $region45: #{psablock_forward.1} parent=0 // pred_fallthru
    _
  // Predicated region
  $region46: #{psablock_forward.1} parent=0 // pred_check
    _
  $region47: #{psablock_forward.1} parent=0 // pred_check_branch
    %44 = sbr.rel (0) target = $region49
  $region48: #{psablock_forward.1} parent=0 // pred_region
    _
  $region49: #{psablock_forward.1} parent=0 // pred_fallthru
    _
  // Predicated region
  $region50: #{psablock_forward.1} parent=0 // pred_check
    _
  $region51: #{psablock_forward.1} parent=0 // pred_check_branch
    %46 = sbr.rel (0) target = $region53
  $region52: #{psablock_forward.1} parent=0 // pred_region
    _
  $region53: #{psablock_forward.1} parent=0 // pred_fallthru
    _
  // Predicated region
  $region54: #{psablock_forward.1} parent=0 // pred_check
    _
  $region55: #{psablock_forward.1} parent=0 // pred_check_branch
    %48 = sbr.rel (0) target = $region57
  $region56: #{psablock_forward.1} parent=0 // pred_region
    _
  $region57: #{psablock_forward.1} parent=0 // pred_fallthru
    _
  // Predicated region
  $region58: #{psablock_forward.1} parent=0 // pred_check
    _
  $region59: #{psablock_forward.1} parent=0 // pred_check_branch
    %50 = sbr.rel (0) target = $region61
  $region60: #{psablock_forward.1} parent=0 // pred_region
    _
  $region61: #{psablock_forward.1} parent=0 // pred_fallthru
    _
  // Predicated region
  $region62: #{psablock_forward.1} parent=0 // pred_check
    _
  $region63: #{psablock_forward.1} parent=0 // pred_check_branch
    %52 = sbr.rel (0) target = $region65
  $region64: #{psablock_forward.1} parent=0 // pred_region
    _
  $region65: #{psablock_forward.1} parent=0 // pred_fallthru
    _
  %v54 = vld [vmem:[%s0] sm:$0xff]
  %v55 = vld [vmem:[%s0 + $0x8] sm:$0xff]
  %v56 = vld [vmem:[%s0 + $0x10] sm:$0xff]
  %v57 = vld [vmem:[%s0 + $0x18] sm:$0xff]
  %v58 = vld [vmem:[%s0 + $0x20] sm:$0xff]
  %v59 = vld [vmem:[%s0 + $0x28] sm:$0xff]
  %v60 = vld [vmem:[%s0 + $0x30] sm:$0xff]
  %v61 = vld [vmem:[%s0 + $0x38] sm:$0xff]
  %v62 = vld [vmem:[%s0 + $0x40] sm:$0xff]
  %v63 = vld [vmem:[%s0 + $0x48] sm:$0xff]
  %v64 = vld [vmem:[%s0 + $0x50] sm:$0xff]
  %v65 = vld [vmem:[%s0 + $0x58] sm:$0xff]
  %v66 = vld [vmem:[%s2] sm:$0x7]
  %v67 = vld [vmem:[%s3] sm:$0x7]
  %v68 = vadd.f32 %v54, %v55
  %vm69 = vcmask 261120
  %v70 = vsel %vm69, %v56, 0.0
  %v71 = vadd.f32 %v68, %v70
  %72 = vadd.xlane.f32.xlu0 %v71
  %v73 = vpop.xlane.xlu0 %72
  %v74 = vadd.f32 %v57, %v58
  %v75 = vsel %vm69, %v59, 0.0
  %v76 = vadd.f32 %v74, %v75
  %77 = vadd.xlane.f32.xlu0 %v76
  %v78 = vpop.xlane.xlu0 %77
  %v79 = vadd.f32 %v60, %v61
  %v80 = vsel %vm69, %v62, 0.0
  %v81 = vadd.f32 %v79, %v80
  %82 = vadd.xlane.f32.xlu0 %v81
  %v83 = vpop.xlane.xlu0 %82
  %v84 = vadd.f32 %v63, %v64
  %v85 = vsel %vm69, %v65, 0.0
  %v86 = vadd.f32 %v84, %v85
  %87 = vadd.xlane.f32.xlu0 %v86
  %v88 = vpop.xlane.xlu0 %87
  %v89 = vrcp.pop 288.0
  %v90 = vmul.f32 288.0, %v89
  %v91 = vsub.f32 1.0, %v90
  %v92 = vmul.f32 %v89, %v91
  %v93 = vadd.f32 %v89, %v92
  %vm94 = vweird.f32 %v89
  %v95 = vsel %vm94, %v89, %v93
  %v96 = vmul.f32 %v73, %v95
  %v97 = vmul.f32 %v78, %v95
  %v98 = vmul.f32 %v83, %v95
  %v99 = vmul.f32 %v88, %v95
  %v100 = vsub.f32 %v54, %v96
  %v101 = vsub.f32 %v55, %v96
  %v102 = vsub.f32 %v56, %v96
  %v103 = vsub.f32 %v57, %v97
  %v104 = vsub.f32 %v58, %v97
  %v105 = vsub.f32 %v59, %v97
  %v106 = vsub.f32 %v60, %v98
  %v107 = vsub.f32 %v61, %v98
  %v108 = vsub.f32 %v62, %v98
  %v109 = vsub.f32 %v63, %v99
  %v110 = vsub.f32 %v64, %v99
  %v111 = vsub.f32 %v65, %v99
  %v112 = vmul.f32 %v100, %v100
  %v113 = vmul.f32 %v101, %v101
  %v114 = vmul.f32 %v102, %v102
  %v115 = vmul.f32 %v103, %v103
  %v116 = vmul.f32 %v104, %v104
  %v117 = vmul.f32 %v105, %v105
  %v118 = vmul.f32 %v106, %v106
  %v119 = vmul.f32 %v107, %v107
  %v120 = vmul.f32 %v108, %v108
  %v121 = vmul.f32 %v109, %v109
  %v122 = vmul.f32 %v110, %v110
  %v123 = vmul.f32 %v111, %v111
  %v124 = vadd.f32 %v112, %v113
  %v125 = vsel %vm69, %v114, 0.0
  %v126 = vadd.f32 %v124, %v125
  %127 = vadd.xlane.f32.xlu0 %v126
  %v128 = vpop.xlane.xlu0 %127
  %v129 = vadd.f32 %v115, %v116
  %v130 = vsel %vm69, %v117, 0.0
  %v131 = vadd.f32 %v129, %v130
  %132 = vadd.xlane.f32.xlu0 %v131
  %v133 = vpop.xlane.xlu0 %132
  %v134 = vadd.f32 %v118, %v119
  %v135 = vsel %vm69, %v120, 0.0
  %v136 = vadd.f32 %v134, %v135
  %137 = vadd.xlane.f32.xlu0 %v136
  %v138 = vpop.xlane.xlu0 %137
  %v139 = vadd.f32 %v121, %v122
  %v140 = vsel %vm69, %v123, 0.0
  %v141 = vadd.f32 %v139, %v140
  %142 = vadd.xlane.f32.xlu0 %v141
  %v143 = vpop.xlane.xlu0 %142
  %v144 = vmul.f32 %v128, %v95
  %v145 = vmul.f32 %v133, %v95
  %v146 = vmul.f32 %v138, %v95
  %v147 = vmul.f32 %v143, %v95
  %v148 = vadd.f32 %v144, 1e-05
  %v149 = vadd.f32 %v145, 1e-05
  %v150 = vadd.f32 %v146, 1e-05
  %v151 = vadd.f32 %v147, 1e-05
  %v152 = vrsqrt.pop %v148
  %v153 = vmul.f32 %v152, %v148
  %v154 = vmul.f32 %v153, %v152
  %v155 = vmul.f32 0.5, %v154
  %v156 = vsub.f32 1.5, %v155
  %v157 = vmul.f32 %v152, %v156
  %vm158 = vweird.f32 %v148
  %vm159 = vweird.f32 %v152
  %vm160 = vmor %vm158, %vm159
  %v161 = vsel %vm160, %v152, %v157
  %v162 = vrsqrt.pop %v149
  %v163 = vmul.f32 %v162, %v149
  %v164 = vmul.f32 %v163, %v162
  %v165 = vmul.f32 0.5, %v164
  %v166 = vsub.f32 1.5, %v165
  %v167 = vmul.f32 %v162, %v166
  %vm168 = vweird.f32 %v149
  %vm169 = vweird.f32 %v162
  %vm170 = vmor %vm168, %vm169
  %v171 = vsel %vm170, %v162, %v167
  %v172 = vrsqrt.pop %v150
  %v173 = vmul.f32 %v172, %v150
  %v174 = vmul.f32 %v173, %v172
  %v175 = vmul.f32 0.5, %v174
  %v176 = vsub.f32 1.5, %v175
  %v177 = vmul.f32 %v172, %v176
  %vm178 = vweird.f32 %v150
  %vm179 = vweird.f32 %v172
  %vm180 = vmor %vm178, %vm179
  %v181 = vsel %vm180, %v172, %v177
  %v182 = vrsqrt.pop %v151
  %v183 = vmul.f32 %v182, %v151
  %v184 = vmul.f32 %v183, %v182
  %v185 = vmul.f32 0.5, %v184
  %v186 = vsub.f32 1.5, %v185
  %v187 = vmul.f32 %v182, %v186
  %vm188 = vweird.f32 %v151
  %vm189 = vweird.f32 %v182
  %vm190 = vmor %vm188, %vm189
  %v191 = vsel %vm190, %v182, %v187
  %v192 = vmul.f32 %v100, %v161
  %v193 = vmul.f32 %v101, %v161
  %v194 = vmul.f32 %v102, %v161
  %v195 = vmul.f32 %v103, %v171
  %v196 = vmul.f32 %v104, %v171
  %v197 = vmul.f32 %v105, %v171
  %v198 = vmul.f32 %v106, %v181
  %v199 = vmul.f32 %v107, %v181
  %v200 = vmul.f32 %v108, %v181
  %v201 = vmul.f32 %v109, %v191
  %v202 = vmul.f32 %v110, %v191
  %v203 = vmul.f32 %v111, %v191
  %v205 = vperm.slane %v66, 0
  %v206 = vperm.slane %v66, 1
  %v207 = vperm.slane %v66, 2
  %v211 = vmul.f32 %v192, %v205
  %v212 = vmul.f32 %v193, %v206
  %v213 = vmul.f32 %v194, %v207
  %v214 = vmul.f32 %v195, %v205
  %v215 = vmul.f32 %v196, %v206
  %v216 = vmul.f32 %v197, %v207
  %v217 = vmul.f32 %v198, %v205
  %v218 = vmul.f32 %v199, %v206
  %v219 = vmul.f32 %v200, %v207
  %v220 = vmul.f32 %v201, %v205
  %v221 = vmul.f32 %v202, %v206
  %v222 = vmul.f32 %v203, %v207
  %v224 = vperm.slane %v67, 0
  %v225 = vperm.slane %v67, 1
  %v226 = vperm.slane %v67, 2
  %v230 = vadd.f32 %v211, %v224
  %v231 = vadd.f32 %v212, %v225
  %v232 = vadd.f32 %v213, %v226
  %v233 = vadd.f32 %v214, %v224
  %v234 = vadd.f32 %v215, %v225
  %v235 = vadd.f32 %v216, %v226
  %v236 = vadd.f32 %v217, %v224
  %v237 = vadd.f32 %v218, %v225
  %v238 = vadd.f32 %v219, %v226
  %v239 = vadd.f32 %v220, %v224
  %v240 = vadd.f32 %v221, %v225
  %v241 = vadd.f32 %v222, %v226
  %v242 = vpack.c.bf16 %v233, %v230
  %v243 = vpack.c.bf16 %v234, %v231
  %v244 = vpack.c.bf16 %v235, %v232
  %v245 = vpack.c.bf16 %v239, %v236
  %v246 = vpack.c.bf16 %v240, %v237
  %v247 = vpack.c.bf16 %v241, %v238
  %v248 = vld [vmem:[%s4] sm:$0xff]
  %v249 = vld [vmem:[%s4 + $0x8] sm:$0xf]
  %v250 = vld [vmem:[%s4 + $0xc] sm:$0xff]
  %v251 = vld [vmem:[%s4 + $0x14] sm:$0xf]
  %v252 = vld [vmem:[%s4 + $0x18] sm:$0xff]
  %v253 = vld [vmem:[%s4 + $0x20] sm:$0xf]
  %v254 = vld [vmem:[%s4 + $0x24] sm:$0xff]
  %v255 = vld [vmem:[%s4 + $0x2c] sm:$0xf]
  %v256 = vld [vmem:[%s4 + $0x30] sm:$0xff]
  %v257 = vld [vmem:[%s4 + $0x38] sm:$0xf]
  %v258 = vld [vmem:[%s4 + $0x3c] sm:$0xff]
  %v259 = vld [vmem:[%s4 + $0x44] sm:$0xf]
  %v260 = vld [vmem:[%s4 + $0x48] sm:$0xff]
  %v261 = vld [vmem:[%s4 + $0x50] sm:$0xf]
  %v262 = vld [vmem:[%s4 + $0x54] sm:$0xff]
  %v263 = vld [vmem:[%s4 + $0x5c] sm:$0xf]
  %v264 = vld [vmem:[%s4 + $0x60] sm:$0xff]
  %v265 = vld [vmem:[%s4 + $0x68] sm:$0xf]
  %v266 = vld [vmem:[%s4 + $0x6c] sm:$0xff]
  %v267 = vld [vmem:[%s4 + $0x74] sm:$0xf]
  %v268 = vld [vmem:[%s4 + $0x78] sm:$0xff]
  %v269 = vld [vmem:[%s4 + $0x80] sm:$0xf]
  %v270 = vld [vmem:[%s4 + $0x84] sm:$0xff]
  %v271 = vld [vmem:[%s4 + $0x8c] sm:$0xf]
  %v272 = vld [vmem:[%s4 + $0x90] sm:$0xff]
  %v273 = vld [vmem:[%s4 + $0x98] sm:$0xf]
  %v274 = vld [vmem:[%s4 + $0x9c] sm:$0xff]
  %v275 = vld [vmem:[%s4 + $0xa4] sm:$0xf]
  %v276 = vld [vmem:[%s4 + $0xa8] sm:$0xff]
  %v277 = vld [vmem:[%s4 + $0xb0] sm:$0xf]
  %v278 = vld [vmem:[%s4 + $0xb4] sm:$0xff]
  %v279 = vld [vmem:[%s4 + $0xbc] sm:$0xf]
  %v280 = vld [vmem:[%s4 + $0xc0] sm:$0xff]
  %v281 = vld [vmem:[%s4 + $0xc8] sm:$0xf]
  %v282 = vld [vmem:[%s4 + $0xcc] sm:$0xff]
  %v283 = vld [vmem:[%s4 + $0xd4] sm:$0xf]
  %v284 = vld [vmem:[%s4 + $0xd8] sm:$0xff]
  %v285 = vld [vmem:[%s4 + $0xe0] sm:$0xf]
  %v286 = vld [vmem:[%s4 + $0xe4] sm:$0xff]
  %v287 = vld [vmem:[%s4 + $0xec] sm:$0xf]
  %v288 = vld [vmem:[%s4 + $0xf0] sm:$0xff]
  %v289 = vld [vmem:[%s4 + $0xf8] sm:$0xf]
  %v290 = vld [vmem:[%s4 + $0xfc] sm:$0xff]
  %v291 = vld [vmem:[%s4 + $0x104] sm:$0xf]
  %v292 = vld [vmem:[%s4 + $0x108] sm:$0xff]
  %v293 = vld [vmem:[%s4 + $0x110] sm:$0xf]
  %v294 = vld [vmem:[%s4 + $0x114] sm:$0xff]
  %v295 = vld [vmem:[%s4 + $0x11c] sm:$0xf]
  %v296 = vld [vmem:[%s4 + $0x120] sm:$0xff]
  %v297 = vld [vmem:[%s4 + $0x128] sm:$0xf]
  %v298 = vld [vmem:[%s4 + $0x12c] sm:$0xff]
  %v299 = vld [vmem:[%s4 + $0x134] sm:$0xf]
  %v300 = vld [vmem:[%s4 + $0x138] sm:$0xff]
  %v301 = vld [vmem:[%s4 + $0x140] sm:$0xf]
  %v302 = vld [vmem:[%s4 + $0x144] sm:$0xff]
  %v303 = vld [vmem:[%s4 + $0x14c] sm:$0xf]
  %v304 = vld [vmem:[%s4 + $0x150] sm:$0xff]
  %v305 = vld [vmem:[%s4 + $0x158] sm:$0xf]
  %v306 = vld [vmem:[%s4 + $0x15c] sm:$0xff]
  %v307 = vld [vmem:[%s4 + $0x164] sm:$0xf]
  %v308 = vld [vmem:[%s4 + $0x168] sm:$0xff]
  %v309 = vld [vmem:[%s4 + $0x170] sm:$0xf]
  %v310 = vld [vmem:[%s4 + $0x174] sm:$0xff]
  %v311 = vld [vmem:[%s4 + $0x17c] sm:$0xf]
  %v312 = vld [vmem:[%s4 + $0x180] sm:$0xff]
  %v313 = vld [vmem:[%s4 + $0x188] sm:$0xf]
  %v314 = vld [vmem:[%s4 + $0x18c] sm:$0xff]
  %v315 = vld [vmem:[%s4 + $0x194] sm:$0xf]
  %v316 = vld [vmem:[%s4 + $0x198] sm:$0xff]
  %v317 = vld [vmem:[%s4 + $0x1a0] sm:$0xf]
  %v318 = vld [vmem:[%s4 + $0x1a4] sm:$0xff]
  %v319 = vld [vmem:[%s4 + $0x1ac] sm:$0xf]
  %v320 = vld [vmem:[%s5] sm:$0x7]
  %v322 = vperm.slane %v320, 0
  %v323 = vperm.slane %v320, 1
  %v324 = vperm.slane %v320, 2
  %v400 = vunpack.c.l.b16 %v248
  %v401 = vunpack.c.h.b16 %v248
  %v402 = vunpack.c.l.b16 %v249
  %v403 = vunpack.c.l.b16 %v250
  %v404 = vunpack.c.h.b16 %v250
  %v405 = vunpack.c.l.b16 %v251
  %v406 = vunpack.c.l.b16 %v252
  %v407 = vunpack.c.h.b16 %v252
  %v408 = vunpack.c.l.b16 %v253
  %v409 = vunpack.c.l.b16 %v254
  %v410 = vunpack.c.h.b16 %v254
  %v411 = vunpack.c.l.b16 %v255
  %v412 = vunpack.c.l.b16 %v256
  %v413 = vunpack.c.h.b16 %v256
  %v414 = vunpack.c.l.b16 %v257
  %v415 = vunpack.c.l.b16 %v258
  %v416 = vunpack.c.h.b16 %v258
  %v417 = vunpack.c.l.b16 %v259
  %v418 = vunpack.c.l.b16 %v260
  %v419 = vunpack.c.h.b16 %v260
  %v420 = vunpack.c.l.b16 %v261
  %v421 = vunpack.c.l.b16 %v262
  %v422 = vunpack.c.h.b16 %v262
  %v423 = vunpack.c.l.b16 %v263
  %v424 = vunpack.c.l.b16 %v264
  %v425 = vunpack.c.h.b16 %v264
  %v426 = vunpack.c.l.b16 %v265
  %v427 = vunpack.c.l.b16 %v266
  %v428 = vunpack.c.h.b16 %v266
  %v429 = vunpack.c.l.b16 %v267
  %v430 = vunpack.c.l.b16 %v268
  %v431 = vunpack.c.h.b16 %v268
  %v432 = vunpack.c.l.b16 %v269
  %v433 = vunpack.c.l.b16 %v270
  %v434 = vunpack.c.h.b16 %v270
  %v435 = vunpack.c.l.b16 %v271
  %v436 = vunpack.c.l.b16 %v272
  %v437 = vunpack.c.h.b16 %v272
  %v438 = vunpack.c.l.b16 %v273
  %v439 = vunpack.c.l.b16 %v274
  %v440 = vunpack.c.h.b16 %v274
  %v441 = vunpack.c.l.b16 %v275
  %v442 = vunpack.c.l.b16 %v276
  %v443 = vunpack.c.h.b16 %v276
  %v444 = vunpack.c.l.b16 %v277
  %v445 = vunpack.c.l.b16 %v278
  %v446 = vunpack.c.h.b16 %v278
  %v447 = vunpack.c.l.b16 %v279
  %v448 = vunpack.c.l.b16 %v280
  %v449 = vunpack.c.h.b16 %v280
  %v450 = vunpack.c.l.b16 %v281
  %v451 = vunpack.c.l.b16 %v282
  %v452 = vunpack.c.h.b16 %v282
  %v453 = vunpack.c.l.b16 %v283
  %v454 = vunpack.c.l.b16 %v284
  %v455 = vunpack.c.h.b16 %v284
  %v456 = vunpack.c.l.b16 %v285
  %v457 = vunpack.c.l.b16 %v286
  %v458 = vunpack.c.h.b16 %v286
  %v459 = vunpack.c.l.b16 %v287
  %v460 = vunpack.c.l.b16 %v288
  %v461 = vunpack.c.h.b16 %v288
  %v462 = vunpack.c.l.b16 %v289
  %v463 = vunpack.c.l.b16 %v290
  %v464 = vunpack.c.h.b16 %v290
  %v465 = vunpack.c.l.b16 %v291
  %v466 = vunpack.c.l.b16 %v292
  %v467 = vunpack.c.h.b16 %v292
  %v468 = vunpack.c.l.b16 %v293
  %v469 = vunpack.c.l.b16 %v294
  %v470 = vunpack.c.h.b16 %v294
  %v471 = vunpack.c.l.b16 %v295
  %v472 = vunpack.c.l.b16 %v296
  %v473 = vunpack.c.h.b16 %v296
  %v474 = vunpack.c.l.b16 %v297
  %v475 = vunpack.c.l.b16 %v298
  %v476 = vunpack.c.h.b16 %v298
  %v477 = vunpack.c.l.b16 %v299
  %v478 = vunpack.c.l.b16 %v300
  %v479 = vunpack.c.h.b16 %v300
  %v480 = vunpack.c.l.b16 %v301
  %v481 = vunpack.c.l.b16 %v302
  %v482 = vunpack.c.h.b16 %v302
  %v483 = vunpack.c.l.b16 %v303
  %v484 = vunpack.c.l.b16 %v304
  %v485 = vunpack.c.h.b16 %v304
  %v486 = vunpack.c.l.b16 %v305
  %v487 = vunpack.c.l.b16 %v306
  %v488 = vunpack.c.h.b16 %v306
  %v489 = vunpack.c.l.b16 %v307
  %v490 = vunpack.c.l.b16 %v308
  %v491 = vunpack.c.h.b16 %v308
  %v492 = vunpack.c.l.b16 %v309
  %v493 = vunpack.c.l.b16 %v310
  %v494 = vunpack.c.h.b16 %v310
  %v495 = vunpack.c.l.b16 %v311
  %v496 = vunpack.c.l.b16 %v312
  %v497 = vunpack.c.h.b16 %v312
  %v498 = vunpack.c.l.b16 %v313
  %v499 = vunpack.c.l.b16 %v314
  %v500 = vunpack.c.h.b16 %v314
  %v501 = vunpack.c.l.b16 %v315
  %v502 = vunpack.c.l.b16 %v316
  %v503 = vunpack.c.h.b16 %v316
  %v504 = vunpack.c.l.b16 %v317
  %v505 = vunpack.c.l.b16 %v318
  %v506 = vunpack.c.h.b16 %v318
  %v507 = vunpack.c.l.b16 %v319
  %v508 = vpack.c.b16 %v403, %v400
  %v509 = vpack.c.b16 %v404, %v401
  %v510 = vpack.c.b16 %v405, %v402
  %v511 = vpack.c.b16 %v409, %v406
  %v512 = vpack.c.b16 %v410, %v407
  %v513 = vpack.c.b16 %v411, %v408
  %v514 = vpack.c.b16 %v415, %v412
  %v515 = vpack.c.b16 %v416, %v413
  %v516 = vpack.c.b16 %v417, %v414
  %v517 = vpack.c.b16 %v421, %v418
  %v518 = vpack.c.b16 %v422, %v419
  %v519 = vpack.c.b16 %v423, %v420
  %v520 = vpack.c.b16 %v427, %v424
  %v521 = vpack.c.b16 %v428, %v425
  %v522 = vpack.c.b16 %v429, %v426
  %v523 = vpack.c.b16 %v433, %v430
  %v524 = vpack.c.b16 %v434, %v431
  %v525 = vpack.c.b16 %v435, %v432
  %v526 = vpack.c.b16 %v439, %v436
  %v527 = vpack.c.b16 %v440, %v437
  %v528 = vpack.c.b16 %v441, %v438
  %v529 = vpack.c.b16 %v445, %v442
  %v530 = vpack.c.b16 %v446, %v443
  %v531 = vpack.c.b16 %v447, %v444
  %v532 = vpack.c.b16 %v451, %v448
  %v533 = vpack.c.b16 %v452, %v449
  %v534 = vpack.c.b16 %v453, %v450
  %v535 = vpack.c.b16 %v457, %v454
  %v536 = vpack.c.b16 %v458, %v455
  %v537 = vpack.c.b16 %v459, %v456
  %v538 = vpack.c.b16 %v463, %v460
  %v539 = vpack.c.b16 %v464, %v461
  %v540 = vpack.c.b16 %v465, %v462
  %v541 = vpack.c.b16 %v469, %v466
  %v542 = vpack.c.b16 %v470, %v467
  %v543 = vpack.c.b16 %v471, %v468
  %v544 = vpack.c.b16 %v475, %v472
  %v545 = vpack.c.b16 %v476, %v473
  %v546 = vpack.c.b16 %v477, %v474
  %v547 = vpack.c.b16 %v481, %v478
  %v548 = vpack.c.b16 %v482, %v479
  %v549 = vpack.c.b16 %v483, %v480
  %v550 = vpack.c.b16 %v487, %v484
  %v551 = vpack.c.b16 %v488, %v485
  %v552 = vpack.c.b16 %v489, %v486
  %v553 = vpack.c.b16 %v493, %v490
  %v554 = vpack.c.b16 %v494, %v491
  %v555 = vpack.c.b16 %v495, %v492
  %v556 = vpack.c.b16 %v499, %v496
  %v557 = vpack.c.b16 %v500, %v497
  %v558 = vpack.c.b16 %v501, %v498
  %v559 = vpack.c.b16 %v505, %v502
  %v560 = vpack.c.b16 %v506, %v503
  %v561 = vpack.c.b16 %v507, %v504
  %v617 = vsel %vm69, %v244, 0
  %v620 = vsel %vm69, %v247, 0
  %622 = vmatpush.bf16.msra.mxu0 %v529
  %623 = vmatpush.bf16.msra.mxu0 %v526
  %624 = vmatpush.bf16.msra.mxu0 %v523
  %625 = vmatpush.bf16.msra.mxu0 %v520
  %626 = vmatpush.bf16.msra.mxu0 %v517
  %627 = vmatpush.bf16.msra.mxu0 %v514
  %628 = vmatpush.bf16.msra.mxu0 %v511
  %629 = vmatpush.bf16.msra.mxu0 %v508
  %630 = vmatmul.bf16.gmra.mxu0 %v242
  %v631 = vpop.f32.mrf.mxu0
  %v632 = vadd.f32 %v322, %v631
  %v633 = vpop.f32.mrf.mxu0
  %v634 = vadd.f32 %v322, %v633
  %635 = vmatmul.bf16.gmra.mxu0 %v245
  %v636 = vpop.f32.mrf.mxu0
  %v637 = vadd.f32 %v322, %v636
  %v638 = vpop.f32.mrf.mxu0
  %v639 = vadd.f32 %v322, %v638
  %640 = vdwg.mxu0
  %641 = vmatpush.bf16.msra.mxu0 %v553
  %642 = vmatpush.bf16.msra.mxu0 %v550
  %643 = vmatpush.bf16.msra.mxu0 %v547
  %644 = vmatpush.bf16.msra.mxu0 %v544
  %645 = vmatpush.bf16.msra.mxu0 %v541
  %646 = vmatpush.bf16.msra.mxu0 %v538
  %647 = vmatpush.bf16.msra.mxu0 %v535
  %648 = vmatpush.bf16.msra.mxu0 %v532
  %649 = vmatmul.bf16.gmra.mxu0 %v243
  %v650 = vpop.f32.mrf.mxu0
  %v651 = vadd.f32 %v632, %v650
  %v652 = vpop.f32.mrf.mxu0
  %v653 = vadd.f32 %v634, %v652
  %654 = vmatmul.bf16.gmra.mxu0 %v246
  %v655 = vpop.f32.mrf.mxu0
  %v656 = vadd.f32 %v637, %v655
  %v657 = vpop.f32.mrf.mxu0
  %v658 = vadd.f32 %v639, %v657
  %659 = vdwg.mxu0
  %660 = vmatpush.bf16.msra.mxu0 0
  %661 = vmatpush.bf16.msra.mxu0 0
  %662 = vmatpush.bf16.msra.mxu0 0
  %663 = vmatpush.bf16.msra.mxu0 0
  %664 = vmatpush.bf16.msra.mxu0 0
  %665 = vmatpush.bf16.msra.mxu0 0
  %666 = vmatpush.bf16.msra.mxu0 %v559
  %667 = vmatpush.bf16.msra.mxu0 %v556
  %668 = vmatmul.bf16.gmra.mxu0 %v617
  %v669 = vpop.f32.mrf.mxu0
  %v670 = vadd.f32 %v651, %v669
  %v671 = vpop.f32.mrf.mxu0
  %v672 = vadd.f32 %v653, %v671
  %673 = vmatmul.bf16.gmra.mxu0 %v620
  %v674 = vpop.f32.mrf.mxu0
  %v675 = vadd.f32 %v656, %v674
  %v676 = vpop.f32.mrf.mxu0
  %v677 = vadd.f32 %v658, %v676
  %678 = vdwg.mxu0
  %679 = vmatpush.bf16.msra.mxu0 %v530
  %680 = vmatpush.bf16.msra.mxu0 %v527
  %681 = vmatpush.bf16.msra.mxu0 %v524
  %682 = vmatpush.bf16.msra.mxu0 %v521
  %683 = vmatpush.bf16.msra.mxu0 %v518
  %684 = vmatpush.bf16.msra.mxu0 %v515
  %685 = vmatpush.bf16.msra.mxu0 %v512
  %686 = vmatpush.bf16.msra.mxu0 %v509
  %687 = vmatmul.bf16.gmra.mxu0 %v242
  %v688 = vpop.f32.mrf.mxu0
  %v689 = vadd.f32 %v323, %v688
  %v690 = vpop.f32.mrf.mxu0
  %v691 = vadd.f32 %v323, %v690
  %692 = vmatmul.bf16.gmra.mxu0 %v245
  %v693 = vpop.f32.mrf.mxu0
  %v694 = vadd.f32 %v323, %v693
  %v695 = vpop.f32.mrf.mxu0
  %v696 = vadd.f32 %v323, %v695
  %697 = vdwg.mxu0
  %698 = vmatpush.bf16.msra.mxu0 %v554
  %699 = vmatpush.bf16.msra.mxu0 %v551
  %700 = vmatpush.bf16.msra.mxu0 %v548
  %701 = vmatpush.bf16.msra.mxu0 %v545
  %702 = vmatpush.bf16.msra.mxu0 %v542
  %703 = vmatpush.bf16.msra.mxu0 %v539
  %704 = vmatpush.bf16.msra.mxu0 %v536
  %705 = vmatpush.bf16.msra.mxu0 %v533
  %706 = vmatmul.bf16.gmra.mxu0 %v243
  %v707 = vpop.f32.mrf.mxu0
  %v708 = vadd.f32 %v689, %v707
  %v709 = vpop.f32.mrf.mxu0
  %v710 = vadd.f32 %v691, %v709
  %711 = vmatmul.bf16.gmra.mxu0 %v246
  %v712 = vpop.f32.mrf.mxu0
  %v713 = vadd.f32 %v694, %v712
  %v714 = vpop.f32.mrf.mxu0
  %v715 = vadd.f32 %v696, %v714
  %716 = vdwg.mxu0
  %717 = vmatpush.bf16.msra.mxu0 0
  %718 = vmatpush.bf16.msra.mxu0 0
  %719 = vmatpush.bf16.msra.mxu0 0
  %720 = vmatpush.bf16.msra.mxu0 0
  %721 = vmatpush.bf16.msra.mxu0 0
  %722 = vmatpush.bf16.msra.mxu0 0
  %723 = vmatpush.bf16.msra.mxu0 %v560
  %724 = vmatpush.bf16.msra.mxu0 %v557
  %725 = vmatmul.bf16.gmra.mxu0 %v617
  %v726 = vpop.f32.mrf.mxu0
  %v727 = vadd.f32 %v708, %v726
  %v728 = vpop.f32.mrf.mxu0
  %v729 = vadd.f32 %v710, %v728
  %730 = vmatmul.bf16.gmra.mxu0 %v620
  %v731 = vpop.f32.mrf.mxu0
  %v732 = vadd.f32 %v713, %v731
  %v733 = vpop.f32.mrf.mxu0
  %v734 = vadd.f32 %v715, %v733
  %735 = vdwg.mxu0
  %736 = vmatpush.bf16.msra.mxu0 %v531
  %737 = vmatpush.bf16.msra.mxu0 %v528
  %738 = vmatpush.bf16.msra.mxu0 %v525
  %739 = vmatpush.bf16.msra.mxu0 %v522
  %740 = vmatpush.bf16.msra.mxu0 %v519
  %741 = vmatpush.bf16.msra.mxu0 %v516
  %742 = vmatpush.bf16.msra.mxu0 %v513
  %743 = vmatpush.bf16.msra.mxu0 %v510
  %744 = vmatmul.bf16.gmra.mxu0 %v242
  %v745 = vpop.f32.mrf.mxu0
  %v746 = vadd.f32 %v324, %v745
  %v747 = vpop.f32.mrf.mxu0
  %v748 = vadd.f32 %v324, %v747
  %749 = vmatmul.bf16.gmra.mxu0 %v245
  %v750 = vpop.f32.mrf.mxu0
  %v751 = vadd.f32 %v324, %v750
  %v752 = vpop.f32.mrf.mxu0
  %v753 = vadd.f32 %v324, %v752
  %754 = vdwg.mxu0
  %755 = vmatpush.bf16.msra.mxu0 %v555
  %756 = vmatpush.bf16.msra.mxu0 %v552
  %757 = vmatpush.bf16.msra.mxu0 %v549
  %758 = vmatpush.bf16.msra.mxu0 %v546
  %759 = vmatpush.bf16.msra.mxu0 %v543
  %760 = vmatpush.bf16.msra.mxu0 %v540
  %761 = vmatpush.bf16.msra.mxu0 %v537
  %762 = vmatpush.bf16.msra.mxu0 %v534
  %763 = vmatmul.bf16.gmra.mxu0 %v243
  %v764 = vpop.f32.mrf.mxu0
  %v765 = vadd.f32 %v746, %v764
  %v766 = vpop.f32.mrf.mxu0
  %v767 = vadd.f32 %v748, %v766
  %768 = vmatmul.bf16.gmra.mxu0 %v246
  %v769 = vpop.f32.mrf.mxu0
  %v770 = vadd.f32 %v751, %v769
  %v771 = vpop.f32.mrf.mxu0
  %v772 = vadd.f32 %v753, %v771
  %773 = vdwg.mxu0
  %774 = vmatpush.bf16.msra.mxu0 0
  %775 = vmatpush.bf16.msra.mxu0 0
  %776 = vmatpush.bf16.msra.mxu0 0
  %777 = vmatpush.bf16.msra.mxu0 0
  %778 = vmatpush.bf16.msra.mxu0 0
  %779 = vmatpush.bf16.msra.mxu0 0
  %780 = vmatpush.bf16.msra.mxu0 %v561
  %781 = vmatpush.bf16.msra.mxu0 %v558
  %782 = vmatmul.bf16.gmra.mxu0 %v617
  %v783 = vpop.f32.mrf.mxu0
  %v784 = vadd.f32 %v765, %v783
  %v785 = vpop.f32.mrf.mxu0
  %v786 = vadd.f32 %v767, %v785
  %787 = vmatmul.bf16.gmra.mxu0 %v620
  %v788 = vpop.f32.mrf.mxu0
  %v789 = vadd.f32 %v770, %v788
  %v790 = vpop.f32.mrf.mxu0
  %v791 = vadd.f32 %v772, %v790
  %792 = vdwg.mxu0
  %v793 = vadd.f32 %v230, %v670
  %v794 = vadd.f32 %v231, %v727
  %v795 = vadd.f32 %v232, %v784
  %v796 = vadd.f32 %v233, %v672
  %v797 = vadd.f32 %v234, %v729
  %v798 = vadd.f32 %v235, %v786
  %v799 = vadd.f32 %v236, %v675
  %v800 = vadd.f32 %v237, %v732
  %v801 = vadd.f32 %v238, %v789
  %v802 = vadd.f32 %v239, %v677
  %v803 = vadd.f32 %v240, %v734
  %v804 = vadd.f32 %v241, %v791
  %v805 = vld [vmem:[%s6] sm:$0x7]
  %v806 = vld [vmem:[%s7] sm:$0x7]
  %v807 = vadd.f32 %v793, %v794
  %v808 = vsel %vm69, %v795, 0.0
  %v809 = vadd.f32 %v807, %v808
  %810 = vadd.xlane.f32.xlu0 %v809
  %v811 = vpop.xlane.xlu0 %810
  %v812 = vadd.f32 %v796, %v797
  %v813 = vsel %vm69, %v798, 0.0
  %v814 = vadd.f32 %v812, %v813
  %815 = vadd.xlane.f32.xlu0 %v814
  %v816 = vpop.xlane.xlu0 %815
  %v817 = vadd.f32 %v799, %v800
  %v818 = vsel %vm69, %v801, 0.0
  %v819 = vadd.f32 %v817, %v818
  %820 = vadd.xlane.f32.xlu0 %v819
  %v821 = vpop.xlane.xlu0 %820
  %v822 = vadd.f32 %v802, %v803
  %v823 = vsel %vm69, %v804, 0.0
  %v824 = vadd.f32 %v822, %v823
  %825 = vadd.xlane.f32.xlu0 %v824
  %v826 = vpop.xlane.xlu0 %825
  %v827 = vmul.f32 %v811, %v95
  %v828 = vmul.f32 %v816, %v95
  %v829 = vmul.f32 %v821, %v95
  %v830 = vmul.f32 %v826, %v95
  %v831 = vsub.f32 %v793, %v827
  %v832 = vsub.f32 %v794, %v827
  %v833 = vsub.f32 %v795, %v827
  %v834 = vsub.f32 %v796, %v828
  %v835 = vsub.f32 %v797, %v828
  %v836 = vsub.f32 %v798, %v828
  %v837 = vsub.f32 %v799, %v829
  %v838 = vsub.f32 %v800, %v829
  %v839 = vsub.f32 %v801, %v829
  %v840 = vsub.f32 %v802, %v830
  %v841 = vsub.f32 %v803, %v830
  %v842 = vsub.f32 %v804, %v830
  %v843 = vmul.f32 %v831, %v831
  %v844 = vmul.f32 %v832, %v832
  %v845 = vmul.f32 %v833, %v833
  %v846 = vmul.f32 %v834, %v834
  %v847 = vmul.f32 %v835, %v835
  %v848 = vmul.f32 %v836, %v836
  %v849 = vmul.f32 %v837, %v837
  %v850 = vmul.f32 %v838, %v838
  %v851 = vmul.f32 %v839, %v839
  %v852 = vmul.f32 %v840, %v840
  %v853 = vmul.f32 %v841, %v841
  %v854 = vmul.f32 %v842, %v842
  %v855 = vadd.f32 %v843, %v844
  %v856 = vsel %vm69, %v845, 0.0
  %v857 = vadd.f32 %v855, %v856
  %858 = vadd.xlane.f32.xlu0 %v857
  %v859 = vpop.xlane.xlu0 %858
  %v860 = vadd.f32 %v846, %v847
  %v861 = vsel %vm69, %v848, 0.0
  %v862 = vadd.f32 %v860, %v861
  %863 = vadd.xlane.f32.xlu0 %v862
  %v864 = vpop.xlane.xlu0 %863
  %v865 = vadd.f32 %v849, %v850
  %v866 = vsel %vm69, %v851, 0.0
  %v867 = vadd.f32 %v865, %v866
  %868 = vadd.xlane.f32.xlu0 %v867
  %v869 = vpop.xlane.xlu0 %868
  %v870 = vadd.f32 %v852, %v853
  %v871 = vsel %vm69, %v854, 0.0
  %v872 = vadd.f32 %v870, %v871
  %873 = vadd.xlane.f32.xlu0 %v872
  %v874 = vpop.xlane.xlu0 %873
  %v875 = vmul.f32 %v859, %v95
  %v876 = vmul.f32 %v864, %v95
  %v877 = vmul.f32 %v869, %v95
  %v878 = vmul.f32 %v874, %v95
  %v879 = vadd.f32 %v875, 1e-05
  %v880 = vadd.f32 %v876, 1e-05
  %v881 = vadd.f32 %v877, 1e-05
  %v882 = vadd.f32 %v878, 1e-05
  %v883 = vrsqrt.pop %v879
  %v884 = vmul.f32 %v883, %v879
  %v885 = vmul.f32 %v884, %v883
  %v886 = vmul.f32 0.5, %v885
  %v887 = vsub.f32 1.5, %v886
  %v888 = vmul.f32 %v883, %v887
  %vm889 = vweird.f32 %v879
  %vm890 = vweird.f32 %v883
  %vm891 = vmor %vm889, %vm890
  %v892 = vsel %vm891, %v883, %v888
  %v893 = vrsqrt.pop %v880
  %v894 = vmul.f32 %v893, %v880
  %v895 = vmul.f32 %v894, %v893
  %v896 = vmul.f32 0.5, %v895
  %v897 = vsub.f32 1.5, %v896
  %v898 = vmul.f32 %v893, %v897
  %vm899 = vweird.f32 %v880
  %vm900 = vweird.f32 %v893
  %vm901 = vmor %vm899, %vm900
  %v902 = vsel %vm901, %v893, %v898
  %v903 = vrsqrt.pop %v881
  %v904 = vmul.f32 %v903, %v881
  %v905 = vmul.f32 %v904, %v903
  %v906 = vmul.f32 0.5, %v905
  %v907 = vsub.f32 1.5, %v906
  %v908 = vmul.f32 %v903, %v907
  %vm909 = vweird.f32 %v881
  %vm910 = vweird.f32 %v903
  %vm911 = vmor %vm909, %vm910
  %v912 = vsel %vm911, %v903, %v908
  %v913 = vrsqrt.pop %v882
  %v914 = vmul.f32 %v913, %v882
  %v915 = vmul.f32 %v914, %v913
  %v916 = vmul.f32 0.5, %v915
  %v917 = vsub.f32 1.5, %v916
  %v918 = vmul.f32 %v913, %v917
  %vm919 = vweird.f32 %v882
  %vm920 = vweird.f32 %v913
  %vm921 = vmor %vm919, %vm920
  %v922 = vsel %vm921, %v913, %v918
  %v923 = vmul.f32 %v831, %v892
  %v924 = vmul.f32 %v832, %v892
  %v925 = vmul.f32 %v833, %v892
  %v926 = vmul.f32 %v834, %v902
  %v927 = vmul.f32 %v835, %v902
  %v928 = vmul.f32 %v836, %v902
  %v929 = vmul.f32 %v837, %v912
  %v930 = vmul.f32 %v838, %v912
  %v931 = vmul.f32 %v839, %v912
  %v932 = vmul.f32 %v840, %v922
  %v933 = vmul.f32 %v841, %v922
  %v934 = vmul.f32 %v842, %v922
  %v936 = vperm.slane %v805, 0
  %v937 = vperm.slane %v805, 1
  %v938 = vperm.slane %v805, 2
  %v942 = vmul.f32 %v923, %v936
  %v943 = vmul.f32 %v924, %v937
  %v944 = vmul.f32 %v925, %v938
  %v945 = vmul.f32 %v926, %v936
  %v946 = vmul.f32 %v927, %v937
  %v947 = vmul.f32 %v928, %v938
  %v948 = vmul.f32 %v929, %v936
  %v949 = vmul.f32 %v930, %v937
  %v950 = vmul.f32 %v931, %v938
  %v951 = vmul.f32 %v932, %v936
  %v952 = vmul.f32 %v933, %v937
  %v953 = vmul.f32 %v934, %v938
  %v955 = vperm.slane %v806, 0
  %v956 = vperm.slane %v806, 1
  %v957 = vperm.slane %v806, 2
  %v961 = vadd.f32 %v942, %v955
  %v962 = vadd.f32 %v943, %v956
  %v963 = vadd.f32 %v944, %v957
  %v964 = vadd.f32 %v945, %v955
  %v965 = vadd.f32 %v946, %v956
  %v966 = vadd.f32 %v947, %v957
  %v967 = vadd.f32 %v948, %v955
  %v968 = vadd.f32 %v949, %v956
  %v969 = vadd.f32 %v950, %v957
  %v970 = vadd.f32 %v951, %v955
  %v971 = vadd.f32 %v952, %v956
  %v972 = vadd.f32 %v953, %v957
  %v973 = vpack.c.bf16 %v964, %v961
  %v974 = vpack.c.bf16 %v965, %v962
  %v975 = vpack.c.bf16 %v966, %v963
  %v976 = vpack.c.bf16 %v970, %v967
  %v977 = vpack.c.bf16 %v971, %v968
  %v978 = vpack.c.bf16 %v972, %v969
  %v979 = vld [vmem:[%s8] sm:$0xf]
  %v980 = vld [vmem:[%s8 + $0x4] sm:$0xf]
  %v981 = vld [vmem:[%s8 + $0x8] sm:$0xf]
  %v982 = vld [vmem:[%s8 + $0xc] sm:$0xf]
  %v983 = vld [vmem:[%s8 + $0x10] sm:$0xf]
  %v984 = vld [vmem:[%s8 + $0x14] sm:$0xf]
  %v985 = vld [vmem:[%s8 + $0x18] sm:$0xf]
  %v986 = vld [vmem:[%s8 + $0x1c] sm:$0xf]
  %v987 = vld [vmem:[%s8 + $0x20] sm:$0xf]
  %v988 = vld [vmem:[%s8 + $0x24] sm:$0xf]
  %v989 = vld [vmem:[%s8 + $0x28] sm:$0xf]
  %v990 = vld [vmem:[%s8 + $0x2c] sm:$0xf]
  %v991 = vld [vmem:[%s8 + $0x30] sm:$0xf]
  %v992 = vld [vmem:[%s8 + $0x34] sm:$0xf]
  %v993 = vld [vmem:[%s8 + $0x38] sm:$0xf]
  %v994 = vld [vmem:[%s8 + $0x3c] sm:$0xf]
  %v995 = vld [vmem:[%s8 + $0x40] sm:$0xf]
  %v996 = vld [vmem:[%s8 + $0x44] sm:$0xf]
  %v997 = vld [vmem:[%s8 + $0x48] sm:$0xf]
  %v998 = vld [vmem:[%s8 + $0x4c] sm:$0xf]
  %v999 = vld [vmem:[%s8 + $0x50] sm:$0xf]
  %v1000 = vld [vmem:[%s8 + $0x54] sm:$0xf]
  %v1001 = vld [vmem:[%s8 + $0x58] sm:$0xf]
  %v1002 = vld [vmem:[%s8 + $0x5c] sm:$0xf]
  %v1003 = vld [vmem:[%s8 + $0x60] sm:$0xf]
  %v1004 = vld [vmem:[%s8 + $0x64] sm:$0xf]
  %v1005 = vld [vmem:[%s8 + $0x68] sm:$0xf]
  %v1006 = vld [vmem:[%s8 + $0x6c] sm:$0xf]
  %v1007 = vld [vmem:[%s8 + $0x70] sm:$0xf]
  %v1008 = vld [vmem:[%s8 + $0x74] sm:$0xf]
  %v1009 = vld [vmem:[%s8 + $0x78] sm:$0xf]
  %v1010 = vld [vmem:[%s8 + $0x7c] sm:$0xf]
  %v1011 = vld [vmem:[%s8 + $0x80] sm:$0xf]
  %v1012 = vld [vmem:[%s8 + $0x84] sm:$0xf]
  %v1013 = vld [vmem:[%s8 + $0x88] sm:$0xf]
  %v1014 = vld [vmem:[%s8 + $0x8c] sm:$0xf]
  %v1051 = vunpack.c.l.b16 %v979
  %v1052 = vunpack.c.l.b16 %v980
  %v1053 = vunpack.c.l.b16 %v981
  %v1054 = vunpack.c.l.b16 %v982
  %v1055 = vunpack.c.l.b16 %v983
  %v1056 = vunpack.c.l.b16 %v984
  %v1057 = vunpack.c.l.b16 %v985
  %v1058 = vunpack.c.l.b16 %v986
  %v1059 = vunpack.c.l.b16 %v987
  %v1060 = vunpack.c.l.b16 %v988
  %v1061 = vunpack.c.l.b16 %v989
  %v1062 = vunpack.c.l.b16 %v990
  %v1063 = vunpack.c.l.b16 %v991
  %v1064 = vunpack.c.l.b16 %v992
  %v1065 = vunpack.c.l.b16 %v993
  %v1066 = vunpack.c.l.b16 %v994
  %v1067 = vunpack.c.l.b16 %v995
  %v1068 = vunpack.c.l.b16 %v996
  %v1069 = vunpack.c.l.b16 %v997
  %v1070 = vunpack.c.l.b16 %v998
  %v1071 = vunpack.c.l.b16 %v999
  %v1072 = vunpack.c.l.b16 %v1000
  %v1073 = vunpack.c.l.b16 %v1001
  %v1074 = vunpack.c.l.b16 %v1002
  %v1075 = vunpack.c.l.b16 %v1003
  %v1076 = vunpack.c.l.b16 %v1004
  %v1077 = vunpack.c.l.b16 %v1005
  %v1078 = vunpack.c.l.b16 %v1006
  %v1079 = vunpack.c.l.b16 %v1007
  %v1080 = vunpack.c.l.b16 %v1008
  %v1081 = vunpack.c.l.b16 %v1009
  %v1082 = vunpack.c.l.b16 %v1010
  %v1083 = vunpack.c.l.b16 %v1011
  %v1084 = vunpack.c.l.b16 %v1012
  %v1085 = vunpack.c.l.b16 %v1013
  %v1086 = vunpack.c.l.b16 %v1014
  %v1087 = vpack.c.b16 %v1052, %v1051
  %v1088 = vpack.c.b16 %v1054, %v1053
  %v1089 = vpack.c.b16 %v1056, %v1055
  %v1090 = vpack.c.b16 %v1058, %v1057
  %v1091 = vpack.c.b16 %v1060, %v1059
  %v1092 = vpack.c.b16 %v1062, %v1061
  %v1093 = vpack.c.b16 %v1064, %v1063
  %v1094 = vpack.c.b16 %v1066, %v1065
  %v1095 = vpack.c.b16 %v1068, %v1067
  %v1096 = vpack.c.b16 %v1070, %v1069
  %v1097 = vpack.c.b16 %v1072, %v1071
  %v1098 = vpack.c.b16 %v1074, %v1073
  %v1099 = vpack.c.b16 %v1076, %v1075
  %v1100 = vpack.c.b16 %v1078, %v1077
  %v1101 = vpack.c.b16 %v1080, %v1079
  %v1102 = vpack.c.b16 %v1082, %v1081
  %v1103 = vpack.c.b16 %v1084, %v1083
  %v1104 = vpack.c.b16 %v1086, %v1085
  %v1124 = vsel %vm69, %v975, 0
  %v1127 = vsel %vm69, %v978, 0
  %1129 = vmatpush.bf16.msra.mxu0 %v1094
  %1130 = vmatpush.bf16.msra.mxu0 %v1093
  %1131 = vmatpush.bf16.msra.mxu0 %v1092
  %1132 = vmatpush.bf16.msra.mxu0 %v1091
  %1133 = vmatpush.bf16.msra.mxu0 %v1090
  %1134 = vmatpush.bf16.msra.mxu0 %v1089
  %1135 = vmatpush.bf16.msra.mxu0 %v1088
  %1136 = vmatpush.bf16.msra.mxu0 %v1087
  %1137 = vmatmul.bf16.gmra.mxu0 %v973
  %v1138 = vpop.f32.mrf.mxu0
  %v1139 = vadd.f32 0.0, %v1138
  %v1140 = vpop.f32.mrf.mxu0
  %v1141 = vadd.f32 0.0, %v1140
  %1142 = vmatmul.bf16.gmra.mxu0 %v976
  %v1143 = vpop.f32.mrf.mxu0
  %v1144 = vadd.f32 0.0, %v1143
  %v1145 = vpop.f32.mrf.mxu0
  %v1146 = vadd.f32 0.0, %v1145
  %1147 = vdwg.mxu0
  %1148 = vmatpush.bf16.msra.mxu0 %v1102
  %1149 = vmatpush.bf16.msra.mxu0 %v1101
  %1150 = vmatpush.bf16.msra.mxu0 %v1100
  %1151 = vmatpush.bf16.msra.mxu0 %v1099
  %1152 = vmatpush.bf16.msra.mxu0 %v1098
  %1153 = vmatpush.bf16.msra.mxu0 %v1097
  %1154 = vmatpush.bf16.msra.mxu0 %v1096
  %1155 = vmatpush.bf16.msra.mxu0 %v1095
  %1156 = vmatmul.bf16.gmra.mxu0 %v974
  %v1157 = vpop.f32.mrf.mxu0
  %v1158 = vadd.f32 %v1139, %v1157
  %v1159 = vpop.f32.mrf.mxu0
  %v1160 = vadd.f32 %v1141, %v1159
  %1161 = vmatmul.bf16.gmra.mxu0 %v977
  %v1162 = vpop.f32.mrf.mxu0
  %v1163 = vadd.f32 %v1144, %v1162
  %v1164 = vpop.f32.mrf.mxu0
  %v1165 = vadd.f32 %v1146, %v1164
  %1166 = vdwg.mxu0
  %1167 = vmatpush.bf16.msra.mxu0 0
  %1168 = vmatpush.bf16.msra.mxu0 0
  %1169 = vmatpush.bf16.msra.mxu0 0
  %1170 = vmatpush.bf16.msra.mxu0 0
  %1171 = vmatpush.bf16.msra.mxu0 0
  %1172 = vmatpush.bf16.msra.mxu0 0
  %1173 = vmatpush.bf16.msra.mxu0 %v1104
  %1174 = vmatpush.bf16.msra.mxu0 %v1103
  %1175 = vmatmul.bf16.gmra.mxu0 %v1124
  %v1176 = vpop.f32.mrf.mxu0
  %v1177 = vadd.f32 %v1158, %v1176
  %v1178 = vpop.f32.mrf.mxu0
  %v1179 = vadd.f32 %v1160, %v1178
  %1180 = vmatmul.bf16.gmra.mxu0 %v1127
  %v1181 = vpop.f32.mrf.mxu0
  %v1182 = vadd.f32 %v1163, %v1181
  %v1183 = vpop.f32.mrf.mxu0
  %v1184 = vadd.f32 %v1165, %v1183
  %1185 = vdwg.mxu0
  %vm1186 = vcmask 883712
  %1187 = vst.msk [vmem:[#allocation2] sm:$0xff] %vm1186, %v1177
  %1188 = vst.msk [vmem:[#allocation2 + $0x8] sm:$0xff] %vm1186, %v1179
  %1189 = vst.msk [vmem:[#allocation2 + $0x10] sm:$0xff] %vm1186, %v1182
  %1190 = vst.msk [vmem:[#allocation2 + $0x18] sm:$0xff] %vm1186, %v1184
  %s1191 = scalar_lea.vmem %s8, 144
  %v1192 = vld [vmem:[%s1191] sm:$0xf]
  %v1193 = vld [vmem:[%s1191 + $0x4] sm:$0xf]
  %v1194 = vld [vmem:[%s1191 + $0x8] sm:$0xf]
  %v1195 = vld [vmem:[%s1191 + $0xc] sm:$0xf]
  %v1196 = vld [vmem:[%s1191 + $0x10] sm:$0xf]
  %v1197 = vld [vmem:[%s1191 + $0x14] sm:$0xf]
  %v1198 = vld [vmem:[%s1191 + $0x18] sm:$0xf]
  %v1199 = vld [vmem:[%s1191 + $0x1c] sm:$0xf]
  %v1200 = vld [vmem:[%s1191 + $0x20] sm:$0xf]
  %v1201 = vld [vmem:[%s1191 + $0x24] sm:$0xf]
  %v1202 = vld [vmem:[%s1191 + $0x28] sm:$0xf]
  %v1203 = vld [vmem:[%s1191 + $0x2c] sm:$0xf]
  %v1204 = vld [vmem:[%s1191 + $0x30] sm:$0xf]
  %v1205 = vld [vmem:[%s1191 + $0x34] sm:$0xf]
  %v1206 = vld [vmem:[%s1191 + $0x38] sm:$0xf]
  %v1207 = vld [vmem:[%s1191 + $0x3c] sm:$0xf]
  %v1208 = vld [vmem:[%s1191 + $0x40] sm:$0xf]
  %v1209 = vld [vmem:[%s1191 + $0x44] sm:$0xf]
  %v1210 = vld [vmem:[%s1191 + $0x48] sm:$0xf]
  %v1211 = vld [vmem:[%s1191 + $0x4c] sm:$0xf]
  %v1212 = vld [vmem:[%s1191 + $0x50] sm:$0xf]
  %v1213 = vld [vmem:[%s1191 + $0x54] sm:$0xf]
  %v1214 = vld [vmem:[%s1191 + $0x58] sm:$0xf]
  %v1215 = vld [vmem:[%s1191 + $0x5c] sm:$0xf]
  %v1216 = vld [vmem:[%s1191 + $0x60] sm:$0xf]
  %v1217 = vld [vmem:[%s1191 + $0x64] sm:$0xf]
  %v1218 = vld [vmem:[%s1191 + $0x68] sm:$0xf]
  %v1219 = vld [vmem:[%s1191 + $0x6c] sm:$0xf]
  %v1220 = vld [vmem:[%s1191 + $0x70] sm:$0xf]
  %v1221 = vld [vmem:[%s1191 + $0x74] sm:$0xf]
  %v1222 = vld [vmem:[%s1191 + $0x78] sm:$0xf]
  %v1223 = vld [vmem:[%s1191 + $0x7c] sm:$0xf]
  %v1224 = vld [vmem:[%s1191 + $0x80] sm:$0xf]
  %v1225 = vld [vmem:[%s1191 + $0x84] sm:$0xf]
  %v1226 = vld [vmem:[%s1191 + $0x88] sm:$0xf]
  %v1227 = vld [vmem:[%s1191 + $0x8c] sm:$0xf]
  %v1264 = vunpack.c.l.b16 %v1192
  %v1265 = vunpack.c.l.b16 %v1193
  %v1266 = vunpack.c.l.b16 %v1194
  %v1267 = vunpack.c.l.b16 %v1195
  %v1268 = vunpack.c.l.b16 %v1196
  %v1269 = vunpack.c.l.b16 %v1197
  %v1270 = vunpack.c.l.b16 %v1198
  %v1271 = vunpack.c.l.b16 %v1199
  %v1272 = vunpack.c.l.b16 %v1200
  %v1273 = vunpack.c.l.b16 %v1201
  %v1274 = vunpack.c.l.b16 %v1202
  %v1275 = vunpack.c.l.b16 %v1203
  %v1276 = vunpack.c.l.b16 %v1204
  %v1277 = vunpack.c.l.b16 %v1205
  %v1278 = vunpack.c.l.b16 %v1206
  %v1279 = vunpack.c.l.b16 %v1207
  %v1280 = vunpack.c.l.b16 %v1208
  %v1281 = vunpack.c.l.b16 %v1209
  %v1282 = vunpack.c.l.b16 %v1210
  %v1283 = vunpack.c.l.b16 %v1211
  %v1284 = vunpack.c.l.b16 %v1212
  %v1285 = vunpack.c.l.b16 %v1213
  %v1286 = vunpack.c.l.b16 %v1214
  %v1287 = vunpack.c.l.b16 %v1215
  %v1288 = vunpack.c.l.b16 %v1216
  %v1289 = vunpack.c.l.b16 %v1217
  %v1290 = vunpack.c.l.b16 %v1218
  %v1291 = vunpack.c.l.b16 %v1219
  %v1292 = vunpack.c.l.b16 %v1220
  %v1293 = vunpack.c.l.b16 %v1221
  %v1294 = vunpack.c.l.b16 %v1222
  %v1295 = vunpack.c.l.b16 %v1223
  %v1296 = vunpack.c.l.b16 %v1224
  %v1297 = vunpack.c.l.b16 %v1225
  %v1298 = vunpack.c.l.b16 %v1226
  %v1299 = vunpack.c.l.b16 %v1227
  %v1300 = vpack.c.b16 %v1265, %v1264
  %v1301 = vpack.c.b16 %v1267, %v1266
  %v1302 = vpack.c.b16 %v1269, %v1268
  %v1303 = vpack.c.b16 %v1271, %v1270
  %v1304 = vpack.c.b16 %v1273, %v1272
  %v1305 = vpack.c.b16 %v1275, %v1274
  %v1306 = vpack.c.b16 %v1277, %v1276
  %v1307 = vpack.c.b16 %v1279, %v1278
  %v1308 = vpack.c.b16 %v1281, %v1280
  %v1309 = vpack.c.b16 %v1283, %v1282
  %v1310 = vpack.c.b16 %v1285, %v1284
  %v1311 = vpack.c.b16 %v1287, %v1286
  %v1312 = vpack.c.b16 %v1289, %v1288
  %v1313 = vpack.c.b16 %v1291, %v1290
  %v1314 = vpack.c.b16 %v1293, %v1292
  %v1315 = vpack.c.b16 %v1295, %v1294
  %v1316 = vpack.c.b16 %v1297, %v1296
  %v1317 = vpack.c.b16 %v1299, %v1298
  %1336 = vmatpush.bf16.msra.mxu0 %v1307
  %1337 = vmatpush.bf16.msra.mxu0 %v1306
  %1338 = vmatpush.bf16.msra.mxu0 %v1305
  %1339 = vmatpush.bf16.msra.mxu0 %v1304
  %1340 = vmatpush.bf16.msra.mxu0 %v1303
  %1341 = vmatpush.bf16.msra.mxu0 %v1302
  %1342 = vmatpush.bf16.msra.mxu0 %v1301
  %1343 = vmatpush.bf16.msra.mxu0 %v1300
  %1344 = vmatmul.bf16.gmra.mxu0 %v973
  %v1345 = vpop.f32.mrf.mxu0
  %v1346 = vadd.f32 0.0, %v1345
  %v1347 = vpop.f32.mrf.mxu0
  %v1348 = vadd.f32 0.0, %v1347
  %1349 = vmatmul.bf16.gmra.mxu0 %v976
  %v1350 = vpop.f32.mrf.mxu0
  %v1351 = vadd.f32 0.0, %v1350
  %v1352 = vpop.f32.mrf.mxu0
  %v1353 = vadd.f32 0.0, %v1352
  %1354 = vdwg.mxu0
  %1355 = vmatpush.bf16.msra.mxu0 %v1315
  %1356 = vmatpush.bf16.msra.mxu0 %v1314
  %1357 = vmatpush.bf16.msra.mxu0 %v1313
  %1358 = vmatpush.bf16.msra.mxu0 %v1312
  %1359 = vmatpush.bf16.msra.mxu0 %v1311
  %1360 = vmatpush.bf16.msra.mxu0 %v1310
  %1361 = vmatpush.bf16.msra.mxu0 %v1309
  %1362 = vmatpush.bf16.msra.mxu0 %v1308
  %1363 = vmatmul.bf16.gmra.mxu0 %v974
  %v1364 = vpop.f32.mrf.mxu0
  %v1365 = vadd.f32 %v1346, %v1364
  %v1366 = vpop.f32.mrf.mxu0
  %v1367 = vadd.f32 %v1348, %v1366
  %1368 = vmatmul.bf16.gmra.mxu0 %v977
  %v1369 = vpop.f32.mrf.mxu0
  %v1370 = vadd.f32 %v1351, %v1369
  %v1371 = vpop.f32.mrf.mxu0
  %v1372 = vadd.f32 %v1353, %v1371
  %1373 = vdwg.mxu0
  %1374 = vmatpush.bf16.msra.mxu0 0
  %1375 = vmatpush.bf16.msra.mxu0 0
  %1376 = vmatpush.bf16.msra.mxu0 0
  %1377 = vmatpush.bf16.msra.mxu0 0
  %1378 = vmatpush.bf16.msra.mxu0 0
  %1379 = vmatpush.bf16.msra.mxu0 0
  %1380 = vmatpush.bf16.msra.mxu0 %v1317
  %1381 = vmatpush.bf16.msra.mxu0 %v1316
  %1382 = vmatmul.bf16.gmra.mxu0 %v1124
  %v1383 = vpop.f32.mrf.mxu0
  %v1384 = vadd.f32 %v1365, %v1383
  %v1385 = vpop.f32.mrf.mxu0
  %v1386 = vadd.f32 %v1367, %v1385
  %1387 = vmatmul.bf16.gmra.mxu0 %v1127
  %v1388 = vpop.f32.mrf.mxu0
  %v1389 = vadd.f32 %v1370, %v1388
  %v1390 = vpop.f32.mrf.mxu0
  %v1391 = vadd.f32 %v1372, %v1390
  %1392 = vdwg.mxu0
  %s1393 = scalar_lea.vmem [#allocation2], 32
  %1394 = vst.msk [vmem:[%s1393] sm:$0xff] %vm1186, %v1384
  %1395 = vst.msk [vmem:[%s1393 + $0x8] sm:$0xff] %vm1186, %v1386
  %1396 = vst.msk [vmem:[%s1393 + $0x10] sm:$0xff] %vm1186, %v1389
  %1397 = vst.msk [vmem:[%s1393 + $0x18] sm:$0xff] %vm1186, %v1391
  %s1398 = scalar_lea.vmem %s8, 288
  %v1399 = vld [vmem:[%s1398] sm:$0xf]
  %v1400 = vld [vmem:[%s1398 + $0x4] sm:$0xf]
  %v1401 = vld [vmem:[%s1398 + $0x8] sm:$0xf]
  %v1402 = vld [vmem:[%s1398 + $0xc] sm:$0xf]
  %v1403 = vld [vmem:[%s1398 + $0x10] sm:$0xf]
  %v1404 = vld [vmem:[%s1398 + $0x14] sm:$0xf]
  %v1405 = vld [vmem:[%s1398 + $0x18] sm:$0xf]
  %v1406 = vld [vmem:[%s1398 + $0x1c] sm:$0xf]
  %v1407 = vld [vmem:[%s1398 + $0x20] sm:$0xf]
  %v1408 = vld [vmem:[%s1398 + $0x24] sm:$0xf]
  %v1409 = vld [vmem:[%s1398 + $0x28] sm:$0xf]
  %v1410 = vld [vmem:[%s1398 + $0x2c] sm:$0xf]
  %v1411 = vld [vmem:[%s1398 + $0x30] sm:$0xf]
  %v1412 = vld [vmem:[%s1398 + $0x34] sm:$0xf]
  %v1413 = vld [vmem:[%s1398 + $0x38] sm:$0xf]
  %v1414 = vld [vmem:[%s1398 + $0x3c] sm:$0xf]
  %v1415 = vld [vmem:[%s1398 + $0x40] sm:$0xf]
  %v1416 = vld [vmem:[%s1398 + $0x44] sm:$0xf]
  %v1417 = vld [vmem:[%s1398 + $0x48] sm:$0xf]
  %v1418 = vld [vmem:[%s1398 + $0x4c] sm:$0xf]
  %v1419 = vld [vmem:[%s1398 + $0x50] sm:$0xf]
  %v1420 = vld [vmem:[%s1398 + $0x54] sm:$0xf]
  %v1421 = vld [vmem:[%s1398 + $0x58] sm:$0xf]
  %v1422 = vld [vmem:[%s1398 + $0x5c] sm:$0xf]
  %v1423 = vld [vmem:[%s1398 + $0x60] sm:$0xf]
  %v1424 = vld [vmem:[%s1398 + $0x64] sm:$0xf]
  %v1425 = vld [vmem:[%s1398 + $0x68] sm:$0xf]
  %v1426 = vld [vmem:[%s1398 + $0x6c] sm:$0xf]
  %v1427 = vld [vmem:[%s1398 + $0x70] sm:$0xf]
  %v1428 = vld [vmem:[%s1398 + $0x74] sm:$0xf]
  %v1429 = vld [vmem:[%s1398 + $0x78] sm:$0xf]
  %v1430 = vld [vmem:[%s1398 + $0x7c] sm:$0xf]
  %v1431 = vld [vmem:[%s1398 + $0x80] sm:$0xf]
  %v1432 = vld [vmem:[%s1398 + $0x84] sm:$0xf]
  %v1433 = vld [vmem:[%s1398 + $0x88] sm:$0xf]
  %v1434 = vld [vmem:[%s1398 + $0x8c] sm:$0xf]
  %v1471 = vunpack.c.l.b16 %v1399
  %v1472 = vunpack.c.l.b16 %v1400
  %v1473 = vunpack.c.l.b16 %v1401
  %v1474 = vunpack.c.l.b16 %v1402
  %v1475 = vunpack.c.l.b16 %v1403
  %v1476 = vunpack.c.l.b16 %v1404
  %v1477 = vunpack.c.l.b16 %v1405
  %v1478 = vunpack.c.l.b16 %v1406
  %v1479 = vunpack.c.l.b16 %v1407
  %v1480 = vunpack.c.l.b16 %v1408
  %v1481 = vunpack.c.l.b16 %v1409
  %v1482 = vunpack.c.l.b16 %v1410
  %v1483 = vunpack.c.l.b16 %v1411
  %v1484 = vunpack.c.l.b16 %v1412
  %v1485 = vunpack.c.l.b16 %v1413
  %v1486 = vunpack.c.l.b16 %v1414
  %v1487 = vunpack.c.l.b16 %v1415
  %v1488 = vunpack.c.l.b16 %v1416
  %v1489 = vunpack.c.l.b16 %v1417
  %v1490 = vunpack.c.l.b16 %v1418
  %v1491 = vunpack.c.l.b16 %v1419
  %v1492 = vunpack.c.l.b16 %v1420
  %v1493 = vunpack.c.l.b16 %v1421
  %v1494 = vunpack.c.l.b16 %v1422
  %v1495 = vunpack.c.l.b16 %v1423
  %v1496 = vunpack.c.l.b16 %v1424
  %v1497 = vunpack.c.l.b16 %v1425
  %v1498 = vunpack.c.l.b16 %v1426
  %v1499 = vunpack.c.l.b16 %v1427
  %v1500 = vunpack.c.l.b16 %v1428
  %v1501 = vunpack.c.l.b16 %v1429
  %v1502 = vunpack.c.l.b16 %v1430
  %v1503 = vunpack.c.l.b16 %v1431
  %v1504 = vunpack.c.l.b16 %v1432
  %v1505 = vunpack.c.l.b16 %v1433
  %v1506 = vunpack.c.l.b16 %v1434
  %v1507 = vpack.c.b16 %v1472, %v1471
  %v1508 = vpack.c.b16 %v1474, %v1473
  %v1509 = vpack.c.b16 %v1476, %v1475
  %v1510 = vpack.c.b16 %v1478, %v1477
  %v1511 = vpack.c.b16 %v1480, %v1479
  %v1512 = vpack.c.b16 %v1482, %v1481
  %v1513 = vpack.c.b16 %v1484, %v1483
  %v1514 = vpack.c.b16 %v1486, %v1485
  %v1515 = vpack.c.b16 %v1488, %v1487
  %v1516 = vpack.c.b16 %v1490, %v1489
  %v1517 = vpack.c.b16 %v1492, %v1491
  %v1518 = vpack.c.b16 %v1494, %v1493
  %v1519 = vpack.c.b16 %v1496, %v1495
  %v1520 = vpack.c.b16 %v1498, %v1497
  %v1521 = vpack.c.b16 %v1500, %v1499
  %v1522 = vpack.c.b16 %v1502, %v1501
  %v1523 = vpack.c.b16 %v1504, %v1503
  %v1524 = vpack.c.b16 %v1506, %v1505
  %1543 = vmatpush.bf16.msra.mxu0 %v1514
  %1544 = vmatpush.bf16.msra.mxu0 %v1513
  %1545 = vmatpush.bf16.msra.mxu0 %v1512
  %1546 = vmatpush.bf16.msra.mxu0 %v1511
  %1547 = vmatpush.bf16.msra.mxu0 %v1510
  %1548 = vmatpush.bf16.msra.mxu0 %v1509
  %1549 = vmatpush.bf16.msra.mxu0 %v1508
  %1550 = vmatpush.bf16.msra.mxu0 %v1507
  %1551 = vmatmul.bf16.gmra.mxu0 %v973
  %v1552 = vpop.f32.mrf.mxu0
  %v1553 = vadd.f32 0.0, %v1552
  %v1554 = vpop.f32.mrf.mxu0
  %v1555 = vadd.f32 0.0, %v1554
  %1556 = vmatmul.bf16.gmra.mxu0 %v976
  %v1557 = vpop.f32.mrf.mxu0
  %v1558 = vadd.f32 0.0, %v1557
  %v1559 = vpop.f32.mrf.mxu0
  %v1560 = vadd.f32 0.0, %v1559
  %1561 = vdwg.mxu0
  %1562 = vmatpush.bf16.msra.mxu0 %v1522
  %1563 = vmatpush.bf16.msra.mxu0 %v1521
  %1564 = vmatpush.bf16.msra.mxu0 %v1520
  %1565 = vmatpush.bf16.msra.mxu0 %v1519
  %1566 = vmatpush.bf16.msra.mxu0 %v1518
  %1567 = vmatpush.bf16.msra.mxu0 %v1517
  %1568 = vmatpush.bf16.msra.mxu0 %v1516
  %1569 = vmatpush.bf16.msra.mxu0 %v1515
  %1570 = vmatmul.bf16.gmra.mxu0 %v974
  %v1571 = vpop.f32.mrf.mxu0
  %v1572 = vadd.f32 %v1553, %v1571
  %v1573 = vpop.f32.mrf.mxu0
  %v1574 = vadd.f32 %v1555, %v1573
  %1575 = vmatmul.bf16.gmra.mxu0 %v977
  %v1576 = vpop.f32.mrf.mxu0
  %v1577 = vadd.f32 %v1558, %v1576
  %v1578 = vpop.f32.mrf.mxu0
  %v1579 = vadd.f32 %v1560, %v1578
  %1580 = vdwg.mxu0
  %1581 = vmatpush.bf16.msra.mxu0 0
  %1582 = vmatpush.bf16.msra.mxu0 0
  %1583 = vmatpush.bf16.msra.mxu0 0
  %1584 = vmatpush.bf16.msra.mxu0 0
  %1585 = vmatpush.bf16.msra.mxu0 0
  %1586 = vmatpush.bf16.msra.mxu0 0
  %1587 = vmatpush.bf16.msra.mxu0 %v1524
  %1588 = vmatpush.bf16.msra.mxu0 %v1523
  %1589 = vmatmul.bf16.gmra.mxu0 %v1124
  %v1590 = vpop.f32.mrf.mxu0
  %v1591 = vadd.f32 %v1572, %v1590
  %v1592 = vpop.f32.mrf.mxu0
  %v1593 = vadd.f32 %v1574, %v1592
  %1594 = vmatmul.bf16.gmra.mxu0 %v1127
  %v1595 = vpop.f32.mrf.mxu0
  %v1596 = vadd.f32 %v1577, %v1595
  %v1597 = vpop.f32.mrf.mxu0
  %v1598 = vadd.f32 %v1579, %v1597
  %1599 = vdwg.mxu0
  %s1600 = scalar_lea.vmem [#allocation2], 64
  %1601 = vst.msk [vmem:[%s1600] sm:$0xff] %vm1186, %v1591
  %1602 = vst.msk [vmem:[%s1600 + $0x8] sm:$0xff] %vm1186, %v1593
  %1603 = vst.msk [vmem:[%s1600 + $0x10] sm:$0xff] %vm1186, %v1596
  %1604 = vst.msk [vmem:[%s1600 + $0x18] sm:$0xff] %vm1186, %v1598
  %s1605 = scalar_lea.vmem %s8, 432
  %v1606 = vld [vmem:[%s1605] sm:$0xf]
  %v1607 = vld [vmem:[%s1605 + $0x4] sm:$0xf]
  %v1608 = vld [vmem:[%s1605 + $0x8] sm:$0xf]
  %v1609 = vld [vmem:[%s1605 + $0xc] sm:$0xf]
  %v1610 = vld [vmem:[%s1605 + $0x10] sm:$0xf]
  %v1611 = vld [vmem:[%s1605 + $0x14] sm:$0xf]
  %v1612 = vld [vmem:[%s1605 + $0x18] sm:$0xf]
  %v1613 = vld [vmem:[%s1605 + $0x1c] sm:$0xf]
  %v1614 = vld [vmem:[%s1605 + $0x20] sm:$0xf]
  %v1615 = vld [vmem:[%s1605 + $0x24] sm:$0xf]
  %v1616 = vld [vmem:[%s1605 + $0x28] sm:$0xf]
  %v1617 = vld [vmem:[%s1605 + $0x2c] sm:$0xf]
  %v1618 = vld [vmem:[%s1605 + $0x30] sm:$0xf]
  %v1619 = vld [vmem:[%s1605 + $0x34] sm:$0xf]
  %v1620 = vld [vmem:[%s1605 + $0x38] sm:$0xf]
  %v1621 = vld [vmem:[%s1605 + $0x3c] sm:$0xf]
  %v1622 = vld [vmem:[%s1605 + $0x40] sm:$0xf]
  %v1623 = vld [vmem:[%s1605 + $0x44] sm:$0xf]
  %v1624 = vld [vmem:[%s1605 + $0x48] sm:$0xf]
  %v1625 = vld [vmem:[%s1605 + $0x4c] sm:$0xf]
  %v1626 = vld [vmem:[%s1605 + $0x50] sm:$0xf]
  %v1627 = vld [vmem:[%s1605 + $0x54] sm:$0xf]
  %v1628 = vld [vmem:[%s1605 + $0x58] sm:$0xf]
  %v1629 = vld [vmem:[%s1605 + $0x5c] sm:$0xf]
  %v1630 = vld [vmem:[%s1605 + $0x60] sm:$0xf]
  %v1631 = vld [vmem:[%s1605 + $0x64] sm:$0xf]
  %v1632 = vld [vmem:[%s1605 + $0x68] sm:$0xf]
  %v1633 = vld [vmem:[%s1605 + $0x6c] sm:$0xf]
  %v1634 = vld [vmem:[%s1605 + $0x70] sm:$0xf]
  %v1635 = vld [vmem:[%s1605 + $0x74] sm:$0xf]
  %v1636 = vld [vmem:[%s1605 + $0x78] sm:$0xf]
  %v1637 = vld [vmem:[%s1605 + $0x7c] sm:$0xf]
  %v1638 = vld [vmem:[%s1605 + $0x80] sm:$0xf]
  %v1639 = vld [vmem:[%s1605 + $0x84] sm:$0xf]
  %v1640 = vld [vmem:[%s1605 + $0x88] sm:$0xf]
  %v1641 = vld [vmem:[%s1605 + $0x8c] sm:$0xf]
  %v1678 = vunpack.c.l.b16 %v1606
  %v1679 = vunpack.c.l.b16 %v1607
  %v1680 = vunpack.c.l.b16 %v1608
  %v1681 = vunpack.c.l.b16 %v1609
  %v1682 = vunpack.c.l.b16 %v1610
  %v1683 = vunpack.c.l.b16 %v1611
  %v1684 = vunpack.c.l.b16 %v1612
  %v1685 = vunpack.c.l.b16 %v1613
  %v1686 = vunpack.c.l.b16 %v1614
  %v1687 = vunpack.c.l.b16 %v1615
  %v1688 = vunpack.c.l.b16 %v1616
  %v1689 = vunpack.c.l.b16 %v1617
  %v1690 = vunpack.c.l.b16 %v1618
  %v1691 = vunpack.c.l.b16 %v1619
  %v1692 = vunpack.c.l.b16 %v1620
  %v1693 = vunpack.c.l.b16 %v1621
  %v1694 = vunpack.c.l.b16 %v1622
  %v1695 = vunpack.c.l.b16 %v1623
  %v1696 = vunpack.c.l.b16 %v1624
  %v1697 = vunpack.c.l.b16 %v1625
  %v1698 = vunpack.c.l.b16 %v1626
  %v1699 = vunpack.c.l.b16 %v1627
  %v1700 = vunpack.c.l.b16 %v1628
  %v1701 = vunpack.c.l.b16 %v1629
  %v1702 = vunpack.c.l.b16 %v1630
  %v1703 = vunpack.c.l.b16 %v1631
  %v1704 = vunpack.c.l.b16 %v1632
  %v1705 = vunpack.c.l.b16 %v1633
  %v1706 = vunpack.c.l.b16 %v1634
  %v1707 = vunpack.c.l.b16 %v1635
  %v1708 = vunpack.c.l.b16 %v1636
  %v1709 = vunpack.c.l.b16 %v1637
  %v1710 = vunpack.c.l.b16 %v1638
  %v1711 = vunpack.c.l.b16 %v1639
  %v1712 = vunpack.c.l.b16 %v1640
  %v1713 = vunpack.c.l.b16 %v1641
  %v1714 = vpack.c.b16 %v1679, %v1678
  %v1715 = vpack.c.b16 %v1681, %v1680
  %v1716 = vpack.c.b16 %v1683, %v1682
  %v1717 = vpack.c.b16 %v1685, %v1684
  %v1718 = vpack.c.b16 %v1687, %v1686
  %v1719 = vpack.c.b16 %v1689, %v1688
  %v1720 = vpack.c.b16 %v1691, %v1690
  %v1721 = vpack.c.b16 %v1693, %v1692
  %v1722 = vpack.c.b16 %v1695, %v1694
  %v1723 = vpack.c.b16 %v1697, %v1696
  %v1724 = vpack.c.b16 %v1699, %v1698
  %v1725 = vpack.c.b16 %v1701, %v1700
  %v1726 = vpack.c.b16 %v1703, %v1702
  %v1727 = vpack.c.b16 %v1705, %v1704
  %v1728 = vpack.c.b16 %v1707, %v1706
  %v1729 = vpack.c.b16 %v1709, %v1708
  %v1730 = vpack.c.b16 %v1711, %v1710
  %v1731 = vpack.c.b16 %v1713, %v1712
  %1750 = vmatpush.bf16.msra.mxu0 %v1721
  %1751 = vmatpush.bf16.msra.mxu0 %v1720
  %1752 = vmatpush.bf16.msra.mxu0 %v1719
  %1753 = vmatpush.bf16.msra.mxu0 %v1718
  %1754 = vmatpush.bf16.msra.mxu0 %v1717
  %1755 = vmatpush.bf16.msra.mxu0 %v1716
  %1756 = vmatpush.bf16.msra.mxu0 %v1715
  %1757 = vmatpush.bf16.msra.mxu0 %v1714
  %1758 = vmatmul.bf16.gmra.mxu0 %v973
  %v1759 = vpop.f32.mrf.mxu0
  %v1760 = vadd.f32 0.0, %v1759
  %v1761 = vpop.f32.mrf.mxu0
  %v1762 = vadd.f32 0.0, %v1761
  %1763 = vmatmul.bf16.gmra.mxu0 %v976
  %v1764 = vpop.f32.mrf.mxu0
  %v1765 = vadd.f32 0.0, %v1764
  %v1766 = vpop.f32.mrf.mxu0
  %v1767 = vadd.f32 0.0, %v1766
  %1768 = vdwg.mxu0
  %1769 = vmatpush.bf16.msra.mxu0 %v1729
  %1770 = vmatpush.bf16.msra.mxu0 %v1728
  %1771 = vmatpush.bf16.msra.mxu0 %v1727
  %1772 = vmatpush.bf16.msra.mxu0 %v1726
  %1773 = vmatpush.bf16.msra.mxu0 %v1725
  %1774 = vmatpush.bf16.msra.mxu0 %v1724
  %1775 = vmatpush.bf16.msra.mxu0 %v1723
  %1776 = vmatpush.bf16.msra.mxu0 %v1722
  %1777 = vmatmul.bf16.gmra.mxu0 %v974
  %v1778 = vpop.f32.mrf.mxu0
  %v1779 = vadd.f32 %v1760, %v1778
  %v1780 = vpop.f32.mrf.mxu0
  %v1781 = vadd.f32 %v1762, %v1780
  %1782 = vmatmul.bf16.gmra.mxu0 %v977
  %v1783 = vpop.f32.mrf.mxu0
  %v1784 = vadd.f32 %v1765, %v1783
  %v1785 = vpop.f32.mrf.mxu0
  %v1786 = vadd.f32 %v1767, %v1785
  %1787 = vdwg.mxu0
  %1788 = vmatpush.bf16.msra.mxu0 0
  %1789 = vmatpush.bf16.msra.mxu0 0
  %1790 = vmatpush.bf16.msra.mxu0 0
  %1791 = vmatpush.bf16.msra.mxu0 0
  %1792 = vmatpush.bf16.msra.mxu0 0
  %1793 = vmatpush.bf16.msra.mxu0 0
  %1794 = vmatpush.bf16.msra.mxu0 %v1731
  %1795 = vmatpush.bf16.msra.mxu0 %v1730
  %1796 = vmatmul.bf16.gmra.mxu0 %v1124
  %v1797 = vpop.f32.mrf.mxu0
  %v1798 = vadd.f32 %v1779, %v1797
  %v1799 = vpop.f32.mrf.mxu0
  %v1800 = vadd.f32 %v1781, %v1799
  %1801 = vmatmul.bf16.gmra.mxu0 %v1127
  %v1802 = vpop.f32.mrf.mxu0
  %v1803 = vadd.f32 %v1784, %v1802
  %v1804 = vpop.f32.mrf.mxu0
  %v1805 = vadd.f32 %v1786, %v1804
  %1806 = vdwg.mxu0
  %s1807 = scalar_lea.vmem [#allocation2], 96
  %1808 = vst.msk [vmem:[%s1807] sm:$0xff] %vm1186, %v1798
  %1809 = vst.msk [vmem:[%s1807 + $0x8] sm:$0xff] %vm1186, %v1800
  %1810 = vst.msk [vmem:[%s1807 + $0x10] sm:$0xff] %vm1186, %v1803
  %1811 = vst.msk [vmem:[%s1807 + $0x18] sm:$0xff] %vm1186, %v1805
  %s1812 = scalar_lea.vmem %s8, 576
  %v1813 = vld [vmem:[%s1812] sm:$0xf]
  %v1814 = vld [vmem:[%s1812 + $0x4] sm:$0xf]
  %v1815 = vld [vmem:[%s1812 + $0x8] sm:$0xf]
  %v1816 = vld [vmem:[%s1812 + $0xc] sm:$0xf]
  %v1817 = vld [vmem:[%s1812 + $0x10] sm:$0xf]
  %v1818 = vld [vmem:[%s1812 + $0x14] sm:$0xf]
  %v1819 = vld [vmem:[%s1812 + $0x18] sm:$0xf]
  %v1820 = vld [vmem:[%s1812 + $0x1c] sm:$0xf]
  %v1821 = vld [vmem:[%s1812 + $0x20] sm:$0xf]
  %v1822 = vld [vmem:[%s1812 + $0x24] sm:$0xf]
  %v1823 = vld [vmem:[%s1812 + $0x28] sm:$0xf]
  %v1824 = vld [vmem:[%s1812 + $0x2c] sm:$0xf]
  %v1825 = vld [vmem:[%s1812 + $0x30] sm:$0xf]
  %v1826 = vld [vmem:[%s1812 + $0x34] sm:$0xf]
  %v1827 = vld [vmem:[%s1812 + $0x38] sm:$0xf]
  %v1828 = vld [vmem:[%s1812 + $0x3c] sm:$0xf]
  %v1829 = vld [vmem:[%s1812 + $0x40] sm:$0xf]
  %v1830 = vld [vmem:[%s1812 + $0x44] sm:$0xf]
  %v1831 = vld [vmem:[%s1812 + $0x48] sm:$0xf]
  %v1832 = vld [vmem:[%s1812 + $0x4c] sm:$0xf]
  %v1833 = vld [vmem:[%s1812 + $0x50] sm:$0xf]
  %v1834 = vld [vmem:[%s1812 + $0x54] sm:$0xf]
  %v1835 = vld [vmem:[%s1812 + $0x58] sm:$0xf]
  %v1836 = vld [vmem:[%s1812 + $0x5c] sm:$0xf]
  %v1837 = vld [vmem:[%s1812 + $0x60] sm:$0xf]
  %v1838 = vld [vmem:[%s1812 + $0x64] sm:$0xf]
  %v1839 = vld [vmem:[%s1812 + $0x68] sm:$0xf]
  %v1840 = vld [vmem:[%s1812 + $0x6c] sm:$0xf]
  %v1841 = vld [vmem:[%s1812 + $0x70] sm:$0xf]
  %v1842 = vld [vmem:[%s1812 + $0x74] sm:$0xf]
  %v1843 = vld [vmem:[%s1812 + $0x78] sm:$0xf]
  %v1844 = vld [vmem:[%s1812 + $0x7c] sm:$0xf]
  %v1845 = vld [vmem:[%s1812 + $0x80] sm:$0xf]
  %v1846 = vld [vmem:[%s1812 + $0x84] sm:$0xf]
  %v1847 = vld [vmem:[%s1812 + $0x88] sm:$0xf]
  %v1848 = vld [vmem:[%s1812 + $0x8c] sm:$0xf]
  %v1885 = vunpack.c.l.b16 %v1813
  %v1886 = vunpack.c.l.b16 %v1814
  %v1887 = vunpack.c.l.b16 %v1815
  %v1888 = vunpack.c.l.b16 %v1816
  %v1889 = vunpack.c.l.b16 %v1817
  %v1890 = vunpack.c.l.b16 %v1818
  %v1891 = vunpack.c.l.b16 %v1819
  %v1892 = vunpack.c.l.b16 %v1820
  %v1893 = vunpack.c.l.b16 %v1821
  %v1894 = vunpack.c.l.b16 %v1822
  %v1895 = vunpack.c.l.b16 %v1823
  %v1896 = vunpack.c.l.b16 %v1824
  %v1897 = vunpack.c.l.b16 %v1825
  %v1898 = vunpack.c.l.b16 %v1826
  %v1899 = vunpack.c.l.b16 %v1827
  %v1900 = vunpack.c.l.b16 %v1828
  %v1901 = vunpack.c.l.b16 %v1829
  %v1902 = vunpack.c.l.b16 %v1830
  %v1903 = vunpack.c.l.b16 %v1831
  %v1904 = vunpack.c.l.b16 %v1832
  %v1905 = vunpack.c.l.b16 %v1833
  %v1906 = vunpack.c.l.b16 %v1834
  %v1907 = vunpack.c.l.b16 %v1835
  %v1908 = vunpack.c.l.b16 %v1836
  %v1909 = vunpack.c.l.b16 %v1837
  %v1910 = vunpack.c.l.b16 %v1838
  %v1911 = vunpack.c.l.b16 %v1839
  %v1912 = vunpack.c.l.b16 %v1840
  %v1913 = vunpack.c.l.b16 %v1841
  %v1914 = vunpack.c.l.b16 %v1842
  %v1915 = vunpack.c.l.b16 %v1843
  %v1916 = vunpack.c.l.b16 %v1844
  %v1917 = vunpack.c.l.b16 %v1845
  %v1918 = vunpack.c.l.b16 %v1846
  %v1919 = vunpack.c.l.b16 %v1847
  %v1920 = vunpack.c.l.b16 %v1848
  %v1921 = vpack.c.b16 %v1886, %v1885
  %v1922 = vpack.c.b16 %v1888, %v1887
  %v1923 = vpack.c.b16 %v1890, %v1889
  %v1924 = vpack.c.b16 %v1892, %v1891
  %v1925 = vpack.c.b16 %v1894, %v1893
  %v1926 = vpack.c.b16 %v1896, %v1895
  %v1927 = vpack.c.b16 %v1898, %v1897
  %v1928 = vpack.c.b16 %v1900, %v1899
  %v1929 = vpack.c.b16 %v1902, %v1901
  %v1930 = vpack.c.b16 %v1904, %v1903
  %v1931 = vpack.c.b16 %v1906, %v1905
  %v1932 = vpack.c.b16 %v1908, %v1907
  %v1933 = vpack.c.b16 %v1910, %v1909
  %v1934 = vpack.c.b16 %v1912, %v1911
  %v1935 = vpack.c.b16 %v1914, %v1913
  %v1936 = vpack.c.b16 %v1916, %v1915
  %v1937 = vpack.c.b16 %v1918, %v1917
  %v1938 = vpack.c.b16 %v1920, %v1919
  %1957 = vmatpush.bf16.msra.mxu0 %v1928
  %1958 = vmatpush.bf16.msra.mxu0 %v1927
  %1959 = vmatpush.bf16.msra.mxu0 %v1926
  %1960 = vmatpush.bf16.msra.mxu0 %v1925
  %1961 = vmatpush.bf16.msra.mxu0 %v1924
  %1962 = vmatpush.bf16.msra.mxu0 %v1923
  %1963 = vmatpush.bf16.msra.mxu0 %v1922
  %1964 = vmatpush.bf16.msra.mxu0 %v1921
  %1965 = vmatmul.bf16.gmra.mxu0 %v973
  %v1966 = vpop.f32.mrf.mxu0
  %v1967 = vadd.f32 0.0, %v1966
  %v1968 = vpop.f32.mrf.mxu0
  %v1969 = vadd.f32 0.0, %v1968
  %1970 = vmatmul.bf16.gmra.mxu0 %v976
  %v1971 = vpop.f32.mrf.mxu0
  %v1972 = vadd.f32 0.0, %v1971
  %v1973 = vpop.f32.mrf.mxu0
  %v1974 = vadd.f32 0.0, %v1973
  %1975 = vdwg.mxu0
  %1976 = vmatpush.bf16.msra.mxu0 %v1936
  %1977 = vmatpush.bf16.msra.mxu0 %v1935
  %1978 = vmatpush.bf16.msra.mxu0 %v1934
  %1979 = vmatpush.bf16.msra.mxu0 %v1933
  %1980 = vmatpush.bf16.msra.mxu0 %v1932
  %1981 = vmatpush.bf16.msra.mxu0 %v1931
  %1982 = vmatpush.bf16.msra.mxu0 %v1930
  %1983 = vmatpush.bf16.msra.mxu0 %v1929
  %1984 = vmatmul.bf16.gmra.mxu0 %v974
  %v1985 = vpop.f32.mrf.mxu0
  %v1986 = vadd.f32 %v1967, %v1985
  %v1987 = vpop.f32.mrf.mxu0
  %v1988 = vadd.f32 %v1969, %v1987
  %1989 = vmatmul.bf16.gmra.mxu0 %v977
  %v1990 = vpop.f32.mrf.mxu0
  %v1991 = vadd.f32 %v1972, %v1990
  %v1992 = vpop.f32.mrf.mxu0
  %v1993 = vadd.f32 %v1974, %v1992
  %1994 = vdwg.mxu0
  %1995 = vmatpush.bf16.msra.mxu0 0
  %1996 = vmatpush.bf16.msra.mxu0 0
  %1997 = vmatpush.bf16.msra.mxu0 0
  %1998 = vmatpush.bf16.msra.mxu0 0
  %1999 = vmatpush.bf16.msra.mxu0 0
  %2000 = vmatpush.bf16.msra.mxu0 0
  %2001 = vmatpush.bf16.msra.mxu0 %v1938
  %2002 = vmatpush.bf16.msra.mxu0 %v1937
  %2003 = vmatmul.bf16.gmra.mxu0 %v1124
  %v2004 = vpop.f32.mrf.mxu0
  %v2005 = vadd.f32 %v1986, %v2004
  %v2006 = vpop.f32.mrf.mxu0
  %v2007 = vadd.f32 %v1988, %v2006
  %2008 = vmatmul.bf16.gmra.mxu0 %v1127
  %v2009 = vpop.f32.mrf.mxu0
  %v2010 = vadd.f32 %v1991, %v2009
  %v2011 = vpop.f32.mrf.mxu0
  %v2012 = vadd.f32 %v1993, %v2011
  %2013 = vdwg.mxu0
  %s2014 = scalar_lea.vmem [#allocation2], 128
  %2015 = vst.msk [vmem:[%s2014] sm:$0xff] %vm1186, %v2005
  %2016 = vst.msk [vmem:[%s2014 + $0x8] sm:$0xff] %vm1186, %v2007
  %2017 = vst.msk [vmem:[%s2014 + $0x10] sm:$0xff] %vm1186, %v2010
  %2018 = vst.msk [vmem:[%s2014 + $0x18] sm:$0xff] %vm1186, %v2012
  %s2019 = scalar_lea.vmem %s8, 720
  %v2020 = vld [vmem:[%s2019] sm:$0xf]
  %v2021 = vld [vmem:[%s2019 + $0x4] sm:$0xf]
  %v2022 = vld [vmem:[%s2019 + $0x8] sm:$0xf]
  %v2023 = vld [vmem:[%s2019 + $0xc] sm:$0xf]
  %v2024 = vld [vmem:[%s2019 + $0x10] sm:$0xf]
  %v2025 = vld [vmem:[%s2019 + $0x14] sm:$0xf]
  %v2026 = vld [vmem:[%s2019 + $0x18] sm:$0xf]
  %v2027 = vld [vmem:[%s2019 + $0x1c] sm:$0xf]
  %v2028 = vld [vmem:[%s2019 + $0x20] sm:$0xf]
  %v2029 = vld [vmem:[%s2019 + $0x24] sm:$0xf]
  %v2030 = vld [vmem:[%s2019 + $0x28] sm:$0xf]
  %v2031 = vld [vmem:[%s2019 + $0x2c] sm:$0xf]
  %v2032 = vld [vmem:[%s2019 + $0x30] sm:$0xf]
  %v2033 = vld [vmem:[%s2019 + $0x34] sm:$0xf]
  %v2034 = vld [vmem:[%s2019 + $0x38] sm:$0xf]
  %v2035 = vld [vmem:[%s2019 + $0x3c] sm:$0xf]
  %v2036 = vld [vmem:[%s2019 + $0x40] sm:$0xf]
  %v2037 = vld [vmem:[%s2019 + $0x44] sm:$0xf]
  %v2038 = vld [vmem:[%s2019 + $0x48] sm:$0xf]
  %v2039 = vld [vmem:[%s2019 + $0x4c] sm:$0xf]
  %v2040 = vld [vmem:[%s2019 + $0x50] sm:$0xf]
  %v2041 = vld [vmem:[%s2019 + $0x54] sm:$0xf]
  %v2042 = vld [vmem:[%s2019 + $0x58] sm:$0xf]
  %v2043 = vld [vmem:[%s2019 + $0x5c] sm:$0xf]
  %v2044 = vld [vmem:[%s2019 + $0x60] sm:$0xf]
  %v2045 = vld [vmem:[%s2019 + $0x64] sm:$0xf]
  %v2046 = vld [vmem:[%s2019 + $0x68] sm:$0xf]
  %v2047 = vld [vmem:[%s2019 + $0x6c] sm:$0xf]
  %v2048 = vld [vmem:[%s2019 + $0x70] sm:$0xf]
  %v2049 = vld [vmem:[%s2019 + $0x74] sm:$0xf]
  %v2050 = vld [vmem:[%s2019 + $0x78] sm:$0xf]
  %v2051 = vld [vmem:[%s2019 + $0x7c] sm:$0xf]
  %v2052 = vld [vmem:[%s2019 + $0x80] sm:$0xf]
  %v2053 = vld [vmem:[%s2019 + $0x84] sm:$0xf]
  %v2054 = vld [vmem:[%s2019 + $0x88] sm:$0xf]
  %v2055 = vld [vmem:[%s2019 + $0x8c] sm:$0xf]
  %v2092 = vunpack.c.l.b16 %v2020
  %v2093 = vunpack.c.l.b16 %v2021
  %v2094 = vunpack.c.l.b16 %v2022
  %v2095 = vunpack.c.l.b16 %v2023
  %v2096 = vunpack.c.l.b16 %v2024
  %v2097 = vunpack.c.l.b16 %v2025
  %v2098 = vunpack.c.l.b16 %v2026
  %v2099 = vunpack.c.l.b16 %v2027
  %v2100 = vunpack.c.l.b16 %v2028
  %v2101 = vunpack.c.l.b16 %v2029
  %v2102 = vunpack.c.l.b16 %v2030
  %v2103 = vunpack.c.l.b16 %v2031
  %v2104 = vunpack.c.l.b16 %v2032
  %v2105 = vunpack.c.l.b16 %v2033
  %v2106 = vunpack.c.l.b16 %v2034
  %v2107 = vunpack.c.l.b16 %v2035
  %v2108 = vunpack.c.l.b16 %v2036
  %v2109 = vunpack.c.l.b16 %v2037
  %v2110 = vunpack.c.l.b16 %v2038
  %v2111 = vunpack.c.l.b16 %v2039
  %v2112 = vunpack.c.l.b16 %v2040
  %v2113 = vunpack.c.l.b16 %v2041
  %v2114 = vunpack.c.l.b16 %v2042
  %v2115 = vunpack.c.l.b16 %v2043
  %v2116 = vunpack.c.l.b16 %v2044
  %v2117 = vunpack.c.l.b16 %v2045
  %v2118 = vunpack.c.l.b16 %v2046
  %v2119 = vunpack.c.l.b16 %v2047
  %v2120 = vunpack.c.l.b16 %v2048
  %v2121 = vunpack.c.l.b16 %v2049
  %v2122 = vunpack.c.l.b16 %v2050
  %v2123 = vunpack.c.l.b16 %v2051
  %v2124 = vunpack.c.l.b16 %v2052
  %v2125 = vunpack.c.l.b16 %v2053
  %v2126 = vunpack.c.l.b16 %v2054
  %v2127 = vunpack.c.l.b16 %v2055
  %v2128 = vpack.c.b16 %v2093, %v2092
  %v2129 = vpack.c.b16 %v2095, %v2094
  %v2130 = vpack.c.b16 %v2097, %v2096
  %v2131 = vpack.c.b16 %v2099, %v2098
  %v2132 = vpack.c.b16 %v2101, %v2100
  %v2133 = vpack.c.b16 %v2103, %v2102
  %v2134 = vpack.c.b16 %v2105, %v2104
  %v2135 = vpack.c.b16 %v2107, %v2106
  %v2136 = vpack.c.b16 %v2109, %v2108
  %v2137 = vpack.c.b16 %v2111, %v2110
  %v2138 = vpack.c.b16 %v2113, %v2112
  %v2139 = vpack.c.b16 %v2115, %v2114
  %v2140 = vpack.c.b16 %v2117, %v2116
  %v2141 = vpack.c.b16 %v2119, %v2118
  %v2142 = vpack.c.b16 %v2121, %v2120
  %v2143 = vpack.c.b16 %v2123, %v2122
  %v2144 = vpack.c.b16 %v2125, %v2124
  %v2145 = vpack.c.b16 %v2127, %v2126
  %2164 = vmatpush.bf16.msra.mxu0 %v2135
  %2165 = vmatpush.bf16.msra.mxu0 %v2134
  %2166 = vmatpush.bf16.msra.mxu0 %v2133
  %2167 = vmatpush.bf16.msra.mxu0 %v2132
  %2168 = vmatpush.bf16.msra.mxu0 %v2131
  %2169 = vmatpush.bf16.msra.mxu0 %v2130
  %2170 = vmatpush.bf16.msra.mxu0 %v2129
  %2171 = vmatpush.bf16.msra.mxu0 %v2128
  %2172 = vmatmul.bf16.gmra.mxu0 %v973
  %v2173 = vpop.f32.mrf.mxu0
  %v2174 = vadd.f32 0.0, %v2173
  %v2175 = vpop.f32.mrf.mxu0
  %v2176 = vadd.f32 0.0, %v2175
  %2177 = vmatmul.bf16.gmra.mxu0 %v976
  %v2178 = vpop.f32.mrf.mxu0
  %v2179 = vadd.f32 0.0, %v2178
  %v2180 = vpop.f32.mrf.mxu0
  %v2181 = vadd.f32 0.0, %v2180
  %2182 = vdwg.mxu0
  %2183 = vmatpush.bf16.msra.mxu0 %v2143
  %2184 = vmatpush.bf16.msra.mxu0 %v2142
  %2185 = vmatpush.bf16.msra.mxu0 %v2141
  %2186 = vmatpush.bf16.msra.mxu0 %v2140
  %2187 = vmatpush.bf16.msra.mxu0 %v2139
  %2188 = vmatpush.bf16.msra.mxu0 %v2138
  %2189 = vmatpush.bf16.msra.mxu0 %v2137
  %2190 = vmatpush.bf16.msra.mxu0 %v2136
  %2191 = vmatmul.bf16.gmra.mxu0 %v974
  %v2192 = vpop.f32.mrf.mxu0
  %v2193 = vadd.f32 %v2174, %v2192
  %v2194 = vpop.f32.mrf.mxu0
  %v2195 = vadd.f32 %v2176, %v2194
  %2196 = vmatmul.bf16.gmra.mxu0 %v977
  %v2197 = vpop.f32.mrf.mxu0
  %v2198 = vadd.f32 %v2179, %v2197
  %v2199 = vpop.f32.mrf.mxu0
  %v2200 = vadd.f32 %v2181, %v2199
  %2201 = vdwg.mxu0
  %2202 = vmatpush.bf16.msra.mxu0 0
  %2203 = vmatpush.bf16.msra.mxu0 0
  %2204 = vmatpush.bf16.msra.mxu0 0
  %2205 = vmatpush.bf16.msra.mxu0 0
  %2206 = vmatpush.bf16.msra.mxu0 0
  %2207 = vmatpush.bf16.msra.mxu0 0
  %2208 = vmatpush.bf16.msra.mxu0 %v2145
  %2209 = vmatpush.bf16.msra.mxu0 %v2144
  %2210 = vmatmul.bf16.gmra.mxu0 %v1124
  %v2211 = vpop.f32.mrf.mxu0
  %v2212 = vadd.f32 %v2193, %v2211
  %v2213 = vpop.f32.mrf.mxu0
  %v2214 = vadd.f32 %v2195, %v2213
  %2215 = vmatmul.bf16.gmra.mxu0 %v1127
  %v2216 = vpop.f32.mrf.mxu0
  %v2217 = vadd.f32 %v2198, %v2216
  %v2218 = vpop.f32.mrf.mxu0
  %v2219 = vadd.f32 %v2200, %v2218
  %2220 = vdwg.mxu0
  %s2221 = scalar_lea.vmem [#allocation2], 160
  %2222 = vst.msk [vmem:[%s2221] sm:$0xff] %vm1186, %v2212
  %2223 = vst.msk [vmem:[%s2221 + $0x8] sm:$0xff] %vm1186, %v2214
  %2224 = vst.msk [vmem:[%s2221 + $0x10] sm:$0xff] %vm1186, %v2217
  %2225 = vst.msk [vmem:[%s2221 + $0x18] sm:$0xff] %vm1186, %v2219
  %s2226 = scalar_lea.vmem %s8, 864
  %v2227 = vld [vmem:[%s2226] sm:$0xf]
  %v2228 = vld [vmem:[%s2226 + $0x4] sm:$0xf]
  %v2229 = vld [vmem:[%s2226 + $0x8] sm:$0xf]
  %v2230 = vld [vmem:[%s2226 + $0xc] sm:$0xf]
  %v2231 = vld [vmem:[%s2226 + $0x10] sm:$0xf]
  %v2232 = vld [vmem:[%s2226 + $0x14] sm:$0xf]
  %v2233 = vld [vmem:[%s2226 + $0x18] sm:$0xf]
  %v2234 = vld [vmem:[%s2226 + $0x1c] sm:$0xf]
  %v2235 = vld [vmem:[%s2226 + $0x20] sm:$0xf]
  %v2236 = vld [vmem:[%s2226 + $0x24] sm:$0xf]
  %v2237 = vld [vmem:[%s2226 + $0x28] sm:$0xf]
  %v2238 = vld [vmem:[%s2226 + $0x2c] sm:$0xf]
  %v2239 = vld [vmem:[%s2226 + $0x30] sm:$0xf]
  %v2240 = vld [vmem:[%s2226 + $0x34] sm:$0xf]
  %v2241 = vld [vmem:[%s2226 + $0x38] sm:$0xf]
  %v2242 = vld [vmem:[%s2226 + $0x3c] sm:$0xf]
  %v2243 = vld [vmem:[%s2226 + $0x40] sm:$0xf]
  %v2244 = vld [vmem:[%s2226 + $0x44] sm:$0xf]
  %v2245 = vld [vmem:[%s2226 + $0x48] sm:$0xf]
  %v2246 = vld [vmem:[%s2226 + $0x4c] sm:$0xf]
  %v2247 = vld [vmem:[%s2226 + $0x50] sm:$0xf]
  %v2248 = vld [vmem:[%s2226 + $0x54] sm:$0xf]
  %v2249 = vld [vmem:[%s2226 + $0x58] sm:$0xf]
  %v2250 = vld [vmem:[%s2226 + $0x5c] sm:$0xf]
  %v2251 = vld [vmem:[%s2226 + $0x60] sm:$0xf]
  %v2252 = vld [vmem:[%s2226 + $0x64] sm:$0xf]
  %v2253 = vld [vmem:[%s2226 + $0x68] sm:$0xf]
  %v2254 = vld [vmem:[%s2226 + $0x6c] sm:$0xf]
  %v2255 = vld [vmem:[%s2226 + $0x70] sm:$0xf]
  %v2256 = vld [vmem:[%s2226 + $0x74] sm:$0xf]
  %v2257 = vld [vmem:[%s2226 + $0x78] sm:$0xf]
  %v2258 = vld [vmem:[%s2226 + $0x7c] sm:$0xf]
  %v2259 = vld [vmem:[%s2226 + $0x80] sm:$0xf]
  %v2260 = vld [vmem:[%s2226 + $0x84] sm:$0xf]
  %v2261 = vld [vmem:[%s2226 + $0x88] sm:$0xf]
  %v2262 = vld [vmem:[%s2226 + $0x8c] sm:$0xf]
  %v2299 = vunpack.c.l.b16 %v2227
  %v2300 = vunpack.c.l.b16 %v2228
  %v2301 = vunpack.c.l.b16 %v2229
  %v2302 = vunpack.c.l.b16 %v2230
  %v2303 = vunpack.c.l.b16 %v2231
  %v2304 = vunpack.c.l.b16 %v2232
  %v2305 = vunpack.c.l.b16 %v2233
  %v2306 = vunpack.c.l.b16 %v2234
  %v2307 = vunpack.c.l.b16 %v2235
  %v2308 = vunpack.c.l.b16 %v2236
  %v2309 = vunpack.c.l.b16 %v2237
  %v2310 = vunpack.c.l.b16 %v2238
  %v2311 = vunpack.c.l.b16 %v2239
  %v2312 = vunpack.c.l.b16 %v2240
  %v2313 = vunpack.c.l.b16 %v2241
  %v2314 = vunpack.c.l.b16 %v2242
  %v2315 = vunpack.c.l.b16 %v2243
  %v2316 = vunpack.c.l.b16 %v2244
  %v2317 = vunpack.c.l.b16 %v2245
  %v2318 = vunpack.c.l.b16 %v2246
  %v2319 = vunpack.c.l.b16 %v2247
  %v2320 = vunpack.c.l.b16 %v2248
  %v2321 = vunpack.c.l.b16 %v2249
  %v2322 = vunpack.c.l.b16 %v2250
  %v2323 = vunpack.c.l.b16 %v2251
  %v2324 = vunpack.c.l.b16 %v2252
  %v2325 = vunpack.c.l.b16 %v2253
  %v2326 = vunpack.c.l.b16 %v2254
  %v2327 = vunpack.c.l.b16 %v2255
  %v2328 = vunpack.c.l.b16 %v2256
  %v2329 = vunpack.c.l.b16 %v2257
  %v2330 = vunpack.c.l.b16 %v2258
  %v2331 = vunpack.c.l.b16 %v2259
  %v2332 = vunpack.c.l.b16 %v2260
  %v2333 = vunpack.c.l.b16 %v2261
  %v2334 = vunpack.c.l.b16 %v2262
  %v2335 = vpack.c.b16 %v2300, %v2299
  %v2336 = vpack.c.b16 %v2302, %v2301
  %v2337 = vpack.c.b16 %v2304, %v2303
  %v2338 = vpack.c.b16 %v2306, %v2305
  %v2339 = vpack.c.b16 %v2308, %v2307
  %v2340 = vpack.c.b16 %v2310, %v2309
  %v2341 = vpack.c.b16 %v2312, %v2311
  %v2342 = vpack.c.b16 %v2314, %v2313
  %v2343 = vpack.c.b16 %v2316, %v2315
  %v2344 = vpack.c.b16 %v2318, %v2317
  %v2345 = vpack.c.b16 %v2320, %v2319
  %v2346 = vpack.c.b16 %v2322, %v2321
  %v2347 = vpack.c.b16 %v2324, %v2323
  %v2348 = vpack.c.b16 %v2326, %v2325
  %v2349 = vpack.c.b16 %v2328, %v2327
  %v2350 = vpack.c.b16 %v2330, %v2329
  %v2351 = vpack.c.b16 %v2332, %v2331
  %v2352 = vpack.c.b16 %v2334, %v2333
  %2371 = vmatpush.bf16.msra.mxu0 %v2342
  %2372 = vmatpush.bf16.msra.mxu0 %v2341
  %2373 = vmatpush.bf16.msra.mxu0 %v2340
  %2374 = vmatpush.bf16.msra.mxu0 %v2339
  %2375 = vmatpush.bf16.msra.mxu0 %v2338
  %2376 = vmatpush.bf16.msra.mxu0 %v2337
  %2377 = vmatpush.bf16.msra.mxu0 %v2336
  %2378 = vmatpush.bf16.msra.mxu0 %v2335
  %2379 = vmatmul.bf16.gmra.mxu0 %v973
  %v2380 = vpop.f32.mrf.mxu0
  %v2381 = vadd.f32 0.0, %v2380
  %v2382 = vpop.f32.mrf.mxu0
  %v2383 = vadd.f32 0.0, %v2382
  %2384 = vmatmul.bf16.gmra.mxu0 %v976
  %v2385 = vpop.f32.mrf.mxu0
  %v2386 = vadd.f32 0.0, %v2385
  %v2387 = vpop.f32.mrf.mxu0
  %v2388 = vadd.f32 0.0, %v2387
  %2389 = vdwg.mxu0
  %2390 = vmatpush.bf16.msra.mxu0 %v2350
  %2391 = vmatpush.bf16.msra.mxu0 %v2349
  %2392 = vmatpush.bf16.msra.mxu0 %v2348
  %2393 = vmatpush.bf16.msra.mxu0 %v2347
  %2394 = vmatpush.bf16.msra.mxu0 %v2346
  %2395 = vmatpush.bf16.msra.mxu0 %v2345
  %2396 = vmatpush.bf16.msra.mxu0 %v2344
  %2397 = vmatpush.bf16.msra.mxu0 %v2343
  %2398 = vmatmul.bf16.gmra.mxu0 %v974
  %v2399 = vpop.f32.mrf.mxu0
  %v2400 = vadd.f32 %v2381, %v2399
  %v2401 = vpop.f32.mrf.mxu0
  %v2402 = vadd.f32 %v2383, %v2401
  %2403 = vmatmul.bf16.gmra.mxu0 %v977
  %v2404 = vpop.f32.mrf.mxu0
  %v2405 = vadd.f32 %v2386, %v2404
  %v2406 = vpop.f32.mrf.mxu0
  %v2407 = vadd.f32 %v2388, %v2406
  %2408 = vdwg.mxu0
  %2409 = vmatpush.bf16.msra.mxu0 0
  %2410 = vmatpush.bf16.msra.mxu0 0
  %2411 = vmatpush.bf16.msra.mxu0 0
  %2412 = vmatpush.bf16.msra.mxu0 0
  %2413 = vmatpush.bf16.msra.mxu0 0
  %2414 = vmatpush.bf16.msra.mxu0 0
  %2415 = vmatpush.bf16.msra.mxu0 %v2352
  %2416 = vmatpush.bf16.msra.mxu0 %v2351
  %2417 = vmatmul.bf16.gmra.mxu0 %v1124
  %v2418 = vpop.f32.mrf.mxu0
  %v2419 = vadd.f32 %v2400, %v2418
  %v2420 = vpop.f32.mrf.mxu0
  %v2421 = vadd.f32 %v2402, %v2420
  %2422 = vmatmul.bf16.gmra.mxu0 %v1127
  %v2423 = vpop.f32.mrf.mxu0
  %v2424 = vadd.f32 %v2405, %v2423
  %v2425 = vpop.f32.mrf.mxu0
  %v2426 = vadd.f32 %v2407, %v2425
  %2427 = vdwg.mxu0
  %s2428 = scalar_lea.vmem [#allocation2], 192
  %2429 = vst.msk [vmem:[%s2428] sm:$0xff] %vm1186, %v2419
  %2430 = vst.msk [vmem:[%s2428 + $0x8] sm:$0xff] %vm1186, %v2421
  %2431 = vst.msk [vmem:[%s2428 + $0x10] sm:$0xff] %vm1186, %v2424
  %2432 = vst.msk [vmem:[%s2428 + $0x18] sm:$0xff] %vm1186, %v2426
  %s2433 = scalar_lea.vmem %s8, 1008
  %v2434 = vld [vmem:[%s2433] sm:$0xf]
  %v2435 = vld [vmem:[%s2433 + $0x4] sm:$0xf]
  %v2436 = vld [vmem:[%s2433 + $0x8] sm:$0xf]
  %v2437 = vld [vmem:[%s2433 + $0xc] sm:$0xf]
  %v2438 = vld [vmem:[%s2433 + $0x10] sm:$0xf]
  %v2439 = vld [vmem:[%s2433 + $0x14] sm:$0xf]
  %v2440 = vld [vmem:[%s2433 + $0x18] sm:$0xf]
  %v2441 = vld [vmem:[%s2433 + $0x1c] sm:$0xf]
  %v2442 = vld [vmem:[%s2433 + $0x20] sm:$0xf]
  %v2443 = vld [vmem:[%s2433 + $0x24] sm:$0xf]
  %v2444 = vld [vmem:[%s2433 + $0x28] sm:$0xf]
  %v2445 = vld [vmem:[%s2433 + $0x2c] sm:$0xf]
  %v2446 = vld [vmem:[%s2433 + $0x30] sm:$0xf]
  %v2447 = vld [vmem:[%s2433 + $0x34] sm:$0xf]
  %v2448 = vld [vmem:[%s2433 + $0x38] sm:$0xf]
  %v2449 = vld [vmem:[%s2433 + $0x3c] sm:$0xf]
  %v2450 = vld [vmem:[%s2433 + $0x40] sm:$0xf]
  %v2451 = vld [vmem:[%s2433 + $0x44] sm:$0xf]
  %v2452 = vld [vmem:[%s2433 + $0x48] sm:$0xf]
  %v2453 = vld [vmem:[%s2433 + $0x4c] sm:$0xf]
  %v2454 = vld [vmem:[%s2433 + $0x50] sm:$0xf]
  %v2455 = vld [vmem:[%s2433 + $0x54] sm:$0xf]
  %v2456 = vld [vmem:[%s2433 + $0x58] sm:$0xf]
  %v2457 = vld [vmem:[%s2433 + $0x5c] sm:$0xf]
  %v2458 = vld [vmem:[%s2433 + $0x60] sm:$0xf]
  %v2459 = vld [vmem:[%s2433 + $0x64] sm:$0xf]
  %v2460 = vld [vmem:[%s2433 + $0x68] sm:$0xf]
  %v2461 = vld [vmem:[%s2433 + $0x6c] sm:$0xf]
  %v2462 = vld [vmem:[%s2433 + $0x70] sm:$0xf]
  %v2463 = vld [vmem:[%s2433 + $0x74] sm:$0xf]
  %v2464 = vld [vmem:[%s2433 + $0x78] sm:$0xf]
  %v2465 = vld [vmem:[%s2433 + $0x7c] sm:$0xf]
  %v2466 = vld [vmem:[%s2433 + $0x80] sm:$0xf]
  %v2467 = vld [vmem:[%s2433 + $0x84] sm:$0xf]
  %v2468 = vld [vmem:[%s2433 + $0x88] sm:$0xf]
  %v2469 = vld [vmem:[%s2433 + $0x8c] sm:$0xf]
  %v2506 = vunpack.c.l.b16 %v2434
  %v2507 = vunpack.c.l.b16 %v2435
  %v2508 = vunpack.c.l.b16 %v2436
  %v2509 = vunpack.c.l.b16 %v2437
  %v2510 = vunpack.c.l.b16 %v2438
  %v2511 = vunpack.c.l.b16 %v2439
  %v2512 = vunpack.c.l.b16 %v2440
  %v2513 = vunpack.c.l.b16 %v2441
  %v2514 = vunpack.c.l.b16 %v2442
  %v2515 = vunpack.c.l.b16 %v2443
  %v2516 = vunpack.c.l.b16 %v2444
  %v2517 = vunpack.c.l.b16 %v2445
  %v2518 = vunpack.c.l.b16 %v2446
  %v2519 = vunpack.c.l.b16 %v2447
  %v2520 = vunpack.c.l.b16 %v2448
  %v2521 = vunpack.c.l.b16 %v2449
  %v2522 = vunpack.c.l.b16 %v2450
  %v2523 = vunpack.c.l.b16 %v2451
  %v2524 = vunpack.c.l.b16 %v2452
  %v2525 = vunpack.c.l.b16 %v2453
  %v2526 = vunpack.c.l.b16 %v2454
  %v2527 = vunpack.c.l.b16 %v2455
  %v2528 = vunpack.c.l.b16 %v2456
  %v2529 = vunpack.c.l.b16 %v2457
  %v2530 = vunpack.c.l.b16 %v2458
  %v2531 = vunpack.c.l.b16 %v2459
  %v2532 = vunpack.c.l.b16 %v2460
  %v2533 = vunpack.c.l.b16 %v2461
  %v2534 = vunpack.c.l.b16 %v2462
  %v2535 = vunpack.c.l.b16 %v2463
  %v2536 = vunpack.c.l.b16 %v2464
  %v2537 = vunpack.c.l.b16 %v2465
  %v2538 = vunpack.c.l.b16 %v2466
  %v2539 = vunpack.c.l.b16 %v2467
  %v2540 = vunpack.c.l.b16 %v2468
  %v2541 = vunpack.c.l.b16 %v2469
  %v2542 = vpack.c.b16 %v2507, %v2506
  %v2543 = vpack.c.b16 %v2509, %v2508
  %v2544 = vpack.c.b16 %v2511, %v2510
  %v2545 = vpack.c.b16 %v2513, %v2512
  %v2546 = vpack.c.b16 %v2515, %v2514
  %v2547 = vpack.c.b16 %v2517, %v2516
  %v2548 = vpack.c.b16 %v2519, %v2518
  %v2549 = vpack.c.b16 %v2521, %v2520
  %v2550 = vpack.c.b16 %v2523, %v2522
  %v2551 = vpack.c.b16 %v2525, %v2524
  %v2552 = vpack.c.b16 %v2527, %v2526
  %v2553 = vpack.c.b16 %v2529, %v2528
  %v2554 = vpack.c.b16 %v2531, %v2530
  %v2555 = vpack.c.b16 %v2533, %v2532
  %v2556 = vpack.c.b16 %v2535, %v2534
  %v2557 = vpack.c.b16 %v2537, %v2536
  %v2558 = vpack.c.b16 %v2539, %v2538
  %v2559 = vpack.c.b16 %v2541, %v2540
  %2578 = vmatpush.bf16.msra.mxu0 %v2549
  %2579 = vmatpush.bf16.msra.mxu0 %v2548
  %2580 = vmatpush.bf16.msra.mxu0 %v2547
  %2581 = vmatpush.bf16.msra.mxu0 %v2546
  %2582 = vmatpush.bf16.msra.mxu0 %v2545
  %2583 = vmatpush.bf16.msra.mxu0 %v2544
  %2584 = vmatpush.bf16.msra.mxu0 %v2543
  %2585 = vmatpush.bf16.msra.mxu0 %v2542
  %2586 = vmatmul.bf16.gmra.mxu0 %v973
  %v2587 = vpop.f32.mrf.mxu0
  %v2588 = vadd.f32 0.0, %v2587
  %v2589 = vpop.f32.mrf.mxu0
  %v2590 = vadd.f32 0.0, %v2589
  %2591 = vmatmul.bf16.gmra.mxu0 %v976
  %v2592 = vpop.f32.mrf.mxu0
  %v2593 = vadd.f32 0.0, %v2592
  %v2594 = vpop.f32.mrf.mxu0
  %v2595 = vadd.f32 0.0, %v2594
  %2596 = vdwg.mxu0
  %2597 = vmatpush.bf16.msra.mxu0 %v2557
  %2598 = vmatpush.bf16.msra.mxu0 %v2556
  %2599 = vmatpush.bf16.msra.mxu0 %v2555
  %2600 = vmatpush.bf16.msra.mxu0 %v2554
  %2601 = vmatpush.bf16.msra.mxu0 %v2553
  %2602 = vmatpush.bf16.msra.mxu0 %v2552
  %2603 = vmatpush.bf16.msra.mxu0 %v2551
  %2604 = vmatpush.bf16.msra.mxu0 %v2550
  %2605 = vmatmul.bf16.gmra.mxu0 %v974
  %v2606 = vpop.f32.mrf.mxu0
  %v2607 = vadd.f32 %v2588, %v2606
  %v2608 = vpop.f32.mrf.mxu0
  %v2609 = vadd.f32 %v2590, %v2608
  %2610 = vmatmul.bf16.gmra.mxu0 %v977
  %v2611 = vpop.f32.mrf.mxu0
  %v2612 = vadd.f32 %v2593, %v2611
  %v2613 = vpop.f32.mrf.mxu0
  %v2614 = vadd.f32 %v2595, %v2613
  %2615 = vdwg.mxu0
  %2616 = vmatpush.bf16.msra.mxu0 0
  %2617 = vmatpush.bf16.msra.mxu0 0
  %2618 = vmatpush.bf16.msra.mxu0 0
  %2619 = vmatpush.bf16.msra.mxu0 0
  %2620 = vmatpush.bf16.msra.mxu0 0
  %2621 = vmatpush.bf16.msra.mxu0 0
  %2622 = vmatpush.bf16.msra.mxu0 %v2559
  %2623 = vmatpush.bf16.msra.mxu0 %v2558
  %2624 = vmatmul.bf16.gmra.mxu0 %v1124
  %v2625 = vpop.f32.mrf.mxu0
  %v2626 = vadd.f32 %v2607, %v2625
  %v2627 = vpop.f32.mrf.mxu0
  %v2628 = vadd.f32 %v2609, %v2627
  %2629 = vmatmul.bf16.gmra.mxu0 %v1127
  %v2630 = vpop.f32.mrf.mxu0
  %v2631 = vadd.f32 %v2612, %v2630
  %v2632 = vpop.f32.mrf.mxu0
  %v2633 = vadd.f32 %v2614, %v2632
  %2634 = vdwg.mxu0
  %s2635 = scalar_lea.vmem [#allocation2], 224
  %2636 = vst.msk [vmem:[%s2635] sm:$0xff] %vm1186, %v2626
  %2637 = vst.msk [vmem:[%s2635 + $0x8] sm:$0xff] %vm1186, %v2628
  %2638 = vst.msk [vmem:[%s2635 + $0x10] sm:$0xff] %vm1186, %v2631
  %2639 = vst.msk [vmem:[%s2635 + $0x18] sm:$0xff] %vm1186, %v2633
  %v2640 = vld [vmem:[%s1] sm:$0xff]
  %v2641 = vld [vmem:[%s1 + $0x8] sm:$0xff]
  %v2642 = vld [vmem:[%s1 + $0x10] sm:$0xff]
  %v2643 = vld [vmem:[%s1 + $0x18] sm:$0xff]
  %v2644 = vld [vmem:[%s1 + $0x20] sm:$0xff]
  %v2645 = vld [vmem:[%s1 + $0x28] sm:$0xff]
  %v2646 = vld [vmem:[%s1 + $0x30] sm:$0xff]
  %v2647 = vld [vmem:[%s1 + $0x38] sm:$0xff]
  %v2648 = vld [vmem:[%s1 + $0x40] sm:$0xff]
  %v2649 = vld [vmem:[%s1 + $0x48] sm:$0xff]
  %v2650 = vld [vmem:[%s1 + $0x50] sm:$0xff]
  %v2651 = vld [vmem:[%s1 + $0x58] sm:$0xff]
  %v2652 = vld [vmem:[%s1 + $0x60] sm:$0xff]
  %v2653 = vld [vmem:[%s1 + $0x68] sm:$0xff]
  %v2654 = vld [vmem:[%s1 + $0x70] sm:$0xff]
  %v2655 = vld [vmem:[%s1 + $0x78] sm:$0xff]
  %v2656 = vld [vmem:[#allocation2] sm:$0xff]
  %v2657 = vld [vmem:[#allocation2 + $0x8] sm:$0xff]
  %v2658 = vld [vmem:[#allocation2 + $0x20] sm:$0xff]
  %v2659 = vld [vmem:[#allocation2 + $0x28] sm:$0xff]
  %v2660 = vld [vmem:[#allocation2 + $0x40] sm:$0xff]
  %v2661 = vld [vmem:[#allocation2 + $0x48] sm:$0xff]
  %v2662 = vld [vmem:[#allocation2 + $0x60] sm:$0xff]
  %v2663 = vld [vmem:[#allocation2 + $0x68] sm:$0xff]
  %v2664 = vld [vmem:[#allocation2 + $0x80] sm:$0xff]
  %v2665 = vld [vmem:[#allocation2 + $0x88] sm:$0xff]
  %v2666 = vld [vmem:[#allocation2 + $0xa0] sm:$0xff]
  %v2667 = vld [vmem:[#allocation2 + $0xa8] sm:$0xff]
  %v2668 = vld [vmem:[#allocation2 + $0xc0] sm:$0xff]
  %v2669 = vld [vmem:[#allocation2 + $0xc8] sm:$0xff]
  %v2670 = vld [vmem:[#allocation2 + $0xe0] sm:$0xff]
  %v2671 = vld [vmem:[#allocation2 + $0xe8] sm:$0xff]
  %v2672 = vpack.c.bf16 %v2656, %v2656
  %v2673 = vpack.c.bf16 %v2657, %v2657
  %v2674 = vpack.c.bf16 %v2658, %v2658
  %v2675 = vpack.c.bf16 %v2659, %v2659
  %v2676 = vpack.c.bf16 %v2660, %v2660
  %v2677 = vpack.c.bf16 %v2661, %v2661
  %v2678 = vpack.c.bf16 %v2662, %v2662
  %v2679 = vpack.c.bf16 %v2663, %v2663
  %v2680 = vpack.c.bf16 %v2664, %v2664
  %v2681 = vpack.c.bf16 %v2665, %v2665
  %v2682 = vpack.c.bf16 %v2666, %v2666
  %v2683 = vpack.c.bf16 %v2667, %v2667
  %v2684 = vpack.c.bf16 %v2668, %v2668
  %v2685 = vpack.c.bf16 %v2669, %v2669
  %v2686 = vpack.c.bf16 %v2670, %v2670
  %v2687 = vpack.c.bf16 %v2671, %v2671
  %v2704 = vunpack.c.l.b16 %v2672
  %v2705 = vunpack.c.l.b16 %v2673
  %v2706 = vunpack.c.l.b16 %v2674
  %v2707 = vunpack.c.l.b16 %v2675
  %v2708 = vunpack.c.l.b16 %v2676
  %v2709 = vunpack.c.l.b16 %v2677
  %v2710 = vunpack.c.l.b16 %v2678
  %v2711 = vunpack.c.l.b16 %v2679
  %v2712 = vunpack.c.l.b16 %v2680
  %v2713 = vunpack.c.l.b16 %v2681
  %v2714 = vunpack.c.l.b16 %v2682
  %v2715 = vunpack.c.l.b16 %v2683
  %v2716 = vunpack.c.l.b16 %v2684
  %v2717 = vunpack.c.l.b16 %v2685
  %v2718 = vunpack.c.l.b16 %v2686
  %v2719 = vunpack.c.l.b16 %v2687
  %v2720 = vpack.c.b16 %v2705, %v2704
  %v2721 = vpack.c.b16 %v2707, %v2706
  %v2722 = vpack.c.b16 %v2709, %v2708
  %v2723 = vpack.c.b16 %v2711, %v2710
  %v2724 = vpack.c.b16 %v2713, %v2712
  %v2725 = vpack.c.b16 %v2715, %v2714
  %v2726 = vpack.c.b16 %v2717, %v2716
  %v2727 = vpack.c.b16 %v2719, %v2718
  %2728 = vrot.lane.b32.xlu0 %v2720, 92
  %v2729 = vpop.permute.xlu0 %2728
  %2730 = vrot.lane.b32.xlu0 %v2721, 92
  %v2731 = vpop.permute.xlu0 %2730
  %2732 = vrot.lane.b32.xlu0 %v2722, 92
  %v2733 = vpop.permute.xlu0 %2732
  %2734 = vrot.lane.b32.xlu0 %v2723, 92
  %v2735 = vpop.permute.xlu0 %2734
  %2736 = vrot.lane.b32.xlu0 %v2724, 92
  %v2737 = vpop.permute.xlu0 %2736
  %2738 = vrot.lane.b32.xlu0 %v2725, 92
  %v2739 = vpop.permute.xlu0 %2738
  %2740 = vrot.lane.b32.xlu0 %v2726, 92
  %v2741 = vpop.permute.xlu0 %2740
  %2742 = vrot.lane.b32.xlu0 %v2727, 92
  %v2743 = vpop.permute.xlu0 %2742
  %vm2744 = vcmask 293888
  %v2746 = vsel %vm2744, %v2720, 0
  %v2749 = vsel %vm2744, %v2721, 0
  %v2752 = vsel %vm2744, %v2722, 0
  %v2755 = vsel %vm2744, %v2723, 0
  %v2758 = vsel %vm2744, %v2724, 0
  %v2761 = vsel %vm2744, %v2725, 0
  %v2764 = vsel %vm2744, %v2726, 0
  %v2767 = vsel %vm2744, %v2727, 0
  %v2770 = vsel %vm2744, %v2729, 0
  %v2773 = vsel %vm2744, %v2731, 0
  %v2776 = vsel %vm2744, %v2733, 0
  %v2779 = vsel %vm2744, %v2735, 0
  %v2782 = vsel %vm2744, %v2737, 0
  %v2785 = vsel %vm2744, %v2739, 0
  %v2788 = vsel %vm2744, %v2741, 0
  %v2791 = vsel %vm2744, %v2743, 0
  %2793 = vmatpush.bf16.xpose.msra.mxu0 %v2791
  %2794 = vmatpush.bf16.xpose.msra.mxu0 %v2788
  %2795 = vmatpush.bf16.xpose.msra.mxu0 %v2785
  %2796 = vmatpush.bf16.xpose.msra.mxu0 %v2782
  %2797 = vmatpush.bf16.xpose.msra.mxu0 %v2779
  %2798 = vmatpush.bf16.xpose.msra.mxu0 %v2776
  %2799 = vmatpush.bf16.xpose.msra.mxu0 %v2773
  %2800 = vmatpush.bf16.xpose.msra.mxu0 %v2770
  %2801 = vmatmul.bf16.gmra.mxu0 %v2746
  %v2802 = vpop.f32.mrf.mxu0
  %v2803 = vadd.f32 %v2640, %v2802
  %v2804 = vpop.f32.mrf.mxu0
  %v2805 = vadd.f32 %v2641, %v2804
  %2806 = vmatmul.bf16.gmra.mxu0 %v2749
  %v2807 = vpop.f32.mrf.mxu0
  %v2808 = vadd.f32 %v2642, %v2807
  %v2809 = vpop.f32.mrf.mxu0
  %v2810 = vadd.f32 %v2643, %v2809
  %2811 = vmatmul.bf16.gmra.mxu0 %v2752
  %v2812 = vpop.f32.mrf.mxu0
  %v2813 = vadd.f32 %v2644, %v2812
  %v2814 = vpop.f32.mrf.mxu0
  %v2815 = vadd.f32 %v2645, %v2814
  %2816 = vmatmul.bf16.gmra.mxu0 %v2755
  %v2817 = vpop.f32.mrf.mxu0
  %v2818 = vadd.f32 %v2646, %v2817
  %v2819 = vpop.f32.mrf.mxu0
  %v2820 = vadd.f32 %v2647, %v2819
  %2821 = vmatmul.bf16.gmra.mxu0 %v2758
  %v2822 = vpop.f32.mrf.mxu0
  %v2823 = vadd.f32 %v2648, %v2822
  %v2824 = vpop.f32.mrf.mxu0
  %v2825 = vadd.f32 %v2649, %v2824
  %2826 = vmatmul.bf16.gmra.mxu0 %v2761
  %v2827 = vpop.f32.mrf.mxu0
  %v2828 = vadd.f32 %v2650, %v2827
  %v2829 = vpop.f32.mrf.mxu0
  %v2830 = vadd.f32 %v2651, %v2829
  %2831 = vmatmul.bf16.gmra.mxu0 %v2764
  %v2832 = vpop.f32.mrf.mxu0
  %v2833 = vadd.f32 %v2652, %v2832
  %v2834 = vpop.f32.mrf.mxu0
  %v2835 = vadd.f32 %v2653, %v2834
  %2836 = vmatmul.bf16.gmra.mxu0 %v2767
  %v2837 = vpop.f32.mrf.mxu0
  %v2838 = vadd.f32 %v2654, %v2837
  %v2839 = vpop.f32.mrf.mxu0
  %v2840 = vadd.f32 %v2655, %v2839
  %2841 = vdwg.mxu0
  %2842 = vmax.xlane.f32.xlu0 %v2803
  %v2843 = vpop.xlane.xlu0 %2842
  %2844 = vmax.xlane.f32.xlu0 %v2805
  %v2845 = vpop.xlane.xlu0 %2844
  %2846 = vmax.xlane.f32.xlu0 %v2808
  %v2847 = vpop.xlane.xlu0 %2846
  %2848 = vmax.xlane.f32.xlu0 %v2810
  %v2849 = vpop.xlane.xlu0 %2848
  %2850 = vmax.xlane.f32.xlu0 %v2813
  %v2851 = vpop.xlane.xlu0 %2850
  %2852 = vmax.xlane.f32.xlu0 %v2815
  %v2853 = vpop.xlane.xlu0 %2852
  %2854 = vmax.xlane.f32.xlu0 %v2818
  %v2855 = vpop.xlane.xlu0 %2854
  %2856 = vmax.xlane.f32.xlu0 %v2820
  %v2857 = vpop.xlane.xlu0 %2856
  %2858 = vmax.xlane.f32.xlu0 %v2823
  %v2859 = vpop.xlane.xlu0 %2858
  %2860 = vmax.xlane.f32.xlu0 %v2825
  %v2861 = vpop.xlane.xlu0 %2860
  %2862 = vmax.xlane.f32.xlu0 %v2828
  %v2863 = vpop.xlane.xlu0 %2862
  %2864 = vmax.xlane.f32.xlu0 %v2830
  %v2865 = vpop.xlane.xlu0 %2864
  %2866 = vmax.xlane.f32.xlu0 %v2833
  %v2867 = vpop.xlane.xlu0 %2866
  %2868 = vmax.xlane.f32.xlu0 %v2835
  %v2869 = vpop.xlane.xlu0 %2868
  %2870 = vmax.xlane.f32.xlu0 %v2838
  %v2871 = vpop.xlane.xlu0 %2870
  %2872 = vmax.xlane.f32.xlu0 %v2840
  %v2873 = vpop.xlane.xlu0 %2872
  %v2874 = vsub.f32 %v2803, %v2843
  %v2875 = vsub.f32 %v2805, %v2845
  %v2876 = vsub.f32 %v2808, %v2847
  %v2877 = vsub.f32 %v2810, %v2849
  %v2878 = vsub.f32 %v2813, %v2851
  %v2879 = vsub.f32 %v2815, %v2853
  %v2880 = vsub.f32 %v2818, %v2855
  %v2881 = vsub.f32 %v2820, %v2857
  %v2882 = vsub.f32 %v2823, %v2859
  %v2883 = vsub.f32 %v2825, %v2861
  %v2884 = vsub.f32 %v2828, %v2863
  %v2885 = vsub.f32 %v2830, %v2865
  %v2886 = vsub.f32 %v2833, %v2867
  %v2887 = vsub.f32 %v2835, %v2869
  %v2888 = vsub.f32 %v2838, %v2871
  %v2889 = vsub.f32 %v2840, %v2873
  %v2890 = vmul.f32 %v2874, 1.442695
  %v2891 = vpow.pop %v2890
  %v2892 = vmul.f32 %v2875, 1.442695
  %v2893 = vpow.pop %v2892
  %v2894 = vmul.f32 %v2876, 1.442695
  %v2895 = vpow.pop %v2894
  %v2896 = vmul.f32 %v2877, 1.442695
  %v2897 = vpow.pop %v2896
  %v2898 = vmul.f32 %v2878, 1.442695
  %v2899 = vpow.pop %v2898
  %v2900 = vmul.f32 %v2879, 1.442695
  %v2901 = vpow.pop %v2900
  %v2902 = vmul.f32 %v2880, 1.442695
  %v2903 = vpow.pop %v2902
  %v2904 = vmul.f32 %v2881, 1.442695
  %v2905 = vpow.pop %v2904
  %v2906 = vmul.f32 %v2882, 1.442695
  %v2907 = vpow.pop %v2906
  %v2908 = vmul.f32 %v2883, 1.442695
  %v2909 = vpow.pop %v2908
  %v2910 = vmul.f32 %v2884, 1.442695
  %v2911 = vpow.pop %v2910
  %v2912 = vmul.f32 %v2885, 1.442695
  %v2913 = vpow.pop %v2912
  %v2914 = vmul.f32 %v2886, 1.442695
  %v2915 = vpow.pop %v2914
  %v2916 = vmul.f32 %v2887, 1.442695
  %v2917 = vpow.pop %v2916
  %v2918 = vmul.f32 %v2888, 1.442695
  %v2919 = vpow.pop %v2918
  %v2920 = vmul.f32 %v2889, 1.442695
  %v2921 = vpow.pop %v2920
  %2922 = vadd.xlane.f32.xlu0 %v2891
  %v2923 = vpop.xlane.xlu0 %2922
  %2924 = vadd.xlane.f32.xlu0 %v2893
  %v2925 = vpop.xlane.xlu0 %2924
  %2926 = vadd.xlane.f32.xlu0 %v2895
  %v2927 = vpop.xlane.xlu0 %2926
  %2928 = vadd.xlane.f32.xlu0 %v2897
  %v2929 = vpop.xlane.xlu0 %2928
  %2930 = vadd.xlane.f32.xlu0 %v2899
  %v2931 = vpop.xlane.xlu0 %2930
  %2932 = vadd.xlane.f32.xlu0 %v2901
  %v2933 = vpop.xlane.xlu0 %2932
  %2934 = vadd.xlane.f32.xlu0 %v2903
  %v2935 = vpop.xlane.xlu0 %2934
  %2936 = vadd.xlane.f32.xlu0 %v2905
  %v2937 = vpop.xlane.xlu0 %2936
  %2938 = vadd.xlane.f32.xlu0 %v2907
  %v2939 = vpop.xlane.xlu0 %2938
  %2940 = vadd.xlane.f32.xlu0 %v2909
  %v2941 = vpop.xlane.xlu0 %2940
  %2942 = vadd.xlane.f32.xlu0 %v2911
  %v2943 = vpop.xlane.xlu0 %2942
  %2944 = vadd.xlane.f32.xlu0 %v2913
  %v2945 = vpop.xlane.xlu0 %2944
  %2946 = vadd.xlane.f32.xlu0 %v2915
  %v2947 = vpop.xlane.xlu0 %2946
  %2948 = vadd.xlane.f32.xlu0 %v2917
  %v2949 = vpop.xlane.xlu0 %2948
  %2950 = vadd.xlane.f32.xlu0 %v2919
  %v2951 = vpop.xlane.xlu0 %2950
  %2952 = vadd.xlane.f32.xlu0 %v2921
  %v2953 = vpop.xlane.xlu0 %2952
  %v2954 = vrcp.pop %v2923
  %v2955 = vrcp.pop %v2925
  %v2956 = vrcp.pop %v2927
  %v2957 = vrcp.pop %v2929
  %v2958 = vrcp.pop %v2931
  %v2959 = vrcp.pop %v2933
  %v2960 = vrcp.pop %v2935
  %v2961 = vrcp.pop %v2937
  %v2962 = vrcp.pop %v2939
  %v2963 = vrcp.pop %v2941
  %v2964 = vrcp.pop %v2943
  %v2965 = vrcp.pop %v2945
  %v2966 = vrcp.pop %v2947
  %v2967 = vrcp.pop %v2949
  %v2968 = vrcp.pop %v2951
  %v2969 = vrcp.pop %v2953
  %v2970 = vmul.f32 %v2891, %v2954
  %v2971 = vmul.f32 %v2893, %v2955
  %v2972 = vmul.f32 %v2895, %v2956
  %v2973 = vmul.f32 %v2897, %v2957
  %v2974 = vmul.f32 %v2899, %v2958
  %v2975 = vmul.f32 %v2901, %v2959
  %v2976 = vmul.f32 %v2903, %v2960
  %v2977 = vmul.f32 %v2905, %v2961
  %v2978 = vmul.f32 %v2907, %v2962
  %v2979 = vmul.f32 %v2909, %v2963
  %v2980 = vmul.f32 %v2911, %v2964
  %v2981 = vmul.f32 %v2913, %v2965
  %v2982 = vmul.f32 %v2915, %v2966
  %v2983 = vmul.f32 %v2917, %v2967
  %v2984 = vmul.f32 %v2919, %v2968
  %v2985 = vmul.f32 %v2921, %v2969
  %v2986 = vpack.c.bf16 %v2971, %v2970
  %v2987 = vpack.c.bf16 %v2973, %v2972
  %v2988 = vpack.c.bf16 %v2975, %v2974
  %v2989 = vpack.c.bf16 %v2977, %v2976
  %v2990 = vpack.c.bf16 %v2979, %v2978
  %v2991 = vpack.c.bf16 %v2981, %v2980
  %v2992 = vpack.c.bf16 %v2983, %v2982
  %v2993 = vpack.c.bf16 %v2985, %v2984
  %2994 = vrot.lane.b32.xlu0 %v2720, 56
  %v2995 = vpop.permute.xlu0 %2994
  %2996 = vrot.lane.b32.xlu0 %v2721, 56
  %v2997 = vpop.permute.xlu0 %2996
  %2998 = vrot.lane.b32.xlu0 %v2722, 56
  %v2999 = vpop.permute.xlu0 %2998
  %3000 = vrot.lane.b32.xlu0 %v2723, 56
  %v3001 = vpop.permute.xlu0 %3000
  %3002 = vrot.lane.b32.xlu0 %v2724, 56
  %v3003 = vpop.permute.xlu0 %3002
  %3004 = vrot.lane.b32.xlu0 %v2725, 56
  %v3005 = vpop.permute.xlu0 %3004
  %3006 = vrot.lane.b32.xlu0 %v2726, 56
  %v3007 = vpop.permute.xlu0 %3006
  %3008 = vrot.lane.b32.xlu0 %v2727, 56
  %v3009 = vpop.permute.xlu0 %3008
  %3018 = vmatpush.bf16.msra.mxu0 %v3009
  %3019 = vmatpush.bf16.msra.mxu0 %v3007
  %3020 = vmatpush.bf16.msra.mxu0 %v3005
  %3021 = vmatpush.bf16.msra.mxu0 %v3003
  %3022 = vmatpush.bf16.msra.mxu0 %v3001
  %3023 = vmatpush.bf16.msra.mxu0 %v2999
  %3024 = vmatpush.bf16.msra.mxu0 %v2997
  %3025 = vmatpush.bf16.msra.mxu0 %v2995
  %3026 = vmatmul.bf16.gmra.mxu0 %v2986
  %v3027 = vpop.f32.mrf.mxu0
  %v3028 = vadd.f32 0.0, %v3027
  %v3029 = vpop.f32.mrf.mxu0
  %v3030 = vadd.f32 0.0, %v3029
  %3031 = vmatmul.bf16.gmra.mxu0 %v2987
  %v3032 = vpop.f32.mrf.mxu0
  %v3033 = vadd.f32 0.0, %v3032
  %v3034 = vpop.f32.mrf.mxu0
  %v3035 = vadd.f32 0.0, %v3034
  %3036 = vmatmul.bf16.gmra.mxu0 %v2988
  %v3037 = vpop.f32.mrf.mxu0
  %v3038 = vadd.f32 0.0, %v3037
  %v3039 = vpop.f32.mrf.mxu0
  %v3040 = vadd.f32 0.0, %v3039
  %3041 = vmatmul.bf16.gmra.mxu0 %v2989
  %v3042 = vpop.f32.mrf.mxu0
  %v3043 = vadd.f32 0.0, %v3042
  %v3044 = vpop.f32.mrf.mxu0
  %v3045 = vadd.f32 0.0, %v3044
  %3046 = vmatmul.bf16.gmra.mxu0 %v2990
  %v3047 = vpop.f32.mrf.mxu0
  %v3048 = vadd.f32 0.0, %v3047
  %v3049 = vpop.f32.mrf.mxu0
  %v3050 = vadd.f32 0.0, %v3049
  %3051 = vmatmul.bf16.gmra.mxu0 %v2991
  %v3052 = vpop.f32.mrf.mxu0
  %v3053 = vadd.f32 0.0, %v3052
  %v3054 = vpop.f32.mrf.mxu0
  %v3055 = vadd.f32 0.0, %v3054
  %3056 = vmatmul.bf16.gmra.mxu0 %v2992
  %v3057 = vpop.f32.mrf.mxu0
  %v3058 = vadd.f32 0.0, %v3057
  %v3059 = vpop.f32.mrf.mxu0
  %v3060 = vadd.f32 0.0, %v3059
  %3061 = vmatmul.bf16.gmra.mxu0 %v2993
  %v3062 = vpop.f32.mrf.mxu0
  %v3063 = vadd.f32 0.0, %v3062
  %v3064 = vpop.f32.mrf.mxu0
  %v3065 = vadd.f32 0.0, %v3064
  %3066 = vdwg.mxu0
  %3067 = vst.msk [vmem:[#allocation3] sm:$0xff] %vm2744, %v3028
  %3068 = vst.msk [vmem:[#allocation3 + $0x8] sm:$0xff] %vm2744, %v3030
  %3069 = vst.msk [vmem:[#allocation3 + $0x10] sm:$0xff] %vm2744, %v3033
  %3070 = vst.msk [vmem:[#allocation3 + $0x18] sm:$0xff] %vm2744, %v3035
  %3071 = vst.msk [vmem:[#allocation3 + $0x20] sm:$0xff] %vm2744, %v3038
  %3072 = vst.msk [vmem:[#allocation3 + $0x28] sm:$0xff] %vm2744, %v3040
  %3073 = vst.msk [vmem:[#allocation3 + $0x30] sm:$0xff] %vm2744, %v3043
  %3074 = vst.msk [vmem:[#allocation3 + $0x38] sm:$0xff] %vm2744, %v3045
  %3075 = vst.msk [vmem:[#allocation3 + $0x40] sm:$0xff] %vm2744, %v3048
  %3076 = vst.msk [vmem:[#allocation3 + $0x48] sm:$0xff] %vm2744, %v3050
  %3077 = vst.msk [vmem:[#allocation3 + $0x50] sm:$0xff] %vm2744, %v3053
  %3078 = vst.msk [vmem:[#allocation3 + $0x58] sm:$0xff] %vm2744, %v3055
  %3079 = vst.msk [vmem:[#allocation3 + $0x60] sm:$0xff] %vm2744, %v3058
  %3080 = vst.msk [vmem:[#allocation3 + $0x68] sm:$0xff] %vm2744, %v3060
  %3081 = vst.msk [vmem:[#allocation3 + $0x70] sm:$0xff] %vm2744, %v3063
  %3082 = vst.msk [vmem:[#allocation3 + $0x78] sm:$0xff] %vm2744, %v3065
  %v3083 = vld [vmem:[#allocation2 + $0x10] sm:$0xff]
  %v3084 = vld [vmem:[#allocation2 + $0x18] sm:$0xff]
  %v3085 = vld [vmem:[#allocation2 + $0x30] sm:$0xff]
  %v3086 = vld [vmem:[#allocation2 + $0x38] sm:$0xff]
  %v3087 = vld [vmem:[#allocation2 + $0x50] sm:$0xff]
  %v3088 = vld [vmem:[#allocation2 + $0x58] sm:$0xff]
  %v3089 = vld [vmem:[#allocation2 + $0x70] sm:$0xff]
  %v3090 = vld [vmem:[#allocation2 + $0x78] sm:$0xff]
  %v3091 = vld [vmem:[#allocation2 + $0x90] sm:$0xff]
  %v3092 = vld [vmem:[#allocation2 + $0x98] sm:$0xff]
  %v3093 = vld [vmem:[#allocation2 + $0xb0] sm:$0xff]
  %v3094 = vld [vmem:[#allocation2 + $0xb8] sm:$0xff]
  %v3095 = vld [vmem:[#allocation2 + $0xd0] sm:$0xff]
  %v3096 = vld [vmem:[#allocation2 + $0xd8] sm:$0xff]
  %v3097 = vld [vmem:[#allocation2 + $0xf0] sm:$0xff]
  %v3098 = vld [vmem:[#allocation2 + $0xf8] sm:$0xff]
  %v3099 = vpack.c.bf16 %v3083, %v3083
  %v3100 = vpack.c.bf16 %v3084, %v3084
  %v3101 = vpack.c.bf16 %v3085, %v3085
  %v3102 = vpack.c.bf16 %v3086, %v3086
  %v3103 = vpack.c.bf16 %v3087, %v3087
  %v3104 = vpack.c.bf16 %v3088, %v3088
  %v3105 = vpack.c.bf16 %v3089, %v3089
  %v3106 = vpack.c.bf16 %v3090, %v3090
  %v3107 = vpack.c.bf16 %v3091, %v3091
  %v3108 = vpack.c.bf16 %v3092, %v3092
  %v3109 = vpack.c.bf16 %v3093, %v3093
  %v3110 = vpack.c.bf16 %v3094, %v3094
  %v3111 = vpack.c.bf16 %v3095, %v3095
  %v3112 = vpack.c.bf16 %v3096, %v3096
  %v3113 = vpack.c.bf16 %v3097, %v3097
  %v3114 = vpack.c.bf16 %v3098, %v3098
  %v3131 = vunpack.c.l.b16 %v3099
  %v3132 = vunpack.c.l.b16 %v3100
  %v3133 = vunpack.c.l.b16 %v3101
  %v3134 = vunpack.c.l.b16 %v3102
  %v3135 = vunpack.c.l.b16 %v3103
  %v3136 = vunpack.c.l.b16 %v3104
  %v3137 = vunpack.c.l.b16 %v3105
  %v3138 = vunpack.c.l.b16 %v3106
  %v3139 = vunpack.c.l.b16 %v3107
  %v3140 = vunpack.c.l.b16 %v3108
  %v3141 = vunpack.c.l.b16 %v3109
  %v3142 = vunpack.c.l.b16 %v3110
  %v3143 = vunpack.c.l.b16 %v3111
  %v3144 = vunpack.c.l.b16 %v3112
  %v3145 = vunpack.c.l.b16 %v3113
  %v3146 = vunpack.c.l.b16 %v3114
  %v3147 = vpack.c.b16 %v3132, %v3131
  %v3148 = vpack.c.b16 %v3134, %v3133
  %v3149 = vpack.c.b16 %v3136, %v3135
  %v3150 = vpack.c.b16 %v3138, %v3137
  %v3151 = vpack.c.b16 %v3140, %v3139
  %v3152 = vpack.c.b16 %v3142, %v3141
  %v3153 = vpack.c.b16 %v3144, %v3143
  %v3154 = vpack.c.b16 %v3146, %v3145
  %3155 = vrot.lane.b32.xlu0 %v3147, 92
  %v3156 = vpop.permute.xlu0 %3155
  %3157 = vrot.lane.b32.xlu0 %v3148, 92
  %v3158 = vpop.permute.xlu0 %3157
  %3159 = vrot.lane.b32.xlu0 %v3149, 92
  %v3160 = vpop.permute.xlu0 %3159
  %3161 = vrot.lane.b32.xlu0 %v3150, 92
  %v3162 = vpop.permute.xlu0 %3161
  %3163 = vrot.lane.b32.xlu0 %v3151, 92
  %v3164 = vpop.permute.xlu0 %3163
  %3165 = vrot.lane.b32.xlu0 %v3152, 92
  %v3166 = vpop.permute.xlu0 %3165
  %3167 = vrot.lane.b32.xlu0 %v3153, 92
  %v3168 = vpop.permute.xlu0 %3167
  %3169 = vrot.lane.b32.xlu0 %v3154, 92
  %v3170 = vpop.permute.xlu0 %3169
  %v3172 = vsel %vm2744, %v3147, 0
  %v3175 = vsel %vm2744, %v3148, 0
  %v3178 = vsel %vm2744, %v3149, 0
  %v3181 = vsel %vm2744, %v3150, 0
  %v3184 = vsel %vm2744, %v3151, 0
  %v3187 = vsel %vm2744, %v3152, 0
  %v3190 = vsel %vm2744, %v3153, 0
  %v3193 = vsel %vm2744, %v3154, 0
  %v3196 = vsel %vm2744, %v3156, 0
  %v3199 = vsel %vm2744, %v3158, 0
  %v3202 = vsel %vm2744, %v3160, 0
  %v3205 = vsel %vm2744, %v3162, 0
  %v3208 = vsel %vm2744, %v3164, 0
  %v3211 = vsel %vm2744, %v3166, 0
  %v3214 = vsel %vm2744, %v3168, 0
  %v3217 = vsel %vm2744, %v3170, 0
  %3219 = vmatpush.bf16.xpose.msra.mxu0 %v3217
  %3220 = vmatpush.bf16.xpose.msra.mxu0 %v3214
  %3221 = vmatpush.bf16.xpose.msra.mxu0 %v3211
  %3222 = vmatpush.bf16.xpose.msra.mxu0 %v3208
  %3223 = vmatpush.bf16.xpose.msra.mxu0 %v3205
  %3224 = vmatpush.bf16.xpose.msra.mxu0 %v3202
  %3225 = vmatpush.bf16.xpose.msra.mxu0 %v3199
  %3226 = vmatpush.bf16.xpose.msra.mxu0 %v3196
  %3227 = vmatmul.bf16.gmra.mxu0 %v3172
  %v3228 = vpop.f32.mrf.mxu0
  %v3229 = vadd.f32 %v2640, %v3228
  %v3230 = vpop.f32.mrf.mxu0
  %v3231 = vadd.f32 %v2641, %v3230
  %3232 = vmatmul.bf16.gmra.mxu0 %v3175
  %v3233 = vpop.f32.mrf.mxu0
  %v3234 = vadd.f32 %v2642, %v3233
  %v3235 = vpop.f32.mrf.mxu0
  %v3236 = vadd.f32 %v2643, %v3235
  %3237 = vmatmul.bf16.gmra.mxu0 %v3178
  %v3238 = vpop.f32.mrf.mxu0
  %v3239 = vadd.f32 %v2644, %v3238
  %v3240 = vpop.f32.mrf.mxu0
  %v3241 = vadd.f32 %v2645, %v3240
  %3242 = vmatmul.bf16.gmra.mxu0 %v3181
  %v3243 = vpop.f32.mrf.mxu0
  %v3244 = vadd.f32 %v2646, %v3243
  %v3245 = vpop.f32.mrf.mxu0
  %v3246 = vadd.f32 %v2647, %v3245
  %3247 = vmatmul.bf16.gmra.mxu0 %v3184
  %v3248 = vpop.f32.mrf.mxu0
  %v3249 = vadd.f32 %v2648, %v3248
  %v3250 = vpop.f32.mrf.mxu0
  %v3251 = vadd.f32 %v2649, %v3250
  %3252 = vmatmul.bf16.gmra.mxu0 %v3187
  %v3253 = vpop.f32.mrf.mxu0
  %v3254 = vadd.f32 %v2650, %v3253
  %v3255 = vpop.f32.mrf.mxu0
  %v3256 = vadd.f32 %v2651, %v3255
  %3257 = vmatmul.bf16.gmra.mxu0 %v3190
  %v3258 = vpop.f32.mrf.mxu0
  %v3259 = vadd.f32 %v2652, %v3258
  %v3260 = vpop.f32.mrf.mxu0
  %v3261 = vadd.f32 %v2653, %v3260
  %3262 = vmatmul.bf16.gmra.mxu0 %v3193
  %v3263 = vpop.f32.mrf.mxu0
  %v3264 = vadd.f32 %v2654, %v3263
  %v3265 = vpop.f32.mrf.mxu0
  %v3266 = vadd.f32 %v2655, %v3265
  %3267 = vdwg.mxu0
  %3268 = vmax.xlane.f32.xlu0 %v3229
  %v3269 = vpop.xlane.xlu0 %3268
  %3270 = vmax.xlane.f32.xlu0 %v3231
  %v3271 = vpop.xlane.xlu0 %3270
  %3272 = vmax.xlane.f32.xlu0 %v3234
  %v3273 = vpop.xlane.xlu0 %3272
  %3274 = vmax.xlane.f32.xlu0 %v3236
  %v3275 = vpop.xlane.xlu0 %3274
  %3276 = vmax.xlane.f32.xlu0 %v3239
  %v3277 = vpop.xlane.xlu0 %3276
  %3278 = vmax.xlane.f32.xlu0 %v3241
  %v3279 = vpop.xlane.xlu0 %3278
  %3280 = vmax.xlane.f32.xlu0 %v3244
  %v3281 = vpop.xlane.xlu0 %3280
  %3282 = vmax.xlane.f32.xlu0 %v3246
  %v3283 = vpop.xlane.xlu0 %3282
  %3284 = vmax.xlane.f32.xlu0 %v3249
  %v3285 = vpop.xlane.xlu0 %3284
  %3286 = vmax.xlane.f32.xlu0 %v3251
  %v3287 = vpop.xlane.xlu0 %3286
  %3288 = vmax.xlane.f32.xlu0 %v3254
  %v3289 = vpop.xlane.xlu0 %3288
  %3290 = vmax.xlane.f32.xlu0 %v3256
  %v3291 = vpop.xlane.xlu0 %3290
  %3292 = vmax.xlane.f32.xlu0 %v3259
  %v3293 = vpop.xlane.xlu0 %3292
  %3294 = vmax.xlane.f32.xlu0 %v3261
  %v3295 = vpop.xlane.xlu0 %3294
  %3296 = vmax.xlane.f32.xlu0 %v3264
  %v3297 = vpop.xlane.xlu0 %3296
  %3298 = vmax.xlane.f32.xlu0 %v3266
  %v3299 = vpop.xlane.xlu0 %3298
  %v3300 = vsub.f32 %v3229, %v3269
  %v3301 = vsub.f32 %v3231, %v3271
  %v3302 = vsub.f32 %v3234, %v3273
  %v3303 = vsub.f32 %v3236, %v3275
  %v3304 = vsub.f32 %v3239, %v3277
  %v3305 = vsub.f32 %v3241, %v3279
  %v3306 = vsub.f32 %v3244, %v3281
  %v3307 = vsub.f32 %v3246, %v3283
  %v3308 = vsub.f32 %v3249, %v3285
  %v3309 = vsub.f32 %v3251, %v3287
  %v3310 = vsub.f32 %v3254, %v3289
  %v3311 = vsub.f32 %v3256, %v3291
  %v3312 = vsub.f32 %v3259, %v3293
  %v3313 = vsub.f32 %v3261, %v3295
  %v3314 = vsub.f32 %v3264, %v3297
  %v3315 = vsub.f32 %v3266, %v3299
  %v3316 = vmul.f32 %v3300, 1.442695
  %v3317 = vpow.pop %v3316
  %v3318 = vmul.f32 %v3301, 1.442695
  %v3319 = vpow.pop %v3318
  %v3320 = vmul.f32 %v3302, 1.442695
  %v3321 = vpow.pop %v3320
  %v3322 = vmul.f32 %v3303, 1.442695
  %v3323 = vpow.pop %v3322
  %v3324 = vmul.f32 %v3304, 1.442695
  %v3325 = vpow.pop %v3324
  %v3326 = vmul.f32 %v3305, 1.442695
  %v3327 = vpow.pop %v3326
  %v3328 = vmul.f32 %v3306, 1.442695
  %v3329 = vpow.pop %v3328
  %v3330 = vmul.f32 %v3307, 1.442695
  %v3331 = vpow.pop %v3330
  %v3332 = vmul.f32 %v3308, 1.442695
  %v3333 = vpow.pop %v3332
  %v3334 = vmul.f32 %v3309, 1.442695
  %v3335 = vpow.pop %v3334
  %v3336 = vmul.f32 %v3310, 1.442695
  %v3337 = vpow.pop %v3336
  %v3338 = vmul.f32 %v3311, 1.442695
  %v3339 = vpow.pop %v3338
  %v3340 = vmul.f32 %v3312, 1.442695
  %v3341 = vpow.pop %v3340
  %v3342 = vmul.f32 %v3313, 1.442695
  %v3343 = vpow.pop %v3342
  %v3344 = vmul.f32 %v3314, 1.442695
  %v3345 = vpow.pop %v3344
  %v3346 = vmul.f32 %v3315, 1.442695
  %v3347 = vpow.pop %v3346
  %3348 = vadd.xlane.f32.xlu0 %v3317
  %v3349 = vpop.xlane.xlu0 %3348
  %3350 = vadd.xlane.f32.xlu0 %v3319
  %v3351 = vpop.xlane.xlu0 %3350
  %3352 = vadd.xlane.f32.xlu0 %v3321
  %v3353 = vpop.xlane.xlu0 %3352
  %3354 = vadd.xlane.f32.xlu0 %v3323
  %v3355 = vpop.xlane.xlu0 %3354
  %3356 = vadd.xlane.f32.xlu0 %v3325
  %v3357 = vpop.xlane.xlu0 %3356
  %3358 = vadd.xlane.f32.xlu0 %v3327
  %v3359 = vpop.xlane.xlu0 %3358
  %3360 = vadd.xlane.f32.xlu0 %v3329
  %v3361 = vpop.xlane.xlu0 %3360
  %3362 = vadd.xlane.f32.xlu0 %v3331
  %v3363 = vpop.xlane.xlu0 %3362
  %3364 = vadd.xlane.f32.xlu0 %v3333
  %v3365 = vpop.xlane.xlu0 %3364
  %3366 = vadd.xlane.f32.xlu0 %v3335
  %v3367 = vpop.xlane.xlu0 %3366
  %3368 = vadd.xlane.f32.xlu0 %v3337
  %v3369 = vpop.xlane.xlu0 %3368
  %3370 = vadd.xlane.f32.xlu0 %v3339
  %v3371 = vpop.xlane.xlu0 %3370
  %3372 = vadd.xlane.f32.xlu0 %v3341
  %v3373 = vpop.xlane.xlu0 %3372
  %3374 = vadd.xlane.f32.xlu0 %v3343
  %v3375 = vpop.xlane.xlu0 %3374
  %3376 = vadd.xlane.f32.xlu0 %v3345
  %v3377 = vpop.xlane.xlu0 %3376
  %3378 = vadd.xlane.f32.xlu0 %v3347
  %v3379 = vpop.xlane.xlu0 %3378
  %v3380 = vrcp.pop %v3349
  %v3381 = vrcp.pop %v3351
  %v3382 = vrcp.pop %v3353
  %v3383 = vrcp.pop %v3355
  %v3384 = vrcp.pop %v3357
  %v3385 = vrcp.pop %v3359
  %v3386 = vrcp.pop %v3361
  %v3387 = vrcp.pop %v3363
  %v3388 = vrcp.pop %v3365
  %v3389 = vrcp.pop %v3367
  %v3390 = vrcp.pop %v3369
  %v3391 = vrcp.pop %v3371
  %v3392 = vrcp.pop %v3373
  %v3393 = vrcp.pop %v3375
  %v3394 = vrcp.pop %v3377
  %v3395 = vrcp.pop %v3379
  %v3396 = vmul.f32 %v3317, %v3380
  %v3397 = vmul.f32 %v3319, %v3381
  %v3398 = vmul.f32 %v3321, %v3382
  %v3399 = vmul.f32 %v3323, %v3383
  %v3400 = vmul.f32 %v3325, %v3384
  %v3401 = vmul.f32 %v3327, %v3385
  %v3402 = vmul.f32 %v3329, %v3386
  %v3403 = vmul.f32 %v3331, %v3387
  %v3404 = vmul.f32 %v3333, %v3388
  %v3405 = vmul.f32 %v3335, %v3389
  %v3406 = vmul.f32 %v3337, %v3390
  %v3407 = vmul.f32 %v3339, %v3391
  %v3408 = vmul.f32 %v3341, %v3392
  %v3409 = vmul.f32 %v3343, %v3393
  %v3410 = vmul.f32 %v3345, %v3394
  %v3411 = vmul.f32 %v3347, %v3395
  %v3412 = vpack.c.bf16 %v3397, %v3396
  %v3413 = vpack.c.bf16 %v3399, %v3398
  %v3414 = vpack.c.bf16 %v3401, %v3400
  %v3415 = vpack.c.bf16 %v3403, %v3402
  %v3416 = vpack.c.bf16 %v3405, %v3404
  %v3417 = vpack.c.bf16 %v3407, %v3406
  %v3418 = vpack.c.bf16 %v3409, %v3408
  %v3419 = vpack.c.bf16 %v3411, %v3410
  %3420 = vrot.lane.b32.xlu0 %v3147, 56
  %v3421 = vpop.permute.xlu0 %3420
  %3422 = vrot.lane.b32.xlu0 %v3148, 56
  %v3423 = vpop.permute.xlu0 %3422
  %3424 = vrot.lane.b32.xlu0 %v3149, 56
  %v3425 = vpop.permute.xlu0 %3424
  %3426 = vrot.lane.b32.xlu0 %v3150, 56
  %v3427 = vpop.permute.xlu0 %3426
  %3428 = vrot.lane.b32.xlu0 %v3151, 56
  %v3429 = vpop.permute.xlu0 %3428
  %3430 = vrot.lane.b32.xlu0 %v3152, 56
  %v3431 = vpop.permute.xlu0 %3430
  %3432 = vrot.lane.b32.xlu0 %v3153, 56
  %v3433 = vpop.permute.xlu0 %3432
  %3434 = vrot.lane.b32.xlu0 %v3154, 56
  %v3435 = vpop.permute.xlu0 %3434
  %3444 = vmatpush.bf16.msra.mxu0 %v3435
  %3445 = vmatpush.bf16.msra.mxu0 %v3433
  %3446 = vmatpush.bf16.msra.mxu0 %v3431
  %3447 = vmatpush.bf16.msra.mxu0 %v3429
  %3448 = vmatpush.bf16.msra.mxu0 %v3427
  %3449 = vmatpush.bf16.msra.mxu0 %v3425
  %3450 = vmatpush.bf16.msra.mxu0 %v3423
  %3451 = vmatpush.bf16.msra.mxu0 %v3421
  %3452 = vmatmul.bf16.gmra.mxu0 %v3412
  %v3453 = vpop.f32.mrf.mxu0
  %v3454 = vadd.f32 0.0, %v3453
  %v3455 = vpop.f32.mrf.mxu0
  %v3456 = vadd.f32 0.0, %v3455
  %3457 = vmatmul.bf16.gmra.mxu0 %v3413
  %v3458 = vpop.f32.mrf.mxu0
  %v3459 = vadd.f32 0.0, %v3458
  %v3460 = vpop.f32.mrf.mxu0
  %v3461 = vadd.f32 0.0, %v3460
  %3462 = vmatmul.bf16.gmra.mxu0 %v3414
  %v3463 = vpop.f32.mrf.mxu0
  %v3464 = vadd.f32 0.0, %v3463
  %v3465 = vpop.f32.mrf.mxu0
  %v3466 = vadd.f32 0.0, %v3465
  %3467 = vmatmul.bf16.gmra.mxu0 %v3415
  %v3468 = vpop.f32.mrf.mxu0
  %v3469 = vadd.f32 0.0, %v3468
  %v3470 = vpop.f32.mrf.mxu0
  %v3471 = vadd.f32 0.0, %v3470
  %3472 = vmatmul.bf16.gmra.mxu0 %v3416
  %v3473 = vpop.f32.mrf.mxu0
  %v3474 = vadd.f32 0.0, %v3473
  %v3475 = vpop.f32.mrf.mxu0
  %v3476 = vadd.f32 0.0, %v3475
  %3477 = vmatmul.bf16.gmra.mxu0 %v3417
  %v3478 = vpop.f32.mrf.mxu0
  %v3479 = vadd.f32 0.0, %v3478
  %v3480 = vpop.f32.mrf.mxu0
  %v3481 = vadd.f32 0.0, %v3480
  %3482 = vmatmul.bf16.gmra.mxu0 %v3418
  %v3483 = vpop.f32.mrf.mxu0
  %v3484 = vadd.f32 0.0, %v3483
  %v3485 = vpop.f32.mrf.mxu0
  %v3486 = vadd.f32 0.0, %v3485
  %3487 = vmatmul.bf16.gmra.mxu0 %v3419
  %v3488 = vpop.f32.mrf.mxu0
  %v3489 = vadd.f32 0.0, %v3488
  %v3490 = vpop.f32.mrf.mxu0
  %v3491 = vadd.f32 0.0, %v3490
  %3492 = vdwg.mxu0
  %s3493 = scalar_lea.vmem [#allocation3], 128
  %3494 = vst.msk [vmem:[%s3493] sm:$0xff] %vm2744, %v3454
  %3495 = vst.msk [vmem:[%s3493 + $0x8] sm:$0xff] %vm2744, %v3456
  %3496 = vst.msk [vmem:[%s3493 + $0x10] sm:$0xff] %vm2744, %v3459
  %3497 = vst.msk [vmem:[%s3493 + $0x18] sm:$0xff] %vm2744, %v3461
  %3498 = vst.msk [vmem:[%s3493 + $0x20] sm:$0xff] %vm2744, %v3464
  %3499 = vst.msk [vmem:[%s3493 + $0x28] sm:$0xff] %vm2744, %v3466
  %3500 = vst.msk [vmem:[%s3493 + $0x30] sm:$0xff] %vm2744, %v3469
  %3501 = vst.msk [vmem:[%s3493 + $0x38] sm:$0xff] %vm2744, %v3471
  %3502 = vst.msk [vmem:[%s3493 + $0x40] sm:$0xff] %vm2744, %v3474
  %3503 = vst.msk [vmem:[%s3493 + $0x48] sm:$0xff] %vm2744, %v3476
  %3504 = vst.msk [vmem:[%s3493 + $0x50] sm:$0xff] %vm2744, %v3479
  %3505 = vst.msk [vmem:[%s3493 + $0x58] sm:$0xff] %vm2744, %v3481
  %3506 = vst.msk [vmem:[%s3493 + $0x60] sm:$0xff] %vm2744, %v3484
  %3507 = vst.msk [vmem:[%s3493 + $0x68] sm:$0xff] %vm2744, %v3486
  %3508 = vst.msk [vmem:[%s3493 + $0x70] sm:$0xff] %vm2744, %v3489
  %3509 = vst.msk [vmem:[%s3493 + $0x78] sm:$0xff] %vm2744, %v3491
  %v3510 = vld [vmem:[#allocation3] sm:$0xff]
  %v3511 = vld [vmem:[#allocation3 + $0x8] sm:$0xff]
  %v3512 = vld [vmem:[#allocation3 + $0x80] sm:$0xff]
  %v3513 = vld [vmem:[#allocation3 + $0x88] sm:$0xff]
  %v3514 = vpack.c.bf16 %v3511, %v3510
  %v3515 = vpack.c.bf16 %v3513, %v3512
  %v3516 = vld [vmem:[%s9] sm:$0xff]
  %v3517 = vld [vmem:[%s9 + $0x8] sm:$0xf]
  %v3518 = vld [vmem:[%s9 + $0xc] sm:$0xff]
  %v3519 = vld [vmem:[%s9 + $0x14] sm:$0xf]
  %v3520 = vld [vmem:[%s9 + $0x18] sm:$0xff]
  %v3521 = vld [vmem:[%s9 + $0x20] sm:$0xf]
  %v3522 = vld [vmem:[%s9 + $0x24] sm:$0xff]
  %v3523 = vld [vmem:[%s9 + $0x2c] sm:$0xf]
  %v3524 = vld [vmem:[%s9 + $0x30] sm:$0x33]
  %v3525 = vld [vmem:[%s9 + $0x38] sm:$0x3]
  %v3526 = vld [vmem:[#allocation3 + $0x10] sm:$0xff]
  %v3527 = vld [vmem:[#allocation3 + $0x18] sm:$0xff]
  %v3528 = vld [vmem:[#allocation3 + $0x90] sm:$0xff]
  %v3529 = vld [vmem:[#allocation3 + $0x98] sm:$0xff]
  %v3530 = vpack.c.bf16 %v3527, %v3526
  %v3531 = vpack.c.bf16 %v3529, %v3528
  %s3532 = scalar_lea.vmem %s9, 60
  %v3533 = vld [vmem:[%s3532] sm:$0xff]
  %v3534 = vld [vmem:[%s3532 + $0x8] sm:$0xf]
  %v3535 = vld [vmem:[%s3532 + $0xc] sm:$0xff]
  %v3536 = vld [vmem:[%s3532 + $0x14] sm:$0xf]
  %v3537 = vld [vmem:[%s3532 + $0x18] sm:$0xff]
  %v3538 = vld [vmem:[%s3532 + $0x20] sm:$0xf]
  %v3539 = vld [vmem:[%s3532 + $0x24] sm:$0xff]
  %v3540 = vld [vmem:[%s3532 + $0x2c] sm:$0xf]
  %v3541 = vld [vmem:[%s3532 + $0x30] sm:$0x33]
  %v3542 = vld [vmem:[%s3532 + $0x38] sm:$0x3]
  %v3553 = vunpack.c.l.b16 %v3533
  %v3554 = vunpack.c.h.b16 %v3533
  %v3555 = vunpack.c.l.b16 %v3534
  %v3556 = vunpack.c.l.b16 %v3535
  %v3557 = vunpack.c.h.b16 %v3535
  %v3558 = vunpack.c.l.b16 %v3536
  %v3559 = vunpack.c.l.b16 %v3537
  %v3560 = vunpack.c.h.b16 %v3537
  %v3561 = vunpack.c.l.b16 %v3538
  %v3562 = vunpack.c.l.b16 %v3539
  %v3563 = vunpack.c.h.b16 %v3539
  %v3564 = vunpack.c.l.b16 %v3540
  %v3565 = vunpack.c.l.b16 %v3541
  %v3566 = vunpack.c.h.b16 %v3541
  %v3567 = vunpack.c.l.b16 %v3542
  %v3568 = vpack.c.b16 %v3556, %v3553
  %v3569 = vpack.c.b16 %v3557, %v3554
  %v3570 = vpack.c.b16 %v3558, %v3555
  %v3571 = vpack.c.b16 %v3562, %v3559
  %v3572 = vpack.c.b16 %v3563, %v3560
  %v3573 = vpack.c.b16 %v3564, %v3561
  %v3574 = vpack.c.b16 %v3565, %v3565
  %v3575 = vpack.c.b16 %v3566, %v3566
  %v3576 = vpack.c.b16 %v3567, %v3567
  %v3584 = vsel %vm2744, %v3530, 0
  %v3587 = vsel %vm2744, %v3531, 0
  %vm3589 = vcmask 1041408
  %v3591 = vsel %vm3589, %v3574, 0
  %v3594 = vsel %vm3589, %v3575, 0
  %v3597 = vsel %vm3589, %v3576, 0
  %3599 = vmatpush.bf16.msra.mxu0 0
  %3600 = vmatpush.bf16.msra.mxu0 0
  %3601 = vmatpush.bf16.msra.mxu0 0
  %3602 = vmatpush.bf16.msra.mxu0 0
  %3603 = vmatpush.bf16.msra.mxu0 0
  %3604 = vmatpush.bf16.msra.mxu0 %v3591
  %3605 = vmatpush.bf16.msra.mxu0 %v3571
  %3606 = vmatpush.bf16.msra.mxu0 %v3568
  %3607 = vmatmul.bf16.gmra.mxu0 %v3584
  %v3608 = vpop.f32.mrf.mxu0
  %v3609 = vadd.f32 0.0, %v3608
  %v3610 = vpop.f32.mrf.mxu0
  %v3611 = vadd.f32 0.0, %v3610
  %3612 = vmatmul.bf16.gmra.mxu0 %v3587
  %v3613 = vpop.f32.mrf.mxu0
  %v3614 = vadd.f32 0.0, %v3613
  %v3615 = vpop.f32.mrf.mxu0
  %v3616 = vadd.f32 0.0, %v3615
  %3617 = vdwg.mxu0
  %3618 = vmatpush.bf16.msra.mxu0 0
  %3619 = vmatpush.bf16.msra.mxu0 0
  %3620 = vmatpush.bf16.msra.mxu0 0
  %3621 = vmatpush.bf16.msra.mxu0 0
  %3622 = vmatpush.bf16.msra.mxu0 0
  %3623 = vmatpush.bf16.msra.mxu0 %v3594
  %3624 = vmatpush.bf16.msra.mxu0 %v3572
  %3625 = vmatpush.bf16.msra.mxu0 %v3569
  %3626 = vmatmul.bf16.gmra.mxu0 %v3584
  %v3627 = vpop.f32.mrf.mxu0
  %v3628 = vadd.f32 0.0, %v3627
  %v3629 = vpop.f32.mrf.mxu0
  %v3630 = vadd.f32 0.0, %v3629
  %3631 = vmatmul.bf16.gmra.mxu0 %v3587
  %v3632 = vpop.f32.mrf.mxu0
  %v3633 = vadd.f32 0.0, %v3632
  %v3634 = vpop.f32.mrf.mxu0
  %v3635 = vadd.f32 0.0, %v3634
  %3636 = vdwg.mxu0
  %3637 = vmatpush.bf16.msra.mxu0 0
  %3638 = vmatpush.bf16.msra.mxu0 0
  %3639 = vmatpush.bf16.msra.mxu0 0
  %3640 = vmatpush.bf16.msra.mxu0 0
  %3641 = vmatpush.bf16.msra.mxu0 0
  %3642 = vmatpush.bf16.msra.mxu0 %v3597
  %3643 = vmatpush.bf16.msra.mxu0 %v3573
  %3644 = vmatpush.bf16.msra.mxu0 %v3570
  %3645 = vmatmul.bf16.gmra.mxu0 %v3584
  %v3646 = vpop.f32.mrf.mxu0
  %v3647 = vadd.f32 0.0, %v3646
  %v3648 = vpop.f32.mrf.mxu0
  %v3649 = vadd.f32 0.0, %v3648
  %3650 = vmatmul.bf16.gmra.mxu0 %v3587
  %v3651 = vpop.f32.mrf.mxu0
  %v3652 = vadd.f32 0.0, %v3651
  %v3653 = vpop.f32.mrf.mxu0
  %v3654 = vadd.f32 0.0, %v3653
  %3655 = vdwg.mxu0
  %v3666 = vunpack.c.l.b16 %v3516
  %v3667 = vunpack.c.h.b16 %v3516
  %v3668 = vunpack.c.l.b16 %v3517
  %v3669 = vunpack.c.l.b16 %v3518
  %v3670 = vunpack.c.h.b16 %v3518
  %v3671 = vunpack.c.l.b16 %v3519
  %v3672 = vunpack.c.l.b16 %v3520
  %v3673 = vunpack.c.h.b16 %v3520
  %v3674 = vunpack.c.l.b16 %v3521
  %v3675 = vunpack.c.l.b16 %v3522
  %v3676 = vunpack.c.h.b16 %v3522
  %v3677 = vunpack.c.l.b16 %v3523
  %v3678 = vunpack.c.l.b16 %v3524
  %v3679 = vunpack.c.h.b16 %v3524
  %v3680 = vunpack.c.l.b16 %v3525
  %v3681 = vpack.c.b16 %v3669, %v3666
  %v3682 = vpack.c.b16 %v3670, %v3667
  %v3683 = vpack.c.b16 %v3671, %v3668
  %v3684 = vpack.c.b16 %v3675, %v3672
  %v3685 = vpack.c.b16 %v3676, %v3673
  %v3686 = vpack.c.b16 %v3677, %v3674
  %v3687 = vpack.c.b16 %v3678, %v3678
  %v3688 = vpack.c.b16 %v3679, %v3679
  %v3689 = vpack.c.b16 %v3680, %v3680
  %v3697 = vsel %vm2744, %v3514, 0
  %v3700 = vsel %vm2744, %v3515, 0
  %v3703 = vsel %vm3589, %v3687, 0
  %v3706 = vsel %vm3589, %v3688, 0
  %v3709 = vsel %vm3589, %v3689, 0
  %3711 = vmatpush.bf16.msra.mxu0 0
  %3712 = vmatpush.bf16.msra.mxu0 0
  %3713 = vmatpush.bf16.msra.mxu0 0
  %3714 = vmatpush.bf16.msra.mxu0 0
  %3715 = vmatpush.bf16.msra.mxu0 0
  %3716 = vmatpush.bf16.msra.mxu0 %v3703
  %3717 = vmatpush.bf16.msra.mxu0 %v3684
  %3718 = vmatpush.bf16.msra.mxu0 %v3681
  %3719 = vmatmul.bf16.gmra.mxu0 %v3697
  %v3720 = vpop.f32.mrf.mxu0
  %v3721 = vadd.f32 %v3609, %v3720
  %v3722 = vpop.f32.mrf.mxu0
  %v3723 = vadd.f32 %v3611, %v3722
  %3724 = vmatmul.bf16.gmra.mxu0 %v3700
  %v3725 = vpop.f32.mrf.mxu0
  %v3726 = vadd.f32 %v3614, %v3725
  %v3727 = vpop.f32.mrf.mxu0
  %v3728 = vadd.f32 %v3616, %v3727
  %3729 = vdwg.mxu0
  %3730 = vmatpush.bf16.msra.mxu0 0
  %3731 = vmatpush.bf16.msra.mxu0 0
  %3732 = vmatpush.bf16.msra.mxu0 0
  %3733 = vmatpush.bf16.msra.mxu0 0
  %3734 = vmatpush.bf16.msra.mxu0 0
  %3735 = vmatpush.bf16.msra.mxu0 %v3706
  %3736 = vmatpush.bf16.msra.mxu0 %v3685
  %3737 = vmatpush.bf16.msra.mxu0 %v3682
  %3738 = vmatmul.bf16.gmra.mxu0 %v3697
  %v3739 = vpop.f32.mrf.mxu0
  %v3740 = vadd.f32 %v3628, %v3739
  %v3741 = vpop.f32.mrf.mxu0
  %v3742 = vadd.f32 %v3630, %v3741
  %3743 = vmatmul.bf16.gmra.mxu0 %v3700
  %v3744 = vpop.f32.mrf.mxu0
  %v3745 = vadd.f32 %v3633, %v3744
  %v3746 = vpop.f32.mrf.mxu0
  %v3747 = vadd.f32 %v3635, %v3746
  %3748 = vdwg.mxu0
  %3749 = vmatpush.bf16.msra.mxu0 0
  %3750 = vmatpush.bf16.msra.mxu0 0
  %3751 = vmatpush.bf16.msra.mxu0 0
  %3752 = vmatpush.bf16.msra.mxu0 0
  %3753 = vmatpush.bf16.msra.mxu0 0
  %3754 = vmatpush.bf16.msra.mxu0 %v3709
  %3755 = vmatpush.bf16.msra.mxu0 %v3686
  %3756 = vmatpush.bf16.msra.mxu0 %v3683
  %3757 = vmatmul.bf16.gmra.mxu0 %v3697
  %v3758 = vpop.f32.mrf.mxu0
  %v3759 = vadd.f32 %v3647, %v3758
  %v3760 = vpop.f32.mrf.mxu0
  %v3761 = vadd.f32 %v3649, %v3760
  %3762 = vmatmul.bf16.gmra.mxu0 %v3700
  %v3763 = vpop.f32.mrf.mxu0
  %v3764 = vadd.f32 %v3652, %v3763
  %v3765 = vpop.f32.mrf.mxu0
  %v3766 = vadd.f32 %v3654, %v3765
  %3767 = vdwg.mxu0
  %v3768 = vld [vmem:[#allocation3 + $0x20] sm:$0xff]
  %v3769 = vld [vmem:[#allocation3 + $0x28] sm:$0xff]
  %v3770 = vld [vmem:[#allocation3 + $0xa0] sm:$0xff]
  %v3771 = vld [vmem:[#allocation3 + $0xa8] sm:$0xff]
  %v3772 = vpack.c.bf16 %v3769, %v3768
  %v3773 = vpack.c.bf16 %v3771, %v3770
  %s3774 = scalar_lea.vmem %s9, 120
  %v3775 = vld [vmem:[%s3774] sm:$0xff]
  %v3776 = vld [vmem:[%s3774 + $0x8] sm:$0xf]
  %v3777 = vld [vmem:[%s3774 + $0xc] sm:$0xff]
  %v3778 = vld [vmem:[%s3774 + $0x14] sm:$0xf]
  %v3779 = vld [vmem:[%s3774 + $0x18] sm:$0xff]
  %v3780 = vld [vmem:[%s3774 + $0x20] sm:$0xf]
  %v3781 = vld [vmem:[%s3774 + $0x24] sm:$0xff]
  %v3782 = vld [vmem:[%s3774 + $0x2c] sm:$0xf]
  %v3783 = vld [vmem:[%s3774 + $0x30] sm:$0x33]
  %v3784 = vld [vmem:[%s3774 + $0x38] sm:$0x3]
  %v3795 = vunpack.c.l.b16 %v3775
  %v3796 = vunpack.c.h.b16 %v3775
  %v3797 = vunpack.c.l.b16 %v3776
  %v3798 = vunpack.c.l.b16 %v3777
  %v3799 = vunpack.c.h.b16 %v3777
  %v3800 = vunpack.c.l.b16 %v3778
  %v3801 = vunpack.c.l.b16 %v3779
  %v3802 = vunpack.c.h.b16 %v3779
  %v3803 = vunpack.c.l.b16 %v3780
  %v3804 = vunpack.c.l.b16 %v3781
  %v3805 = vunpack.c.h.b16 %v3781
  %v3806 = vunpack.c.l.b16 %v3782
  %v3807 = vunpack.c.l.b16 %v3783
  %v3808 = vunpack.c.h.b16 %v3783
  %v3809 = vunpack.c.l.b16 %v3784
  %v3810 = vpack.c.b16 %v3798, %v3795
  %v3811 = vpack.c.b16 %v3799, %v3796
  %v3812 = vpack.c.b16 %v3800, %v3797
  %v3813 = vpack.c.b16 %v3804, %v3801
  %v3814 = vpack.c.b16 %v3805, %v3802
  %v3815 = vpack.c.b16 %v3806, %v3803
  %v3816 = vpack.c.b16 %v3807, %v3807
  %v3817 = vpack.c.b16 %v3808, %v3808
  %v3818 = vpack.c.b16 %v3809, %v3809
  %v3826 = vsel %vm2744, %v3772, 0
  %v3829 = vsel %vm2744, %v3773, 0
  %v3832 = vsel %vm3589, %v3816, 0
  %v3835 = vsel %vm3589, %v3817, 0
  %v3838 = vsel %vm3589, %v3818, 0
  %3840 = vmatpush.bf16.msra.mxu0 0
  %3841 = vmatpush.bf16.msra.mxu0 0
  %3842 = vmatpush.bf16.msra.mxu0 0
  %3843 = vmatpush.bf16.msra.mxu0 0
  %3844 = vmatpush.bf16.msra.mxu0 0
  %3845 = vmatpush.bf16.msra.mxu0 %v3832
  %3846 = vmatpush.bf16.msra.mxu0 %v3813
  %3847 = vmatpush.bf16.msra.mxu0 %v3810
  %3848 = vmatmul.bf16.gmra.mxu0 %v3826
  %v3849 = vpop.f32.mrf.mxu0
  %v3850 = vadd.f32 0.0, %v3849
  %v3851 = vpop.f32.mrf.mxu0
  %v3852 = vadd.f32 0.0, %v3851
  %3853 = vmatmul.bf16.gmra.mxu0 %v3829
  %v3854 = vpop.f32.mrf.mxu0
  %v3855 = vadd.f32 0.0, %v3854
  %v3856 = vpop.f32.mrf.mxu0
  %v3857 = vadd.f32 0.0, %v3856
  %3858 = vdwg.mxu0
  %3859 = vmatpush.bf16.msra.mxu0 0
  %3860 = vmatpush.bf16.msra.mxu0 0
  %3861 = vmatpush.bf16.msra.mxu0 0
  %3862 = vmatpush.bf16.msra.mxu0 0
  %3863 = vmatpush.bf16.msra.mxu0 0
  %3864 = vmatpush.bf16.msra.mxu0 %v3835
  %3865 = vmatpush.bf16.msra.mxu0 %v3814
  %3866 = vmatpush.bf16.msra.mxu0 %v3811
  %3867 = vmatmul.bf16.gmra.mxu0 %v3826
  %v3868 = vpop.f32.mrf.mxu0
  %v3869 = vadd.f32 0.0, %v3868
  %v3870 = vpop.f32.mrf.mxu0
  %v3871 = vadd.f32 0.0, %v3870
  %3872 = vmatmul.bf16.gmra.mxu0 %v3829
  %v3873 = vpop.f32.mrf.mxu0
  %v3874 = vadd.f32 0.0, %v3873
  %v3875 = vpop.f32.mrf.mxu0
  %v3876 = vadd.f32 0.0, %v3875
  %3877 = vdwg.mxu0
  %3878 = vmatpush.bf16.msra.mxu0 0
  %3879 = vmatpush.bf16.msra.mxu0 0
  %3880 = vmatpush.bf16.msra.mxu0 0
  %3881 = vmatpush.bf16.msra.mxu0 0
  %3882 = vmatpush.bf16.msra.mxu0 0
  %3883 = vmatpush.bf16.msra.mxu0 %v3838
  %3884 = vmatpush.bf16.msra.mxu0 %v3815
  %3885 = vmatpush.bf16.msra.mxu0 %v3812
  %3886 = vmatmul.bf16.gmra.mxu0 %v3826
  %v3887 = vpop.f32.mrf.mxu0
  %v3888 = vadd.f32 0.0, %v3887
  %v3889 = vpop.f32.mrf.mxu0
  %v3890 = vadd.f32 0.0, %v3889
  %3891 = vmatmul.bf16.gmra.mxu0 %v3829
  %v3892 = vpop.f32.mrf.mxu0
  %v3893 = vadd.f32 0.0, %v3892
  %v3894 = vpop.f32.mrf.mxu0
  %v3895 = vadd.f32 0.0, %v3894
  %3896 = vdwg.mxu0
  %v3897 = vadd.f32 %v3721, %v3850
  %v3898 = vadd.f32 %v3740, %v3869
  %v3899 = vadd.f32 %v3759, %v3888
  %v3900 = vadd.f32 %v3723, %v3852
  %v3901 = vadd.f32 %v3742, %v3871
  %v3902 = vadd.f32 %v3761, %v3890
  %v3903 = vadd.f32 %v3726, %v3855
  %v3904 = vadd.f32 %v3745, %v3874
  %v3905 = vadd.f32 %v3764, %v3893
  %v3906 = vadd.f32 %v3728, %v3857
  %v3907 = vadd.f32 %v3747, %v3876
  %v3908 = vadd.f32 %v3766, %v3895
  %v3909 = vld [vmem:[#allocation3 + $0x30] sm:$0xff]
  %v3910 = vld [vmem:[#allocation3 + $0x38] sm:$0xff]
  %v3911 = vld [vmem:[#allocation3 + $0xb0] sm:$0xff]
  %v3912 = vld [vmem:[#allocation3 + $0xb8] sm:$0xff]
  %v3913 = vpack.c.bf16 %v3910, %v3909
  %v3914 = vpack.c.bf16 %v3912, %v3911
  %s3915 = scalar_lea.vmem %s9, 180
  %v3916 = vld [vmem:[%s3915] sm:$0xff]
  %v3917 = vld [vmem:[%s3915 + $0x8] sm:$0xf]
  %v3918 = vld [vmem:[%s3915 + $0xc] sm:$0xff]
  %v3919 = vld [vmem:[%s3915 + $0x14] sm:$0xf]
  %v3920 = vld [vmem:[%s3915 + $0x18] sm:$0xff]
  %v3921 = vld [vmem:[%s3915 + $0x20] sm:$0xf]
  %v3922 = vld [vmem:[%s3915 + $0x24] sm:$0xff]
  %v3923 = vld [vmem:[%s3915 + $0x2c] sm:$0xf]
  %v3924 = vld [vmem:[%s3915 + $0x30] sm:$0x33]
  %v3925 = vld [vmem:[%s3915 + $0x38] sm:$0x3]
  %v3936 = vunpack.c.l.b16 %v3916
  %v3937 = vunpack.c.h.b16 %v3916
  %v3938 = vunpack.c.l.b16 %v3917
  %v3939 = vunpack.c.l.b16 %v3918
  %v3940 = vunpack.c.h.b16 %v3918
  %v3941 = vunpack.c.l.b16 %v3919
  %v3942 = vunpack.c.l.b16 %v3920
  %v3943 = vunpack.c.h.b16 %v3920
  %v3944 = vunpack.c.l.b16 %v3921
  %v3945 = vunpack.c.l.b16 %v3922
  %v3946 = vunpack.c.h.b16 %v3922
  %v3947 = vunpack.c.l.b16 %v3923
  %v3948 = vunpack.c.l.b16 %v3924
  %v3949 = vunpack.c.h.b16 %v3924
  %v3950 = vunpack.c.l.b16 %v3925
  %v3951 = vpack.c.b16 %v3939, %v3936
  %v3952 = vpack.c.b16 %v3940, %v3937
  %v3953 = vpack.c.b16 %v3941, %v3938
  %v3954 = vpack.c.b16 %v3945, %v3942
  %v3955 = vpack.c.b16 %v3946, %v3943
  %v3956 = vpack.c.b16 %v3947, %v3944
  %v3957 = vpack.c.b16 %v3948, %v3948
  %v3958 = vpack.c.b16 %v3949, %v3949
  %v3959 = vpack.c.b16 %v3950, %v3950
  %v3967 = vsel %vm2744, %v3913, 0
  %v3970 = vsel %vm2744, %v3914, 0
  %v3973 = vsel %vm3589, %v3957, 0
  %v3976 = vsel %vm3589, %v3958, 0
  %v3979 = vsel %vm3589, %v3959, 0
  %3981 = vmatpush.bf16.msra.mxu0 0
  %3982 = vmatpush.bf16.msra.mxu0 0
  %3983 = vmatpush.bf16.msra.mxu0 0
  %3984 = vmatpush.bf16.msra.mxu0 0
  %3985 = vmatpush.bf16.msra.mxu0 0
  %3986 = vmatpush.bf16.msra.mxu0 %v3973
  %3987 = vmatpush.bf16.msra.mxu0 %v3954
  %3988 = vmatpush.bf16.msra.mxu0 %v3951
  %3989 = vmatmul.bf16.gmra.mxu0 %v3967
  %v3990 = vpop.f32.mrf.mxu0
  %v3991 = vadd.f32 0.0, %v3990
  %v3992 = vpop.f32.mrf.mxu0
  %v3993 = vadd.f32 0.0, %v3992
  %3994 = vmatmul.bf16.gmra.mxu0 %v3970
  %v3995 = vpop.f32.mrf.mxu0
  %v3996 = vadd.f32 0.0, %v3995
  %v3997 = vpop.f32.mrf.mxu0
  %v3998 = vadd.f32 0.0, %v3997
  %3999 = vdwg.mxu0
  %4000 = vmatpush.bf16.msra.mxu0 0
  %4001 = vmatpush.bf16.msra.mxu0 0
  %4002 = vmatpush.bf16.msra.mxu0 0
  %4003 = vmatpush.bf16.msra.mxu0 0
  %4004 = vmatpush.bf16.msra.mxu0 0
  %4005 = vmatpush.bf16.msra.mxu0 %v3976
  %4006 = vmatpush.bf16.msra.mxu0 %v3955
  %4007 = vmatpush.bf16.msra.mxu0 %v3952
  %4008 = vmatmul.bf16.gmra.mxu0 %v3967
  %v4009 = vpop.f32.mrf.mxu0
  %v4010 = vadd.f32 0.0, %v4009
  %v4011 = vpop.f32.mrf.mxu0
  %v4012 = vadd.f32 0.0, %v4011
  %4013 = vmatmul.bf16.gmra.mxu0 %v3970
  %v4014 = vpop.f32.mrf.mxu0
  %v4015 = vadd.f32 0.0, %v4014
  %v4016 = vpop.f32.mrf.mxu0
  %v4017 = vadd.f32 0.0, %v4016
  %4018 = vdwg.mxu0
  %4019 = vmatpush.bf16.msra.mxu0 0
  %4020 = vmatpush.bf16.msra.mxu0 0
  %4021 = vmatpush.bf16.msra.mxu0 0
  %4022 = vmatpush.bf16.msra.mxu0 0
  %4023 = vmatpush.bf16.msra.mxu0 0
  %4024 = vmatpush.bf16.msra.mxu0 %v3979
  %4025 = vmatpush.bf16.msra.mxu0 %v3956
  %4026 = vmatpush.bf16.msra.mxu0 %v3953
  %4027 = vmatmul.bf16.gmra.mxu0 %v3967
  %v4028 = vpop.f32.mrf.mxu0
  %v4029 = vadd.f32 0.0, %v4028
  %v4030 = vpop.f32.mrf.mxu0
  %v4031 = vadd.f32 0.0, %v4030
  %4032 = vmatmul.bf16.gmra.mxu0 %v3970
  %v4033 = vpop.f32.mrf.mxu0
  %v4034 = vadd.f32 0.0, %v4033
  %v4035 = vpop.f32.mrf.mxu0
  %v4036 = vadd.f32 0.0, %v4035
  %4037 = vdwg.mxu0
  %v4038 = vadd.f32 %v3897, %v3991
  %v4039 = vadd.f32 %v3898, %v4010
  %v4040 = vadd.f32 %v3899, %v4029
  %v4041 = vadd.f32 %v3900, %v3993
  %v4042 = vadd.f32 %v3901, %v4012
  %v4043 = vadd.f32 %v3902, %v4031
  %v4044 = vadd.f32 %v3903, %v3996
  %v4045 = vadd.f32 %v3904, %v4015
  %v4046 = vadd.f32 %v3905, %v4034
  %v4047 = vadd.f32 %v3906, %v3998
  %v4048 = vadd.f32 %v3907, %v4017
  %v4049 = vadd.f32 %v3908, %v4036
  %v4050 = vld [vmem:[#allocation3 + $0x40] sm:$0xff]
  %v4051 = vld [vmem:[#allocation3 + $0x48] sm:$0xff]
  %v4052 = vld [vmem:[#allocation3 + $0xc0] sm:$0xff]
  %v4053 = vld [vmem:[#allocation3 + $0xc8] sm:$0xff]
  %v4054 = vpack.c.bf16 %v4051, %v4050
  %v4055 = vpack.c.bf16 %v4053, %v4052
  %s4056 = scalar_lea.vmem %s9, 240
  %v4057 = vld [vmem:[%s4056] sm:$0xff]
  %v4058 = vld [vmem:[%s4056 + $0x8] sm:$0xf]
  %v4059 = vld [vmem:[%s4056 + $0xc] sm:$0xff]
  %v4060 = vld [vmem:[%s4056 + $0x14] sm:$0xf]
  %v4061 = vld [vmem:[%s4056 + $0x18] sm:$0xff]
  %v4062 = vld [vmem:[%s4056 + $0x20] sm:$0xf]
  %v4063 = vld [vmem:[%s4056 + $0x24] sm:$0xff]
  %v4064 = vld [vmem:[%s4056 + $0x2c] sm:$0xf]
  %v4065 = vld [vmem:[%s4056 + $0x30] sm:$0x33]
  %v4066 = vld [vmem:[%s4056 + $0x38] sm:$0x3]
  %v4077 = vunpack.c.l.b16 %v4057
  %v4078 = vunpack.c.h.b16 %v4057
  %v4079 = vunpack.c.l.b16 %v4058
  %v4080 = vunpack.c.l.b16 %v4059
  %v4081 = vunpack.c.h.b16 %v4059
  %v4082 = vunpack.c.l.b16 %v4060
  %v4083 = vunpack.c.l.b16 %v4061
  %v4084 = vunpack.c.h.b16 %v4061
  %v4085 = vunpack.c.l.b16 %v4062
  %v4086 = vunpack.c.l.b16 %v4063
  %v4087 = vunpack.c.h.b16 %v4063
  %v4088 = vunpack.c.l.b16 %v4064
  %v4089 = vunpack.c.l.b16 %v4065
  %v4090 = vunpack.c.h.b16 %v4065
  %v4091 = vunpack.c.l.b16 %v4066
  %v4092 = vpack.c.b16 %v4080, %v4077
  %v4093 = vpack.c.b16 %v4081, %v4078
  %v4094 = vpack.c.b16 %v4082, %v4079
  %v4095 = vpack.c.b16 %v4086, %v4083
  %v4096 = vpack.c.b16 %v4087, %v4084
  %v4097 = vpack.c.b16 %v4088, %v4085
  %v4098 = vpack.c.b16 %v4089, %v4089
  %v4099 = vpack.c.b16 %v4090, %v4090
  %v4100 = vpack.c.b16 %v4091, %v4091
  %v4108 = vsel %vm2744, %v4054, 0
  %v4111 = vsel %vm2744, %v4055, 0
  %v4114 = vsel %vm3589, %v4098, 0
  %v4117 = vsel %vm3589, %v4099, 0
  %v4120 = vsel %vm3589, %v4100, 0
  %4122 = vmatpush.bf16.msra.mxu0 0
  %4123 = vmatpush.bf16.msra.mxu0 0
  %4124 = vmatpush.bf16.msra.mxu0 0
  %4125 = vmatpush.bf16.msra.mxu0 0
  %4126 = vmatpush.bf16.msra.mxu0 0
  %4127 = vmatpush.bf16.msra.mxu0 %v4114
  %4128 = vmatpush.bf16.msra.mxu0 %v4095
  %4129 = vmatpush.bf16.msra.mxu0 %v4092
  %4130 = vmatmul.bf16.gmra.mxu0 %v4108
  %v4131 = vpop.f32.mrf.mxu0
  %v4132 = vadd.f32 0.0, %v4131
  %v4133 = vpop.f32.mrf.mxu0
  %v4134 = vadd.f32 0.0, %v4133
  %4135 = vmatmul.bf16.gmra.mxu0 %v4111
  %v4136 = vpop.f32.mrf.mxu0
  %v4137 = vadd.f32 0.0, %v4136
  %v4138 = vpop.f32.mrf.mxu0
  %v4139 = vadd.f32 0.0, %v4138
  %4140 = vdwg.mxu0
  %4141 = vmatpush.bf16.msra.mxu0 0
  %4142 = vmatpush.bf16.msra.mxu0 0
  %4143 = vmatpush.bf16.msra.mxu0 0
  %4144 = vmatpush.bf16.msra.mxu0 0
  %4145 = vmatpush.bf16.msra.mxu0 0
  %4146 = vmatpush.bf16.msra.mxu0 %v4117
  %4147 = vmatpush.bf16.msra.mxu0 %v4096
  %4148 = vmatpush.bf16.msra.mxu0 %v4093
  %4149 = vmatmul.bf16.gmra.mxu0 %v4108
  %v4150 = vpop.f32.mrf.mxu0
  %v4151 = vadd.f32 0.0, %v4150
  %v4152 = vpop.f32.mrf.mxu0
  %v4153 = vadd.f32 0.0, %v4152
  %4154 = vmatmul.bf16.gmra.mxu0 %v4111
  %v4155 = vpop.f32.mrf.mxu0
  %v4156 = vadd.f32 0.0, %v4155
  %v4157 = vpop.f32.mrf.mxu0
  %v4158 = vadd.f32 0.0, %v4157
  %4159 = vdwg.mxu0
  %4160 = vmatpush.bf16.msra.mxu0 0
  %4161 = vmatpush.bf16.msra.mxu0 0
  %4162 = vmatpush.bf16.msra.mxu0 0
  %4163 = vmatpush.bf16.msra.mxu0 0
  %4164 = vmatpush.bf16.msra.mxu0 0
  %4165 = vmatpush.bf16.msra.mxu0 %v4120
  %4166 = vmatpush.bf16.msra.mxu0 %v4097
  %4167 = vmatpush.bf16.msra.mxu0 %v4094
  %4168 = vmatmul.bf16.gmra.mxu0 %v4108
  %v4169 = vpop.f32.mrf.mxu0
  %v4170 = vadd.f32 0.0, %v4169
  %v4171 = vpop.f32.mrf.mxu0
  %v4172 = vadd.f32 0.0, %v4171
  %4173 = vmatmul.bf16.gmra.mxu0 %v4111
  %v4174 = vpop.f32.mrf.mxu0
  %v4175 = vadd.f32 0.0, %v4174
  %v4176 = vpop.f32.mrf.mxu0
  %v4177 = vadd.f32 0.0, %v4176
  %4178 = vdwg.mxu0
  %v4179 = vadd.f32 %v4038, %v4132
  %v4180 = vadd.f32 %v4039, %v4151
  %v4181 = vadd.f32 %v4040, %v4170
  %v4182 = vadd.f32 %v4041, %v4134
  %v4183 = vadd.f32 %v4042, %v4153
  %v4184 = vadd.f32 %v4043, %v4172
  %v4185 = vadd.f32 %v4044, %v4137
  %v4186 = vadd.f32 %v4045, %v4156
  %v4187 = vadd.f32 %v4046, %v4175
  %v4188 = vadd.f32 %v4047, %v4139
  %v4189 = vadd.f32 %v4048, %v4158
  %v4190 = vadd.f32 %v4049, %v4177
  %v4191 = vld [vmem:[#allocation3 + $0x50] sm:$0xff]
  %v4192 = vld [vmem:[#allocation3 + $0x58] sm:$0xff]
  %v4193 = vld [vmem:[#allocation3 + $0xd0] sm:$0xff]
  %v4194 = vld [vmem:[#allocation3 + $0xd8] sm:$0xff]
  %v4195 = vpack.c.bf16 %v4192, %v4191
  %v4196 = vpack.c.bf16 %v4194, %v4193
  %s4197 = scalar_lea.vmem %s9, 300
  %v4198 = vld [vmem:[%s4197] sm:$0xff]
  %v4199 = vld [vmem:[%s4197 + $0x8] sm:$0xf]
  %v4200 = vld [vmem:[%s4197 + $0xc] sm:$0xff]
  %v4201 = vld [vmem:[%s4197 + $0x14] sm:$0xf]
  %v4202 = vld [vmem:[%s4197 + $0x18] sm:$0xff]
  %v4203 = vld [vmem:[%s4197 + $0x20] sm:$0xf]
  %v4204 = vld [vmem:[%s4197 + $0x24] sm:$0xff]
  %v4205 = vld [vmem:[%s4197 + $0x2c] sm:$0xf]
  %v4206 = vld [vmem:[%s4197 + $0x30] sm:$0x33]
  %v4207 = vld [vmem:[%s4197 + $0x38] sm:$0x3]
  %v4218 = vunpack.c.l.b16 %v4198
  %v4219 = vunpack.c.h.b16 %v4198
  %v4220 = vunpack.c.l.b16 %v4199
  %v4221 = vunpack.c.l.b16 %v4200
  %v4222 = vunpack.c.h.b16 %v4200
  %v4223 = vunpack.c.l.b16 %v4201
  %v4224 = vunpack.c.l.b16 %v4202
  %v4225 = vunpack.c.h.b16 %v4202
  %v4226 = vunpack.c.l.b16 %v4203
  %v4227 = vunpack.c.l.b16 %v4204
  %v4228 = vunpack.c.h.b16 %v4204
  %v4229 = vunpack.c.l.b16 %v4205
  %v4230 = vunpack.c.l.b16 %v4206
  %v4231 = vunpack.c.h.b16 %v4206
  %v4232 = vunpack.c.l.b16 %v4207
  %v4233 = vpack.c.b16 %v4221, %v4218
  %v4234 = vpack.c.b16 %v4222, %v4219
  %v4235 = vpack.c.b16 %v4223, %v4220
  %v4236 = vpack.c.b16 %v4227, %v4224
  %v4237 = vpack.c.b16 %v4228, %v4225
  %v4238 = vpack.c.b16 %v4229, %v4226
  %v4239 = vpack.c.b16 %v4230, %v4230
  %v4240 = vpack.c.b16 %v4231, %v4231
  %v4241 = vpack.c.b16 %v4232, %v4232
  %v4249 = vsel %vm2744, %v4195, 0
  %v4252 = vsel %vm2744, %v4196, 0
  %v4255 = vsel %vm3589, %v4239, 0
  %v4258 = vsel %vm3589, %v4240, 0
  %v4261 = vsel %vm3589, %v4241, 0
  %4263 = vmatpush.bf16.msra.mxu0 0
  %4264 = vmatpush.bf16.msra.mxu0 0
  %4265 = vmatpush.bf16.msra.mxu0 0
  %4266 = vmatpush.bf16.msra.mxu0 0
  %4267 = vmatpush.bf16.msra.mxu0 0
  %4268 = vmatpush.bf16.msra.mxu0 %v4255
  %4269 = vmatpush.bf16.msra.mxu0 %v4236
  %4270 = vmatpush.bf16.msra.mxu0 %v4233
  %4271 = vmatmul.bf16.gmra.mxu0 %v4249
  %v4272 = vpop.f32.mrf.mxu0
  %v4273 = vadd.f32 0.0, %v4272
  %v4274 = vpop.f32.mrf.mxu0
  %v4275 = vadd.f32 0.0, %v4274
  %4276 = vmatmul.bf16.gmra.mxu0 %v4252
  %v4277 = vpop.f32.mrf.mxu0
  %v4278 = vadd.f32 0.0, %v4277
  %v4279 = vpop.f32.mrf.mxu0
  %v4280 = vadd.f32 0.0, %v4279
  %4281 = vdwg.mxu0
  %4282 = vmatpush.bf16.msra.mxu0 0
  %4283 = vmatpush.bf16.msra.mxu0 0
  %4284 = vmatpush.bf16.msra.mxu0 0
  %4285 = vmatpush.bf16.msra.mxu0 0
  %4286 = vmatpush.bf16.msra.mxu0 0
  %4287 = vmatpush.bf16.msra.mxu0 %v4258
  %4288 = vmatpush.bf16.msra.mxu0 %v4237
  %4289 = vmatpush.bf16.msra.mxu0 %v4234
  %4290 = vmatmul.bf16.gmra.mxu0 %v4249
  %v4291 = vpop.f32.mrf.mxu0
  %v4292 = vadd.f32 0.0, %v4291
  %v4293 = vpop.f32.mrf.mxu0
  %v4294 = vadd.f32 0.0, %v4293
  %4295 = vmatmul.bf16.gmra.mxu0 %v4252
  %v4296 = vpop.f32.mrf.mxu0
  %v4297 = vadd.f32 0.0, %v4296
  %v4298 = vpop.f32.mrf.mxu0
  %v4299 = vadd.f32 0.0, %v4298
  %4300 = vdwg.mxu0
  %4301 = vmatpush.bf16.msra.mxu0 0
  %4302 = vmatpush.bf16.msra.mxu0 0
  %4303 = vmatpush.bf16.msra.mxu0 0
  %4304 = vmatpush.bf16.msra.mxu0 0
  %4305 = vmatpush.bf16.msra.mxu0 0
  %4306 = vmatpush.bf16.msra.mxu0 %v4261
  %4307 = vmatpush.bf16.msra.mxu0 %v4238
  %4308 = vmatpush.bf16.msra.mxu0 %v4235
  %4309 = vmatmul.bf16.gmra.mxu0 %v4249
  %v4310 = vpop.f32.mrf.mxu0
  %v4311 = vadd.f32 0.0, %v4310
  %v4312 = vpop.f32.mrf.mxu0
  %v4313 = vadd.f32 0.0, %v4312
  %4314 = vmatmul.bf16.gmra.mxu0 %v4252
  %v4315 = vpop.f32.mrf.mxu0
  %v4316 = vadd.f32 0.0, %v4315
  %v4317 = vpop.f32.mrf.mxu0
  %v4318 = vadd.f32 0.0, %v4317
  %4319 = vdwg.mxu0
  %v4320 = vadd.f32 %v4179, %v4273
  %v4321 = vadd.f32 %v4180, %v4292
  %v4322 = vadd.f32 %v4181, %v4311
  %v4323 = vadd.f32 %v4182, %v4275
  %v4324 = vadd.f32 %v4183, %v4294
  %v4325 = vadd.f32 %v4184, %v4313
  %v4326 = vadd.f32 %v4185, %v4278
  %v4327 = vadd.f32 %v4186, %v4297
  %v4328 = vadd.f32 %v4187, %v4316
  %v4329 = vadd.f32 %v4188, %v4280
  %v4330 = vadd.f32 %v4189, %v4299
  %v4331 = vadd.f32 %v4190, %v4318
  %v4332 = vld [vmem:[#allocation3 + $0x60] sm:$0xff]
  %v4333 = vld [vmem:[#allocation3 + $0x68] sm:$0xff]
  %v4334 = vld [vmem:[#allocation3 + $0xe0] sm:$0xff]
  %v4335 = vld [vmem:[#allocation3 + $0xe8] sm:$0xff]
  %v4336 = vpack.c.bf16 %v4333, %v4332
  %v4337 = vpack.c.bf16 %v4335, %v4334
  %s4338 = scalar_lea.vmem %s9, 360
  %v4339 = vld [vmem:[%s4338] sm:$0xff]
  %v4340 = vld [vmem:[%s4338 + $0x8] sm:$0xf]
  %v4341 = vld [vmem:[%s4338 + $0xc] sm:$0xff]
  %v4342 = vld [vmem:[%s4338 + $0x14] sm:$0xf]
  %v4343 = vld [vmem:[%s4338 + $0x18] sm:$0xff]
  %v4344 = vld [vmem:[%s4338 + $0x20] sm:$0xf]
  %v4345 = vld [vmem:[%s4338 + $0x24] sm:$0xff]
  %v4346 = vld [vmem:[%s4338 + $0x2c] sm:$0xf]
  %v4347 = vld [vmem:[%s4338 + $0x30] sm:$0x33]
  %v4348 = vld [vmem:[%s4338 + $0x38] sm:$0x3]
  %v4359 = vunpack.c.l.b16 %v4339
  %v4360 = vunpack.c.h.b16 %v4339
  %v4361 = vunpack.c.l.b16 %v4340
  %v4362 = vunpack.c.l.b16 %v4341
  %v4363 = vunpack.c.h.b16 %v4341
  %v4364 = vunpack.c.l.b16 %v4342
  %v4365 = vunpack.c.l.b16 %v4343
  %v4366 = vunpack.c.h.b16 %v4343
  %v4367 = vunpack.c.l.b16 %v4344
  %v4368 = vunpack.c.l.b16 %v4345
  %v4369 = vunpack.c.h.b16 %v4345
  %v4370 = vunpack.c.l.b16 %v4346
  %v4371 = vunpack.c.l.b16 %v4347
  %v4372 = vunpack.c.h.b16 %v4347
  %v4373 = vunpack.c.l.b16 %v4348
  %v4374 = vpack.c.b16 %v4362, %v4359
  %v4375 = vpack.c.b16 %v4363, %v4360
  %v4376 = vpack.c.b16 %v4364, %v4361
  %v4377 = vpack.c.b16 %v4368, %v4365
  %v4378 = vpack.c.b16 %v4369, %v4366
  %v4379 = vpack.c.b16 %v4370, %v4367
  %v4380 = vpack.c.b16 %v4371, %v4371
  %v4381 = vpack.c.b16 %v4372, %v4372
  %v4382 = vpack.c.b16 %v4373, %v4373
  %v4390 = vsel %vm2744, %v4336, 0
  %v4393 = vsel %vm2744, %v4337, 0
  %v4396 = vsel %vm3589, %v4380, 0
  %v4399 = vsel %vm3589, %v4381, 0
  %v4402 = vsel %vm3589, %v4382, 0
  %4404 = vmatpush.bf16.msra.mxu0 0
  %4405 = vmatpush.bf16.msra.mxu0 0
  %4406 = vmatpush.bf16.msra.mxu0 0
  %4407 = vmatpush.bf16.msra.mxu0 0
  %4408 = vmatpush.bf16.msra.mxu0 0
  %4409 = vmatpush.bf16.msra.mxu0 %v4396
  %4410 = vmatpush.bf16.msra.mxu0 %v4377
  %4411 = vmatpush.bf16.msra.mxu0 %v4374
  %4412 = vmatmul.bf16.gmra.mxu0 %v4390
  %v4413 = vpop.f32.mrf.mxu0
  %v4414 = vadd.f32 0.0, %v4413
  %v4415 = vpop.f32.mrf.mxu0
  %v4416 = vadd.f32 0.0, %v4415
  %4417 = vmatmul.bf16.gmra.mxu0 %v4393
  %v4418 = vpop.f32.mrf.mxu0
  %v4419 = vadd.f32 0.0, %v4418
  %v4420 = vpop.f32.mrf.mxu0
  %v4421 = vadd.f32 0.0, %v4420
  %4422 = vdwg.mxu0
  %4423 = vmatpush.bf16.msra.mxu0 0
  %4424 = vmatpush.bf16.msra.mxu0 0
  %4425 = vmatpush.bf16.msra.mxu0 0
  %4426 = vmatpush.bf16.msra.mxu0 0
  %4427 = vmatpush.bf16.msra.mxu0 0
  %4428 = vmatpush.bf16.msra.mxu0 %v4399
  %4429 = vmatpush.bf16.msra.mxu0 %v4378
  %4430 = vmatpush.bf16.msra.mxu0 %v4375
  %4431 = vmatmul.bf16.gmra.mxu0 %v4390
  %v4432 = vpop.f32.mrf.mxu0
  %v4433 = vadd.f32 0.0, %v4432
  %v4434 = vpop.f32.mrf.mxu0
  %v4435 = vadd.f32 0.0, %v4434
  %4436 = vmatmul.bf16.gmra.mxu0 %v4393
  %v4437 = vpop.f32.mrf.mxu0
  %v4438 = vadd.f32 0.0, %v4437
  %v4439 = vpop.f32.mrf.mxu0
  %v4440 = vadd.f32 0.0, %v4439
  %4441 = vdwg.mxu0
  %4442 = vmatpush.bf16.msra.mxu0 0
  %4443 = vmatpush.bf16.msra.mxu0 0
  %4444 = vmatpush.bf16.msra.mxu0 0
  %4445 = vmatpush.bf16.msra.mxu0 0
  %4446 = vmatpush.bf16.msra.mxu0 0
  %4447 = vmatpush.bf16.msra.mxu0 %v4402
  %4448 = vmatpush.bf16.msra.mxu0 %v4379
  %4449 = vmatpush.bf16.msra.mxu0 %v4376
  %4450 = vmatmul.bf16.gmra.mxu0 %v4390
  %v4451 = vpop.f32.mrf.mxu0
  %v4452 = vadd.f32 0.0, %v4451
  %v4453 = vpop.f32.mrf.mxu0
  %v4454 = vadd.f32 0.0, %v4453
  %4455 = vmatmul.bf16.gmra.mxu0 %v4393
  %v4456 = vpop.f32.mrf.mxu0
  %v4457 = vadd.f32 0.0, %v4456
  %v4458 = vpop.f32.mrf.mxu0
  %v4459 = vadd.f32 0.0, %v4458
  %4460 = vdwg.mxu0
  %v4461 = vadd.f32 %v4320, %v4414
  %v4462 = vadd.f32 %v4321, %v4433
  %v4463 = vadd.f32 %v4322, %v4452
  %v4464 = vadd.f32 %v4323, %v4416
  %v4465 = vadd.f32 %v4324, %v4435
  %v4466 = vadd.f32 %v4325, %v4454
  %v4467 = vadd.f32 %v4326, %v4419
  %v4468 = vadd.f32 %v4327, %v4438
  %v4469 = vadd.f32 %v4328, %v4457
  %v4470 = vadd.f32 %v4329, %v4421
  %v4471 = vadd.f32 %v4330, %v4440
  %v4472 = vadd.f32 %v4331, %v4459
  %v4473 = vld [vmem:[#allocation3 + $0x70] sm:$0xff]
  %v4474 = vld [vmem:[#allocation3 + $0x78] sm:$0xff]
  %v4475 = vld [vmem:[#allocation3 + $0xf0] sm:$0xff]
  %v4476 = vld [vmem:[#allocation3 + $0xf8] sm:$0xff]
  %v4477 = vpack.c.bf16 %v4474, %v4473
  %v4478 = vpack.c.bf16 %v4476, %v4475
  %s4479 = scalar_lea.vmem %s9, 420
  %v4480 = vld [vmem:[%s4479] sm:$0xff]
  %v4481 = vld [vmem:[%s4479 + $0x8] sm:$0xf]
  %v4482 = vld [vmem:[%s4479 + $0xc] sm:$0xff]
  %v4483 = vld [vmem:[%s4479 + $0x14] sm:$0xf]
  %v4484 = vld [vmem:[%s4479 + $0x18] sm:$0xff]
  %v4485 = vld [vmem:[%s4479 + $0x20] sm:$0xf]
  %v4486 = vld [vmem:[%s4479 + $0x24] sm:$0xff]
  %v4487 = vld [vmem:[%s4479 + $0x2c] sm:$0xf]
  %v4488 = vld [vmem:[%s4479 + $0x30] sm:$0x33]
  %v4489 = vld [vmem:[%s4479 + $0x38] sm:$0x3]
  %v4500 = vunpack.c.l.b16 %v4480
  %v4501 = vunpack.c.h.b16 %v4480
  %v4502 = vunpack.c.l.b16 %v4481
  %v4503 = vunpack.c.l.b16 %v4482
  %v4504 = vunpack.c.h.b16 %v4482
  %v4505 = vunpack.c.l.b16 %v4483
  %v4506 = vunpack.c.l.b16 %v4484
  %v4507 = vunpack.c.h.b16 %v4484
  %v4508 = vunpack.c.l.b16 %v4485
  %v4509 = vunpack.c.l.b16 %v4486
  %v4510 = vunpack.c.h.b16 %v4486
  %v4511 = vunpack.c.l.b16 %v4487
  %v4512 = vunpack.c.l.b16 %v4488
  %v4513 = vunpack.c.h.b16 %v4488
  %v4514 = vunpack.c.l.b16 %v4489
  %v4515 = vpack.c.b16 %v4503, %v4500
  %v4516 = vpack.c.b16 %v4504, %v4501
  %v4517 = vpack.c.b16 %v4505, %v4502
  %v4518 = vpack.c.b16 %v4509, %v4506
  %v4519 = vpack.c.b16 %v4510, %v4507
  %v4520 = vpack.c.b16 %v4511, %v4508
  %v4521 = vpack.c.b16 %v4512, %v4512
  %v4522 = vpack.c.b16 %v4513, %v4513
  %v4523 = vpack.c.b16 %v4514, %v4514
  %v4531 = vsel %vm2744, %v4477, 0
  %v4534 = vsel %vm2744, %v4478, 0
  %v4537 = vsel %vm3589, %v4521, 0
  %v4540 = vsel %vm3589, %v4522, 0
  %v4543 = vsel %vm3589, %v4523, 0
  %4545 = vmatpush.bf16.msra.mxu0 0
  %4546 = vmatpush.bf16.msra.mxu0 0
  %4547 = vmatpush.bf16.msra.mxu0 0
  %4548 = vmatpush.bf16.msra.mxu0 0
  %4549 = vmatpush.bf16.msra.mxu0 0
  %4550 = vmatpush.bf16.msra.mxu0 %v4537
  %4551 = vmatpush.bf16.msra.mxu0 %v4518
  %4552 = vmatpush.bf16.msra.mxu0 %v4515
  %4553 = vmatmul.bf16.gmra.mxu0 %v4531
  %v4554 = vpop.f32.mrf.mxu0
  %v4555 = vadd.f32 0.0, %v4554
  %v4556 = vpop.f32.mrf.mxu0
  %v4557 = vadd.f32 0.0, %v4556
  %4558 = vmatmul.bf16.gmra.mxu0 %v4534
  %v4559 = vpop.f32.mrf.mxu0
  %v4560 = vadd.f32 0.0, %v4559
  %v4561 = vpop.f32.mrf.mxu0
  %v4562 = vadd.f32 0.0, %v4561
  %4563 = vdwg.mxu0
  %4564 = vmatpush.bf16.msra.mxu0 0
  %4565 = vmatpush.bf16.msra.mxu0 0
  %4566 = vmatpush.bf16.msra.mxu0 0
  %4567 = vmatpush.bf16.msra.mxu0 0
  %4568 = vmatpush.bf16.msra.mxu0 0
  %4569 = vmatpush.bf16.msra.mxu0 %v4540
  %4570 = vmatpush.bf16.msra.mxu0 %v4519
  %4571 = vmatpush.bf16.msra.mxu0 %v4516
  %4572 = vmatmul.bf16.gmra.mxu0 %v4531
  %v4573 = vpop.f32.mrf.mxu0
  %v4574 = vadd.f32 0.0, %v4573
  %v4575 = vpop.f32.mrf.mxu0
  %v4576 = vadd.f32 0.0, %v4575
  %4577 = vmatmul.bf16.gmra.mxu0 %v4534
  %v4578 = vpop.f32.mrf.mxu0
  %v4579 = vadd.f32 0.0, %v4578
  %v4580 = vpop.f32.mrf.mxu0
  %v4581 = vadd.f32 0.0, %v4580
  %4582 = vdwg.mxu0
  %4583 = vmatpush.bf16.msra.mxu0 0
  %4584 = vmatpush.bf16.msra.mxu0 0
  %4585 = vmatpush.bf16.msra.mxu0 0
  %4586 = vmatpush.bf16.msra.mxu0 0
  %4587 = vmatpush.bf16.msra.mxu0 0
  %4588 = vmatpush.bf16.msra.mxu0 %v4543
  %4589 = vmatpush.bf16.msra.mxu0 %v4520
  %4590 = vmatpush.bf16.msra.mxu0 %v4517
  %4591 = vmatmul.bf16.gmra.mxu0 %v4531
  %v4592 = vpop.f32.mrf.mxu0
  %v4593 = vadd.f32 0.0, %v4592
  %v4594 = vpop.f32.mrf.mxu0
  %v4595 = vadd.f32 0.0, %v4594
  %4596 = vmatmul.bf16.gmra.mxu0 %v4534
  %v4597 = vpop.f32.mrf.mxu0
  %v4598 = vadd.f32 0.0, %v4597
  %v4599 = vpop.f32.mrf.mxu0
  %v4600 = vadd.f32 0.0, %v4599
  %4601 = vdwg.mxu0
  %v4602 = vadd.f32 %v4461, %v4555
  %v4603 = vadd.f32 %v4462, %v4574
  %v4604 = vadd.f32 %v4463, %v4593
  %v4605 = vadd.f32 %v4464, %v4557
  %v4606 = vadd.f32 %v4465, %v4576
  %v4607 = vadd.f32 %v4466, %v4595
  %v4608 = vadd.f32 %v4467, %v4560
  %v4609 = vadd.f32 %v4468, %v4579
  %v4610 = vadd.f32 %v4469, %v4598
  %v4611 = vadd.f32 %v4470, %v4562
  %v4612 = vadd.f32 %v4471, %v4581
  %v4613 = vadd.f32 %v4472, %v4600
  %v4614 = vadd.f32 %v793, %v4602
  %v4615 = vadd.f32 %v794, %v4603
  %v4616 = vadd.f32 %v795, %v4604
  %v4617 = vadd.f32 %v796, %v4605
  %v4618 = vadd.f32 %v797, %v4606
  %v4619 = vadd.f32 %v798, %v4607
  %v4620 = vadd.f32 %v799, %v4608
  %v4621 = vadd.f32 %v800, %v4609
  %v4622 = vadd.f32 %v801, %v4610
  %v4623 = vadd.f32 %v802, %v4611
  %v4624 = vadd.f32 %v803, %v4612
  %v4625 = vadd.f32 %v804, %v4613
  %v4626 = vld [vmem:[%s10] sm:$0x7]
  %v4627 = vld [vmem:[%s11] sm:$0x7]
  %v4628 = vadd.f32 %v4614, %v4615
  %v4629 = vsel %vm69, %v4616, 0.0
  %v4630 = vadd.f32 %v4628, %v4629
  %4631 = vadd.xlane.f32.xlu0 %v4630
  %v4632 = vpop.xlane.xlu0 %4631
  %v4633 = vadd.f32 %v4617, %v4618
  %v4634 = vsel %vm69, %v4619, 0.0
  %v4635 = vadd.f32 %v4633, %v4634
  %4636 = vadd.xlane.f32.xlu0 %v4635
  %v4637 = vpop.xlane.xlu0 %4636
  %v4638 = vadd.f32 %v4620, %v4621
  %v4639 = vsel %vm69, %v4622, 0.0
  %v4640 = vadd.f32 %v4638, %v4639
  %4641 = vadd.xlane.f32.xlu0 %v4640
  %v4642 = vpop.xlane.xlu0 %4641
  %v4643 = vadd.f32 %v4623, %v4624
  %v4644 = vsel %vm69, %v4625, 0.0
  %v4645 = vadd.f32 %v4643, %v4644
  %4646 = vadd.xlane.f32.xlu0 %v4645
  %v4647 = vpop.xlane.xlu0 %4646
  %v4648 = vmul.f32 %v4632, %v95
  %v4649 = vmul.f32 %v4637, %v95
  %v4650 = vmul.f32 %v4642, %v95
  %v4651 = vmul.f32 %v4647, %v95
  %v4652 = vsub.f32 %v4614, %v4648
  %v4653 = vsub.f32 %v4615, %v4648
  %v4654 = vsub.f32 %v4616, %v4648
  %v4655 = vsub.f32 %v4617, %v4649
  %v4656 = vsub.f32 %v4618, %v4649
  %v4657 = vsub.f32 %v4619, %v4649
  %v4658 = vsub.f32 %v4620, %v4650
  %v4659 = vsub.f32 %v4621, %v4650
  %v4660 = vsub.f32 %v4622, %v4650
  %v4661 = vsub.f32 %v4623, %v4651
  %v4662 = vsub.f32 %v4624, %v4651
  %v4663 = vsub.f32 %v4625, %v4651
  %v4664 = vmul.f32 %v4652, %v4652
  %v4665 = vmul.f32 %v4653, %v4653
  %v4666 = vmul.f32 %v4654, %v4654
  %v4667 = vmul.f32 %v4655, %v4655
  %v4668 = vmul.f32 %v4656, %v4656
  %v4669 = vmul.f32 %v4657, %v4657
  %v4670 = vmul.f32 %v4658, %v4658
  %v4671 = vmul.f32 %v4659, %v4659
  %v4672 = vmul.f32 %v4660, %v4660
  %v4673 = vmul.f32 %v4661, %v4661
  %v4674 = vmul.f32 %v4662, %v4662
  %v4675 = vmul.f32 %v4663, %v4663
  %v4676 = vadd.f32 %v4664, %v4665
  %v4677 = vsel %vm69, %v4666, 0.0
  %v4678 = vadd.f32 %v4676, %v4677
  %4679 = vadd.xlane.f32.xlu0 %v4678
  %v4680 = vpop.xlane.xlu0 %4679
  %v4681 = vadd.f32 %v4667, %v4668
  %v4682 = vsel %vm69, %v4669, 0.0
  %v4683 = vadd.f32 %v4681, %v4682
  %4684 = vadd.xlane.f32.xlu0 %v4683
  %v4685 = vpop.xlane.xlu0 %4684
  %v4686 = vadd.f32 %v4670, %v4671
  %v4687 = vsel %vm69, %v4672, 0.0
  %v4688 = vadd.f32 %v4686, %v4687
  %4689 = vadd.xlane.f32.xlu0 %v4688
  %v4690 = vpop.xlane.xlu0 %4689
  %v4691 = vadd.f32 %v4673, %v4674
  %v4692 = vsel %vm69, %v4675, 0.0
  %v4693 = vadd.f32 %v4691, %v4692
  %4694 = vadd.xlane.f32.xlu0 %v4693
  %v4695 = vpop.xlane.xlu0 %4694
  %v4696 = vmul.f32 %v4680, %v95
  %v4697 = vmul.f32 %v4685, %v95
  %v4698 = vmul.f32 %v4690, %v95
  %v4699 = vmul.f32 %v4695, %v95
  %v4700 = vadd.f32 %v4696, 1e-05
  %v4701 = vadd.f32 %v4697, 1e-05
  %v4702 = vadd.f32 %v4698, 1e-05
  %v4703 = vadd.f32 %v4699, 1e-05
  %v4704 = vrsqrt.pop %v4700
  %v4705 = vmul.f32 %v4704, %v4700
  %v4706 = vmul.f32 %v4705, %v4704
  %v4707 = vmul.f32 0.5, %v4706
  %v4708 = vsub.f32 1.5, %v4707
  %v4709 = vmul.f32 %v4704, %v4708
  %vm4710 = vweird.f32 %v4700
  %vm4711 = vweird.f32 %v4704
  %vm4712 = vmor %vm4710, %vm4711
  %v4713 = vsel %vm4712, %v4704, %v4709
  %v4714 = vrsqrt.pop %v4701
  %v4715 = vmul.f32 %v4714, %v4701
  %v4716 = vmul.f32 %v4715, %v4714
  %v4717 = vmul.f32 0.5, %v4716
  %v4718 = vsub.f32 1.5, %v4717
  %v4719 = vmul.f32 %v4714, %v4718
  %vm4720 = vweird.f32 %v4701
  %vm4721 = vweird.f32 %v4714
  %vm4722 = vmor %vm4720, %vm4721
  %v4723 = vsel %vm4722, %v4714, %v4719
  %v4724 = vrsqrt.pop %v4702
  %v4725 = vmul.f32 %v4724, %v4702
  %v4726 = vmul.f32 %v4725, %v4724
  %v4727 = vmul.f32 0.5, %v4726
  %v4728 = vsub.f32 1.5, %v4727
  %v4729 = vmul.f32 %v4724, %v4728
  %vm4730 = vweird.f32 %v4702
  %vm4731 = vweird.f32 %v4724
  %vm4732 = vmor %vm4730, %vm4731
  %v4733 = vsel %vm4732, %v4724, %v4729
  %v4734 = vrsqrt.pop %v4703
  %v4735 = vmul.f32 %v4734, %v4703
  %v4736 = vmul.f32 %v4735, %v4734
  %v4737 = vmul.f32 0.5, %v4736
  %v4738 = vsub.f32 1.5, %v4737
  %v4739 = vmul.f32 %v4734, %v4738
  %vm4740 = vweird.f32 %v4703
  %vm4741 = vweird.f32 %v4734
  %vm4742 = vmor %vm4740, %vm4741
  %v4743 = vsel %vm4742, %v4734, %v4739
  %v4744 = vmul.f32 %v4652, %v4713
  %v4745 = vmul.f32 %v4653, %v4713
  %v4746 = vmul.f32 %v4654, %v4713
  %v4747 = vmul.f32 %v4655, %v4723
  %v4748 = vmul.f32 %v4656, %v4723
  %v4749 = vmul.f32 %v4657, %v4723
  %v4750 = vmul.f32 %v4658, %v4733
  %v4751 = vmul.f32 %v4659, %v4733
  %v4752 = vmul.f32 %v4660, %v4733
  %v4753 = vmul.f32 %v4661, %v4743
  %v4754 = vmul.f32 %v4662, %v4743
  %v4755 = vmul.f32 %v4663, %v4743
  %v4757 = vperm.slane %v4626, 0
  %v4758 = vperm.slane %v4626, 1
  %v4759 = vperm.slane %v4626, 2
  %v4763 = vmul.f32 %v4744, %v4757
  %v4764 = vmul.f32 %v4745, %v4758
  %v4765 = vmul.f32 %v4746, %v4759
  %v4766 = vmul.f32 %v4747, %v4757
  %v4767 = vmul.f32 %v4748, %v4758
  %v4768 = vmul.f32 %v4749, %v4759
  %v4769 = vmul.f32 %v4750, %v4757
  %v4770 = vmul.f32 %v4751, %v4758
  %v4771 = vmul.f32 %v4752, %v4759
  %v4772 = vmul.f32 %v4753, %v4757
  %v4773 = vmul.f32 %v4754, %v4758
  %v4774 = vmul.f32 %v4755, %v4759
  %v4776 = vperm.slane %v4627, 0
  %v4777 = vperm.slane %v4627, 1
  %v4778 = vperm.slane %v4627, 2
  %v4782 = vadd.f32 %v4763, %v4776
  %v4783 = vadd.f32 %v4764, %v4777
  %v4784 = vadd.f32 %v4765, %v4778
  %v4785 = vadd.f32 %v4766, %v4776
  %v4786 = vadd.f32 %v4767, %v4777
  %v4787 = vadd.f32 %v4768, %v4778
  %v4788 = vadd.f32 %v4769, %v4776
  %v4789 = vadd.f32 %v4770, %v4777
  %v4790 = vadd.f32 %v4771, %v4778
  %v4791 = vadd.f32 %v4772, %v4776
  %v4792 = vadd.f32 %v4773, %v4777
  %v4793 = vadd.f32 %v4774, %v4778
  %v4794 = vpack.c.bf16 %v4785, %v4782
  %v4795 = vpack.c.bf16 %v4786, %v4783
  %v4796 = vpack.c.bf16 %v4787, %v4784
  %v4797 = vpack.c.bf16 %v4791, %v4788
  %v4798 = vpack.c.bf16 %v4792, %v4789
  %v4799 = vpack.c.bf16 %v4793, %v4790
  %v4800 = vld [vmem:[%s12] sm:$0xf]
  %v4801 = vld [vmem:[%s12 + $0x4] sm:$0xf]
  %v4802 = vld [vmem:[%s12 + $0x8] sm:$0xf]
  %v4803 = vld [vmem:[%s12 + $0xc] sm:$0xf]
  %v4804 = vld [vmem:[%s12 + $0x10] sm:$0xf]
  %v4805 = vld [vmem:[%s12 + $0x14] sm:$0xf]
  %v4806 = vld [vmem:[%s12 + $0x18] sm:$0xf]
  %v4807 = vld [vmem:[%s12 + $0x1c] sm:$0xf]
  %v4808 = vld [vmem:[%s12 + $0x20] sm:$0xf]
  %v4809 = vld [vmem:[%s12 + $0x24] sm:$0xf]
  %v4810 = vld [vmem:[%s12 + $0x28] sm:$0xf]
  %v4811 = vld [vmem:[%s12 + $0x2c] sm:$0xf]
  %v4812 = vld [vmem:[%s12 + $0x30] sm:$0xf]
  %v4813 = vld [vmem:[%s12 + $0x34] sm:$0xf]
  %v4814 = vld [vmem:[%s12 + $0x38] sm:$0xf]
  %v4815 = vld [vmem:[%s12 + $0x3c] sm:$0xf]
  %v4816 = vld [vmem:[%s12 + $0x40] sm:$0xf]
  %v4817 = vld [vmem:[%s12 + $0x44] sm:$0xf]
  %v4818 = vld [vmem:[%s12 + $0x48] sm:$0xf]
  %v4819 = vld [vmem:[%s12 + $0x4c] sm:$0xf]
  %v4820 = vld [vmem:[%s12 + $0x50] sm:$0xf]
  %v4821 = vld [vmem:[%s12 + $0x54] sm:$0xf]
  %v4822 = vld [vmem:[%s12 + $0x58] sm:$0xf]
  %v4823 = vld [vmem:[%s12 + $0x5c] sm:$0xf]
  %v4824 = vld [vmem:[%s12 + $0x60] sm:$0xf]
  %v4825 = vld [vmem:[%s12 + $0x64] sm:$0xf]
  %v4826 = vld [vmem:[%s12 + $0x68] sm:$0xf]
  %v4827 = vld [vmem:[%s12 + $0x6c] sm:$0xf]
  %v4828 = vld [vmem:[%s12 + $0x70] sm:$0xf]
  %v4829 = vld [vmem:[%s12 + $0x74] sm:$0xf]
  %v4830 = vld [vmem:[%s12 + $0x78] sm:$0xf]
  %v4831 = vld [vmem:[%s12 + $0x7c] sm:$0xf]
  %v4832 = vld [vmem:[%s12 + $0x80] sm:$0xf]
  %v4833 = vld [vmem:[%s12 + $0x84] sm:$0xf]
  %v4834 = vld [vmem:[%s12 + $0x88] sm:$0xf]
  %v4835 = vld [vmem:[%s12 + $0x8c] sm:$0xf]
  %v4836 = vld [vmem:[%s13] sm:$0x1]
  %v4838 = vperm.slane %v4836, 0
  %v4876 = vunpack.c.l.b16 %v4800
  %v4877 = vunpack.c.l.b16 %v4801
  %v4878 = vunpack.c.l.b16 %v4802
  %v4879 = vunpack.c.l.b16 %v4803
  %v4880 = vunpack.c.l.b16 %v4804
  %v4881 = vunpack.c.l.b16 %v4805
  %v4882 = vunpack.c.l.b16 %v4806
  %v4883 = vunpack.c.l.b16 %v4807
  %v4884 = vunpack.c.l.b16 %v4808
  %v4885 = vunpack.c.l.b16 %v4809
  %v4886 = vunpack.c.l.b16 %v4810
  %v4887 = vunpack.c.l.b16 %v4811
  %v4888 = vunpack.c.l.b16 %v4812
  %v4889 = vunpack.c.l.b16 %v4813
  %v4890 = vunpack.c.l.b16 %v4814
  %v4891 = vunpack.c.l.b16 %v4815
  %v4892 = vunpack.c.l.b16 %v4816
  %v4893 = vunpack.c.l.b16 %v4817
  %v4894 = vunpack.c.l.b16 %v4818
  %v4895 = vunpack.c.l.b16 %v4819
  %v4896 = vunpack.c.l.b16 %v4820
  %v4897 = vunpack.c.l.b16 %v4821
  %v4898 = vunpack.c.l.b16 %v4822
  %v4899 = vunpack.c.l.b16 %v4823
  %v4900 = vunpack.c.l.b16 %v4824
  %v4901 = vunpack.c.l.b16 %v4825
  %v4902 = vunpack.c.l.b16 %v4826
  %v4903 = vunpack.c.l.b16 %v4827
  %v4904 = vunpack.c.l.b16 %v4828
  %v4905 = vunpack.c.l.b16 %v4829
  %v4906 = vunpack.c.l.b16 %v4830
  %v4907 = vunpack.c.l.b16 %v4831
  %v4908 = vunpack.c.l.b16 %v4832
  %v4909 = vunpack.c.l.b16 %v4833
  %v4910 = vunpack.c.l.b16 %v4834
  %v4911 = vunpack.c.l.b16 %v4835
  %v4912 = vpack.c.b16 %v4877, %v4876
  %v4913 = vpack.c.b16 %v4879, %v4878
  %v4914 = vpack.c.b16 %v4881, %v4880
  %v4915 = vpack.c.b16 %v4883, %v4882
  %v4916 = vpack.c.b16 %v4885, %v4884
  %v4917 = vpack.c.b16 %v4887, %v4886
  %v4918 = vpack.c.b16 %v4889, %v4888
  %v4919 = vpack.c.b16 %v4891, %v4890
  %v4920 = vpack.c.b16 %v4893, %v4892
  %v4921 = vpack.c.b16 %v4895, %v4894
  %v4922 = vpack.c.b16 %v4897, %v4896
  %v4923 = vpack.c.b16 %v4899, %v4898
  %v4924 = vpack.c.b16 %v4901, %v4900
  %v4925 = vpack.c.b16 %v4903, %v4902
  %v4926 = vpack.c.b16 %v4905, %v4904
  %v4927 = vpack.c.b16 %v4907, %v4906
  %v4928 = vpack.c.b16 %v4909, %v4908
  %v4929 = vpack.c.b16 %v4911, %v4910
  %v4949 = vsel %vm69, %v4796, 0
  %v4952 = vsel %vm69, %v4799, 0
  %4954 = vmatpush.bf16.msra.mxu0 %v4919
  %4955 = vmatpush.bf16.msra.mxu0 %v4918
  %4956 = vmatpush.bf16.msra.mxu0 %v4917
  %4957 = vmatpush.bf16.msra.mxu0 %v4916
  %4958 = vmatpush.bf16.msra.mxu0 %v4915
  %4959 = vmatpush.bf16.msra.mxu0 %v4914
  %4960 = vmatpush.bf16.msra.mxu0 %v4913
  %4961 = vmatpush.bf16.msra.mxu0 %v4912
  %4962 = vmatmul.bf16.gmra.mxu0 %v4794
  %v4963 = vpop.f32.mrf.mxu0
  %v4964 = vadd.f32 %v4838, %v4963
  %v4965 = vpop.f32.mrf.mxu0
  %v4966 = vadd.f32 %v4838, %v4965
  %4967 = vmatmul.bf16.gmra.mxu0 %v4797
  %v4968 = vpop.f32.mrf.mxu0
  %v4969 = vadd.f32 %v4838, %v4968
  %v4970 = vpop.f32.mrf.mxu0
  %v4971 = vadd.f32 %v4838, %v4970
  %4972 = vdwg.mxu0
  %4973 = vmatpush.bf16.msra.mxu0 %v4927
  %4974 = vmatpush.bf16.msra.mxu0 %v4926
  %4975 = vmatpush.bf16.msra.mxu0 %v4925
  %4976 = vmatpush.bf16.msra.mxu0 %v4924
  %4977 = vmatpush.bf16.msra.mxu0 %v4923
  %4978 = vmatpush.bf16.msra.mxu0 %v4922
  %4979 = vmatpush.bf16.msra.mxu0 %v4921
  %4980 = vmatpush.bf16.msra.mxu0 %v4920
  %4981 = vmatmul.bf16.gmra.mxu0 %v4795
  %v4982 = vpop.f32.mrf.mxu0
  %v4983 = vadd.f32 %v4964, %v4982
  %v4984 = vpop.f32.mrf.mxu0
  %v4985 = vadd.f32 %v4966, %v4984
  %4986 = vmatmul.bf16.gmra.mxu0 %v4798
  %v4987 = vpop.f32.mrf.mxu0
  %v4988 = vadd.f32 %v4969, %v4987
  %v4989 = vpop.f32.mrf.mxu0
  %v4990 = vadd.f32 %v4971, %v4989
  %4991 = vdwg.mxu0
  %4992 = vmatpush.bf16.msra.mxu0 0
  %4993 = vmatpush.bf16.msra.mxu0 0
  %4994 = vmatpush.bf16.msra.mxu0 0
  %4995 = vmatpush.bf16.msra.mxu0 0
  %4996 = vmatpush.bf16.msra.mxu0 0
  %4997 = vmatpush.bf16.msra.mxu0 0
  %4998 = vmatpush.bf16.msra.mxu0 %v4929
  %4999 = vmatpush.bf16.msra.mxu0 %v4928
  %5000 = vmatmul.bf16.gmra.mxu0 %v4949
  %v5001 = vpop.f32.mrf.mxu0
  %v5002 = vadd.f32 %v4983, %v5001
  %v5003 = vpop.f32.mrf.mxu0
  %v5004 = vadd.f32 %v4985, %v5003
  %5005 = vmatmul.bf16.gmra.mxu0 %v4952
  %v5006 = vpop.f32.mrf.mxu0
  %v5007 = vadd.f32 %v4988, %v5006
  %v5008 = vpop.f32.mrf.mxu0
  %v5009 = vadd.f32 %v4990, %v5008
  %5010 = vdwg.mxu0
  %v5011 = vmax.f32 %v5002, 0.0
  %v5012 = vmax.f32 %v5004, 0.0
  %v5013 = vmax.f32 %v5007, 0.0
  %v5014 = vmax.f32 %v5009, 0.0
  %v5015 = vpack.c.bf16 %v5012, %v5011
  %v5016 = vpack.c.bf16 %v5014, %v5013
  %v5017 = vld [vmem:[%s14] sm:$0xff]
  %v5018 = vld [vmem:[%s14 + $0x8] sm:$0xf]
  %v5019 = vld [vmem:[%s14 + $0xc] sm:$0xff]
  %v5020 = vld [vmem:[%s14 + $0x14] sm:$0xf]
  %v5021 = vld [vmem:[%s14 + $0x18] sm:$0xff]
  %v5022 = vld [vmem:[%s14 + $0x20] sm:$0xf]
  %v5023 = vld [vmem:[%s14 + $0x24] sm:$0xff]
  %v5024 = vld [vmem:[%s14 + $0x2c] sm:$0xf]
  %v5025 = vld [vmem:[%s15] sm:$0x7]
  %v5027 = vperm.slane %v5025, 0
  %v5028 = vperm.slane %v5025, 1
  %v5029 = vperm.slane %v5025, 2
  %v5041 = vunpack.c.l.b16 %v5017
  %v5042 = vunpack.c.h.b16 %v5017
  %v5043 = vunpack.c.l.b16 %v5018
  %v5044 = vunpack.c.l.b16 %v5019
  %v5045 = vunpack.c.h.b16 %v5019
  %v5046 = vunpack.c.l.b16 %v5020
  %v5047 = vunpack.c.l.b16 %v5021
  %v5048 = vunpack.c.h.b16 %v5021
  %v5049 = vunpack.c.l.b16 %v5022
  %v5050 = vunpack.c.l.b16 %v5023
  %v5051 = vunpack.c.h.b16 %v5023
  %v5052 = vunpack.c.l.b16 %v5024
  %v5053 = vpack.c.b16 %v5044, %v5041
  %v5054 = vpack.c.b16 %v5045, %v5042
  %v5055 = vpack.c.b16 %v5046, %v5043
  %v5056 = vpack.c.b16 %v5050, %v5047
  %v5057 = vpack.c.b16 %v5051, %v5048
  %v5058 = vpack.c.b16 %v5052, %v5049
  %v5066 = vsel %vm69, %v5015, 0
  %v5069 = vsel %vm69, %v5016, 0
  %5071 = vmatpush.bf16.msra.mxu0 0
  %5072 = vmatpush.bf16.msra.mxu0 0
  %5073 = vmatpush.bf16.msra.mxu0 0
  %5074 = vmatpush.bf16.msra.mxu0 0
  %5075 = vmatpush.bf16.msra.mxu0 0
  %5076 = vmatpush.bf16.msra.mxu0 0
  %5077 = vmatpush.bf16.msra.mxu0 %v5056
  %5078 = vmatpush.bf16.msra.mxu0 %v5053
  %5079 = vmatmul.bf16.gmra.mxu0 %v5066
  %v5080 = vpop.f32.mrf.mxu0
  %v5081 = vadd.f32 %v5027, %v5080
  %v5082 = vpop.f32.mrf.mxu0
  %v5083 = vadd.f32 %v5027, %v5082
  %5084 = vmatmul.bf16.gmra.mxu0 %v5069
  %v5085 = vpop.f32.mrf.mxu0
  %v5086 = vadd.f32 %v5027, %v5085
  %v5087 = vpop.f32.mrf.mxu0
  %v5088 = vadd.f32 %v5027, %v5087
  %5089 = vdwg.mxu0
  %5090 = vmatpush.bf16.msra.mxu0 0
  %5091 = vmatpush.bf16.msra.mxu0 0
  %5092 = vmatpush.bf16.msra.mxu0 0
  %5093 = vmatpush.bf16.msra.mxu0 0
  %5094 = vmatpush.bf16.msra.mxu0 0
  %5095 = vmatpush.bf16.msra.mxu0 0
  %5096 = vmatpush.bf16.msra.mxu0 %v5057
  %5097 = vmatpush.bf16.msra.mxu0 %v5054
  %5098 = vmatmul.bf16.gmra.mxu0 %v5066
  %v5099 = vpop.f32.mrf.mxu0
  %v5100 = vadd.f32 %v5028, %v5099
  %v5101 = vpop.f32.mrf.mxu0
  %v5102 = vadd.f32 %v5028, %v5101
  %5103 = vmatmul.bf16.gmra.mxu0 %v5069
  %v5104 = vpop.f32.mrf.mxu0
  %v5105 = vadd.f32 %v5028, %v5104
  %v5106 = vpop.f32.mrf.mxu0
  %v5107 = vadd.f32 %v5028, %v5106
  %5108 = vdwg.mxu0
  %5109 = vmatpush.bf16.msra.mxu0 0
  %5110 = vmatpush.bf16.msra.mxu0 0
  %5111 = vmatpush.bf16.msra.mxu0 0
  %5112 = vmatpush.bf16.msra.mxu0 0
  %5113 = vmatpush.bf16.msra.mxu0 0
  %5114 = vmatpush.bf16.msra.mxu0 0
  %5115 = vmatpush.bf16.msra.mxu0 %v5058
  %5116 = vmatpush.bf16.msra.mxu0 %v5055
  %5117 = vmatmul.bf16.gmra.mxu0 %v5066
  %v5118 = vpop.f32.mrf.mxu0
  %v5119 = vadd.f32 %v5029, %v5118
  %v5120 = vpop.f32.mrf.mxu0
  %v5121 = vadd.f32 %v5029, %v5120
  %5122 = vmatmul.bf16.gmra.mxu0 %v5069
  %v5123 = vpop.f32.mrf.mxu0
  %v5124 = vadd.f32 %v5029, %v5123
  %v5125 = vpop.f32.mrf.mxu0
  %v5126 = vadd.f32 %v5029, %v5125
  %5127 = vdwg.mxu0
  %v5128 = vadd.f32 %v4782, %v5081
  %v5129 = vadd.f32 %v4783, %v5100
  %v5130 = vadd.f32 %v4784, %v5119
  %v5131 = vadd.f32 %v4785, %v5083
  %v5132 = vadd.f32 %v4786, %v5102
  %v5133 = vadd.f32 %v4787, %v5121
  %v5134 = vadd.f32 %v4788, %v5086
  %v5135 = vadd.f32 %v4789, %v5105
  %v5136 = vadd.f32 %v4790, %v5124
  %v5137 = vadd.f32 %v4791, %v5088
  %v5138 = vadd.f32 %v4792, %v5107
  %v5139 = vadd.f32 %v4793, %v5126
  %5140 = vst [vmem:[%s16] sm:$0xff] %v5128
  %5141 = vst [vmem:[%s16 + $0x8] sm:$0xff] %v5129
  %5142 = vst.msk [vmem:[%s16 + $0x10] sm:$0xff] %vm69, %v5130
  %5143 = vst [vmem:[%s16 + $0x18] sm:$0xff] %v5131
  %5144 = vst [vmem:[%s16 + $0x20] sm:$0xff] %v5132
  %5145 = vst.msk [vmem:[%s16 + $0x28] sm:$0xff] %vm69, %v5133
  %5146 = vst [vmem:[%s16 + $0x30] sm:$0xff] %v5134
  %5147 = vst [vmem:[%s16 + $0x38] sm:$0xff] %v5135
  %5148 = vst.msk [vmem:[%s16 + $0x40] sm:$0xff] %vm69, %v5136
  %5149 = vst [vmem:[%s16 + $0x48] sm:$0xff] %v5137
  %5150 = vst [vmem:[%s16 + $0x50] sm:$0xff] %v5138
  %5151 = vst.msk [vmem:[%s16 + $0x58] sm:$0xff] %vm69, %v5139
  // Predicated region
  $region66: #{psablock_forward.1} parent=0 // pred_check
    _
  $region67: #{psablock_forward.1} parent=0 // pred_check_branch
    %5153 = sbr.rel (0) target = $region69
  $region68: #{psablock_forward.1} parent=0 // pred_region
    _
  $region69: #{psablock_forward.1} parent=0 // pred_fallthru
    _
  // Predicated region
  $region70: #{psablock_forward.1} parent=0 // pred_check
    _
  $region71: #{psablock_forward.1} parent=0 // pred_check_branch
    %5155 = sbr.rel (0) target = $region73
  $region72: #{psablock_forward.1} parent=0 // pred_region
    _
  $region73: #{psablock_forward.1} parent=0 // pred_fallthru
    _

</llo_original>
